<compile_context>
chip_gen: v7x
topology: tpu7x:2x2x1
jax: 0.10.0
libtpu: 0.0.40
codegen_flags: <defaults>
</compile_context>

<pallas_src>
import math

import jax
import jax.numpy as jnp
from jax.experimental import pallas as pl
from jax.experimental.pallas import tpu as pltpu

# ---- model dims (small, consistent with the module's structure) ----
B = 2           # batch
S = 16          # sequence length (<= max_len_train)
D = 128         # d_model
H = 4           # nhead
DH = D // H     # head dim
FF = 256        # dim_feedforward
L = 2           # num_layers
V = 256         # vocab_size
EPS = 1e-5      # nn.LayerNorm default eps


def _layernorm(x, g, b):
    mu = jnp.mean(x, axis=-1, keepdims=True)
    var = jnp.mean((x - mu) ** 2, axis=-1, keepdims=True)
    return (x - mu) * jax.lax.rsqrt(var + EPS) * g + b


def _bf16(x):
    return x.astype(jnp.bfloat16)


# -----------------------------------------------------------------------------
# Fused kernel: pos-enc + LayerNorm + full encoder stack (statically unrolled)
# + LM head. grid = (B,), one batch element per program ("parallel" so v7x can
# shard it across its two TensorCores). All weights are constant VMEM-resident
# blocks (bf16 for MXU operands).
# -----------------------------------------------------------------------------
def minigpt_kernel(emb_ref, pos_ref, ln0g_ref, ln0b_ref,
                   wqkv_ref, bqkv_ref, wo_ref, bo_ref,
                   ln1g_ref, ln1b_ref,
                   w1_ref, b1_ref, w2_ref, b2_ref,
                   ln2g_ref, ln2b_ref,
                   wout_ref, bout_ref,
                   logits_ref):
    # embedding + positional encoding, then the model-level self.layer_norm
    x = emb_ref[...] + pos_ref[...]                               # (S, D) f32
    x = _layernorm(x, ln0g_ref[...], ln0b_ref[...])

    scale = 1.0 / math.sqrt(DH)

    for l in range(L):                                            # static unroll
        # --- multi-head self attention (batch_first, post-norm) ---------------
        qkv = jnp.dot(_bf16(x), wqkv_ref[l],
                      preferred_element_type=jnp.float32) + bqkv_ref[l]   # (S, 3D)
        q = qkv[:, :D]                  # slices only at 128-lane boundaries
        k = qkv[:, D:2 * D]
        v = qkv[:, 2 * D:]

        # stack heads on a leading batch axis -> one batched matmul / softmax chain
        qh = _bf16(jnp.stack([q[:, h * DH:(h + 1) * DH] for h in range(H)], axis=0))
        kh = _bf16(jnp.stack([k[:, h * DH:(h + 1) * DH] for h in range(H)], axis=0))
        vh = _bf16(jnp.stack([v[:, h * DH:(h + 1) * DH] for h in range(H)], axis=0))

        s = jnp.einsum('hqd,hkd->hqk', qh, kh,
                       preferred_element_type=jnp.float32) * scale        # (H, S, S)
        s = s - jnp.max(s, axis=-1, keepdims=True)
        e = jnp.exp(s)
        p = e * pl.reciprocal(jnp.sum(e, axis=-1, keepdims=True), approx=True)
        ctx = jnp.einsum('hqk,hkd->hqd', _bf16(p), vh,
                         preferred_element_type=jnp.float32)              # (H, S, DH)

        # concat heads back along lanes and do ONE K=D output projection
        ctx_cat = jnp.concatenate([ctx[h] for h in range(H)], axis=-1)    # (S, D)
        attn = jnp.dot(_bf16(ctx_cat), wo_ref[l],
                       preferred_element_type=jnp.float32) + bo_ref[l]

        # TODO(synk): nn.Dropout(0.1) is identity in eval mode; not implemented.
        x = _layernorm(x + attn, ln1g_ref[l], ln1b_ref[l])        # norm_first=False

        # --- feed-forward (ReLU) ----------------------------------------------
        h1 = jnp.maximum(
            jnp.dot(_bf16(x), w1_ref[l],
                    preferred_element_type=jnp.float32) + b1_ref[l], 0.0)
        ff = jnp.dot(_bf16(h1), w2_ref[l],
                     preferred_element_type=jnp.float32) + b2_ref[l]
        x = _layernorm(x + ff, ln2g_ref[l], ln2b_ref[l])

    # --- LM head ---------------------------------------------------------------
    logits_ref[...] = jnp.dot(_bf16(x), wout_ref[...],
                              preferred_element_type=jnp.float32) + bout_ref[...]


def _const_spec(*dims):
    n = len(dims)
    return pl.BlockSpec(dims, lambda b, _n=n: (0,) * _n)


def _run_minigpt(emb, pos, kp):
    grid_spec = pltpu.PrefetchScalarGridSpec(
        num_scalar_prefetch=0,
        grid=(B,),
        in_specs=[
            pl.BlockSpec((None, S, D), lambda b: (b, 0, 0)),   # embedding, per batch elem
            _const_spec(S, D),                                 # pos enc
            _const_spec(1, D), _const_spec(1, D),              # model LayerNorm g/b
            _const_spec(L, D, 3 * D), _const_spec(L, 1, 3 * D),
            _const_spec(L, D, D), _const_spec(L, 1, D),
            _const_spec(L, 1, D), _const_spec(L, 1, D),
            _const_spec(L, D, FF), _const_spec(L, 1, FF),
            _const_spec(L, FF, D), _const_spec(L, 1, D),
            _const_spec(L, 1, D), _const_spec(L, 1, D),
            _const_spec(D, V), _const_spec(1, V),
        ],
        out_specs=pl.BlockSpec((None, S, V), lambda b: (b, 0, 0)),
    )
    return pl.pallas_call(
        minigpt_kernel,
        out_shape=jax.ShapeDtypeStruct((B, S, V), jnp.float32),
        grid_spec=grid_spec,
        compiler_params=pltpu.CompilerParams(dimension_semantics=("parallel",)),
    )(emb, pos, kp['ln0_g'], kp['ln0_b'],
      kp['wqkv'], kp['bqkv'], kp['wo'], kp['bo'],
      kp['ln1_g'], kp['ln1_b'],
      kp['w1'], kp['b1'], kp['w2'], kp['b2'],
      kp['ln2_g'], kp['ln2_b'],
      kp['w_out'], kp['b_out'])


# -----------------------------------------------------------------------------
# Full forward (embedding gather stays in plain JAX)
# -----------------------------------------------------------------------------
@jax.jit
def minigpt_forward(tokens, kp):
    # TODO(synk): the embedding row gather is left to XLA (jnp.take); an in-kernel DMA
    # gather is not worth it at this size.
    emb = jnp.take(kp['embedding'], tokens, axis=0)              # (B, S, D) f32
    pos = kp['pos_enc'][0, :tokens.shape[1], :]                  # (S, D) f32
    return _run_minigpt(emb, pos, kp)                            # (B, S, V)


# -----------------------------------------------------------------------------
# Deterministic parameter init (same shapes/roles as the nn.Module __init__)
# -----------------------------------------------------------------------------
def init_params(key):
    ks = jax.random.split(key, 12)
    n = lambda k, shape, s=0.02: s * jax.random.normal(k, shape, jnp.float32)
    return dict(
        embedding=n(ks[0], (V, D), 0.1),
        # PyTorch inits positional_encoding to zeros; small random keeps the add non-trivial.
        pos_enc=n(ks[1], (1, S, D), 0.02),
        ln0_g=jnp.ones((1, D), jnp.float32), ln0_b=jnp.zeros((1, D), jnp.float32),
        wqkv=n(ks[2], (L, D, 3 * D)), bqkv=n(ks[3], (L, 1, 3 * D), 0.01),
        wo=n(ks[4], (L, D, D)), bo=n(ks[5], (L, 1, D), 0.01),
        ln1_g=jnp.ones((L, 1, D), jnp.float32), ln1_b=jnp.zeros((L, 1, D), jnp.float32),
        w1=n(ks[6], (L, D, FF)), b1=n(ks[7], (L, 1, FF), 0.01),
        w2=n(ks[8], (L, FF, D)), b2=n(ks[9], (L, 1, D), 0.01),
        ln2_g=jnp.ones((L, 1, D), jnp.float32), ln2_b=jnp.zeros((L, 1, D), jnp.float32),
        w_out=n(ks[10], (D, V)), b_out=n(ks[11], (1, V), 0.01),
    )


_BF16_WEIGHTS = ('wqkv', 'wo', 'w1', 'w2', 'w_out')


def prepare_kernel_params(p):
    """Pre-cast MXU weights to bf16 ONCE, outside the jitted forward."""
    kp = dict(p)
    for name in _BF16_WEIGHTS:
        kp[name] = p[name].astype(jnp.bfloat16)
    return kp


# Pure-JAX f32 reference (same math as the PyTorch module) for a correctness check.
def reference_forward(tokens, p):
    x = jnp.take(p['embedding'], tokens, axis=0) + p['pos_enc'][:, :tokens.shape[1], :]
    x = _layernorm(x, p['ln0_g'], p['ln0_b'])
    scale = 1.0 / math.sqrt(DH)
    for l in range(L):
        qkv = x @ p['wqkv'][l] + p['bqkv'][l]
        q, k, v = qkv[..., :D], qkv[..., D:2 * D], qkv[..., 2 * D:]
        ctx = []
        for h in range(H):
            sl = slice(h * DH, (h + 1) * DH)
            s = jnp.einsum('bqd,bkd->bqk', q[..., sl], k[..., sl]) * scale
            ctx.append(jnp.einsum('bqk,bkd->bqd', jax.nn.softmax(s, axis=-1), v[..., sl]))
        attn = jnp.concatenate(ctx, axis=-1) @ p['wo'][l] + p['bo'][l]
        x = _layernorm(x + attn, p['ln1_g'][l], p['ln1_b'][l])
        ff = jnp.maximum(x @ p['w1'][l] + p['b1'][l], 0.0) @ p['w2'][l] + p['b2'][l]
        x = _layernorm(x + ff, p['ln2_g'][l], p['ln2_b'][l])
    return x @ p['w_out'] + p['b_out']


if __name__ == "__main__":
    key = jax.random.PRNGKey(0)
    k_params, k_tokens = jax.random.split(key)
    params = init_params(k_params)                 # f32 masters (used by the reference)
    kernel_params = prepare_kernel_params(params)  # bf16 MXU weights, cast once
    tokens = jax.random.randint(k_tokens, (B, S), 0, V, dtype=jnp.int32)

    out = jax.block_until_ready(minigpt_forward(tokens, kernel_params))
    ref = jax.block_until_ready(reference_forward(tokens, params))

    assert out.shape == (B, S, V), out.shape
    # bf16 MXU operands + approx softmax reciprocal vs. pure-f32 reference.
    err = float(jnp.max(jnp.abs(out - ref)))
    assert err < 3e-2, f"max abs err {err}"
    print("KERNEL_OK")
</pallas_src>

<mosaic_0001>
module attributes {stable_mosaic.version = 11 : i64} {
  func.func @minigpt_kernel(%arg0: i32, %arg1: memref<1x16x128xf32, #tpu.memory_space<vmem>>, %arg2: memref<16x128xf32, #tpu.memory_space<vmem>>, %arg3: memref<1x128xf32, #tpu.memory_space<vmem>>, %arg4: memref<1x128xf32, #tpu.memory_space<vmem>>, %arg5: memref<2x128x384xbf16, #tpu.memory_space<vmem>>, %arg6: memref<2x1x384xf32, #tpu.memory_space<vmem>>, %arg7: memref<2x128x128xbf16, #tpu.memory_space<vmem>>, %arg8: memref<2x1x128xf32, #tpu.memory_space<vmem>>, %arg9: memref<2x1x128xf32, #tpu.memory_space<vmem>>, %arg10: memref<2x1x128xf32, #tpu.memory_space<vmem>>, %arg11: memref<2x128x256xbf16, #tpu.memory_space<vmem>>, %arg12: memref<2x1x256xf32, #tpu.memory_space<vmem>>, %arg13: memref<2x256x128xbf16, #tpu.memory_space<vmem>>, %arg14: memref<2x1x128xf32, #tpu.memory_space<vmem>>, %arg15: memref<2x1x128xf32, #tpu.memory_space<vmem>>, %arg16: memref<2x1x128xf32, #tpu.memory_space<vmem>>, %arg17: memref<128x256xbf16, #tpu.memory_space<vmem>>, %arg18: memref<1x256xf32, #tpu.memory_space<vmem>>, %arg19: memref<1x16x256xf32, #tpu.memory_space<vmem>>) attributes {dimension_semantics = [#tpu.dimension_semantics<parallel>], iteration_bounds = array<i64: 2>, scalar_prefetch = 0 : i64, scratch_operands = 0 : i64, tpu.core_type = #tpu.core_type<tc>, window_params = [{transform_indices = @transform_0, window_bounds = array<i64: 1, 16, 128>}, {pipeline_mode = #tpu.pipeline_mode<synchronous>, transform_indices = @transform_1, window_bounds = array<i64: 16, 128>}, {pipeline_mode = #tpu.pipeline_mode<synchronous>, transform_indices = @transform_2, window_bounds = array<i64: 1, 128>}, {pipeline_mode = #tpu.pipeline_mode<synchronous>, transform_indices = @transform_3, window_bounds = array<i64: 1, 128>}, {pipeline_mode = #tpu.pipeline_mode<synchronous>, transform_indices = @transform_4, window_bounds = array<i64: 2, 128, 384>}, {pipeline_mode = #tpu.pipeline_mode<synchronous>, transform_indices = @transform_5, window_bounds = array<i64: 2, 1, 384>}, {pipeline_mode = #tpu.pipeline_mode<synchronous>, transform_indices = @transform_6, window_bounds = array<i64: 2, 128, 128>}, {pipeline_mode = #tpu.pipeline_mode<synchronous>, transform_indices = @transform_7, window_bounds = array<i64: 2, 1, 128>}, {pipeline_mode = #tpu.pipeline_mode<synchronous>, transform_indices = @transform_8, window_bounds = array<i64: 2, 1, 128>}, {pipeline_mode = #tpu.pipeline_mode<synchronous>, transform_indices = @transform_9, window_bounds = array<i64: 2, 1, 128>}, {pipeline_mode = #tpu.pipeline_mode<synchronous>, transform_indices = @transform_10, window_bounds = array<i64: 2, 128, 256>}, {pipeline_mode = #tpu.pipeline_mode<synchronous>, transform_indices = @transform_11, window_bounds = array<i64: 2, 1, 256>}, {pipeline_mode = #tpu.pipeline_mode<synchronous>, transform_indices = @transform_12, window_bounds = array<i64: 2, 256, 128>}, {pipeline_mode = #tpu.pipeline_mode<synchronous>, transform_indices = @transform_13, window_bounds = array<i64: 2, 1, 128>}, {pipeline_mode = #tpu.pipeline_mode<synchronous>, transform_indices = @transform_14, window_bounds = array<i64: 2, 1, 128>}, {pipeline_mode = #tpu.pipeline_mode<synchronous>, transform_indices = @transform_15, window_bounds = array<i64: 2, 1, 128>}, {pipeline_mode = #tpu.pipeline_mode<synchronous>, transform_indices = @transform_16, window_bounds = array<i64: 128, 256>}, {pipeline_mode = #tpu.pipeline_mode<synchronous>, transform_indices = @transform_17, window_bounds = array<i64: 1, 256>}, {transform_indices = @transform_18, window_bounds = array<i64: 1, 16, 256>}]} {
    %c0 = arith.constant 0 : index
    %c0_0 = arith.constant 0 : index
    %c0_1 = arith.constant 0 : index
    %0 = vector.load %arg1[%c0, %c0_0, %c0_1] : memref<1x16x128xf32, #tpu.memory_space<vmem>>, vector<1x16x128xf32>
    %1 = vector.shape_cast %0 : vector<1x16x128xf32> to vector<16x128xf32>
    %c0_2 = arith.constant 0 : index
    %c0_3 = arith.constant 0 : index
    %2 = vector.load %arg2[%c0_2, %c0_3] : memref<16x128xf32, #tpu.memory_space<vmem>>, vector<16x128xf32>
    %3 = arith.addf %1, %2 : vector<16x128xf32>
    %c0_4 = arith.constant 0 : index
    %c0_5 = arith.constant 0 : index
    %4 = vector.load %arg3[%c0_4, %c0_5] : memref<1x128xf32, #tpu.memory_space<vmem>>, vector<1x128xf32>
    %c0_6 = arith.constant 0 : index
    %c0_7 = arith.constant 0 : index
    %5 = vector.load %arg4[%c0_6, %c0_7] : memref<1x128xf32, #tpu.memory_space<vmem>>, vector<1x128xf32>
    %cst = arith.constant dense<0.000000e+00> : vector<16xf32>
    %6 = vector.multi_reduction <add>, %3, %cst [1] : vector<16x128xf32> to vector<16xf32>
    %7 = vector.shape_cast %6 : vector<16xf32> to vector<16x1xf32>
    %cst_8 = arith.constant 1.280000e+02 : f32
    %8 = vector.broadcast %cst_8 : f32 to vector<16x1xf32>
    %9 = arith.divf %7, %8 : vector<16x1xf32>
    %10 = vector.broadcast %9 : vector<16x1xf32> to vector<16x128xf32>
    %11 = arith.subf %3, %10 : vector<16x128xf32>
    %12 = arith.mulf %11, %11 : vector<16x128xf32>
    %cst_9 = arith.constant dense<0.000000e+00> : vector<16xf32>
    %13 = vector.multi_reduction <add>, %12, %cst_9 [1] : vector<16x128xf32> to vector<16xf32>
    %14 = vector.shape_cast %13 : vector<16xf32> to vector<16x1xf32>
    %cst_10 = arith.constant 1.280000e+02 : f32
    %15 = vector.broadcast %cst_10 : f32 to vector<16x1xf32>
    %16 = arith.divf %14, %15 : vector<16x1xf32>
    %17 = vector.broadcast %9 : vector<16x1xf32> to vector<16x128xf32>
    %18 = arith.subf %3, %17 : vector<16x128xf32>
    %cst_11 = arith.constant 9.99999974E-6 : f32
    %19 = vector.broadcast %cst_11 : f32 to vector<16x1xf32>
    %20 = arith.addf %16, %19 : vector<16x1xf32>
    %21 = math.rsqrt %20 : vector<16x1xf32>
    %22 = vector.broadcast %21 : vector<16x1xf32> to vector<16x128xf32>
    %23 = arith.mulf %18, %22 : vector<16x128xf32>
    %24 = vector.broadcast %4 : vector<1x128xf32> to vector<16x128xf32>
    %25 = arith.mulf %23, %24 : vector<16x128xf32>
    %26 = vector.broadcast %5 : vector<1x128xf32> to vector<16x128xf32>
    %27 = arith.addf %25, %26 : vector<16x128xf32>
    %28 = arith.truncf %27 : vector<16x128xf32> to vector<16x128xbf16>
    %c0_12 = arith.constant 0 : index
    %c0_13 = arith.constant 0 : index
    %c0_14 = arith.constant 0 : index
    %29 = vector.load %arg5[%c0_12, %c0_13, %c0_14] : memref<2x128x384xbf16, #tpu.memory_space<vmem>>, vector<1x128x384xbf16>
    %30 = vector.shape_cast %29 : vector<1x128x384xbf16> to vector<128x384xbf16>
    %cst_15 = arith.constant dense<0.000000e+00> : vector<16x384xf32>
    %31 = tpu.matmul %28, %30, %cst_15 {dimension_numbers = #tpu.dot_dimension_numbers<[1], [0], [0], [1], [0, 0, 1, 1], [], []>} : vector<16x128xbf16>, vector<128x384xbf16>, vector<16x384xf32> -> vector<16x384xf32>
    %c0_16 = arith.constant 0 : index
    %c0_17 = arith.constant 0 : index
    %c0_18 = arith.constant 0 : index
    %32 = vector.load %arg6[%c0_16, %c0_17, %c0_18] : memref<2x1x384xf32, #tpu.memory_space<vmem>>, vector<1x1x384xf32>
    %33 = vector.shape_cast %32 : vector<1x1x384xf32> to vector<1x384xf32>
    %34 = vector.broadcast %33 : vector<1x384xf32> to vector<16x384xf32>
    %35 = arith.addf %31, %34 : vector<16x384xf32>
    %36 = vector.extract_strided_slice %35 {offsets = [0, 0], sizes = [16, 128], strides = [1, 1]} : vector<16x384xf32> to vector<16x128xf32>
    %37 = vector.extract_strided_slice %35 {offsets = [0, 128], sizes = [16, 128], strides = [1, 1]} : vector<16x384xf32> to vector<16x128xf32>
    %38 = vector.extract_strided_slice %35 {offsets = [0, 256], sizes = [16, 128], strides = [1, 1]} : vector<16x384xf32> to vector<16x128xf32>
    %39 = vector.extract_strided_slice %36 {offsets = [0, 0], sizes = [16, 32], strides = [1, 1]} : vector<16x128xf32> to vector<16x32xf32>
    %40 = vector.extract_strided_slice %36 {offsets = [0, 32], sizes = [16, 32], strides = [1, 1]} : vector<16x128xf32> to vector<16x32xf32>
    %41 = vector.extract_strided_slice %36 {offsets = [0, 64], sizes = [16, 32], strides = [1, 1]} : vector<16x128xf32> to vector<16x32xf32>
    %42 = vector.extract_strided_slice %36 {offsets = [0, 96], sizes = [16, 32], strides = [1, 1]} : vector<16x128xf32> to vector<16x32xf32>
    %43 = vector.shape_cast %39 : vector<16x32xf32> to vector<1x16x32xf32>
    %44 = vector.shape_cast %40 : vector<16x32xf32> to vector<1x16x32xf32>
    %45 = vector.shape_cast %41 : vector<16x32xf32> to vector<1x16x32xf32>
    %46 = vector.shape_cast %42 : vector<16x32xf32> to vector<1x16x32xf32>
    %47 = tpu.concatenate %43, %44, %45, %46 in 0 : vector<1x16x32xf32>, vector<1x16x32xf32>, vector<1x16x32xf32>, vector<1x16x32xf32> -> vector<4x16x32xf32>
    %48 = arith.truncf %47 : vector<4x16x32xf32> to vector<4x16x32xbf16>
    %49 = vector.extract_strided_slice %37 {offsets = [0, 0], sizes = [16, 32], strides = [1, 1]} : vector<16x128xf32> to vector<16x32xf32>
    %50 = vector.extract_strided_slice %37 {offsets = [0, 32], sizes = [16, 32], strides = [1, 1]} : vector<16x128xf32> to vector<16x32xf32>
    %51 = vector.extract_strided_slice %37 {offsets = [0, 64], sizes = [16, 32], strides = [1, 1]} : vector<16x128xf32> to vector<16x32xf32>
    %52 = vector.extract_strided_slice %37 {offsets = [0, 96], sizes = [16, 32], strides = [1, 1]} : vector<16x128xf32> to vector<16x32xf32>
    %53 = vector.shape_cast %49 : vector<16x32xf32> to vector<1x16x32xf32>
    %54 = vector.shape_cast %50 : vector<16x32xf32> to vector<1x16x32xf32>
    %55 = vector.shape_cast %51 : vector<16x32xf32> to vector<1x16x32xf32>
    %56 = vector.shape_cast %52 : vector<16x32xf32> to vector<1x16x32xf32>
    %57 = tpu.concatenate %53, %54, %55, %56 in 0 : vector<1x16x32xf32>, vector<1x16x32xf32>, vector<1x16x32xf32>, vector<1x16x32xf32> -> vector<4x16x32xf32>
    %58 = arith.truncf %57 : vector<4x16x32xf32> to vector<4x16x32xbf16>
    %59 = vector.extract_strided_slice %38 {offsets = [0, 0], sizes = [16, 32], strides = [1, 1]} : vector<16x128xf32> to vector<16x32xf32>
    %60 = vector.extract_strided_slice %38 {offsets = [0, 32], sizes = [16, 32], strides = [1, 1]} : vector<16x128xf32> to vector<16x32xf32>
    %61 = vector.extract_strided_slice %38 {offsets = [0, 64], sizes = [16, 32], strides = [1, 1]} : vector<16x128xf32> to vector<16x32xf32>
    %62 = vector.extract_strided_slice %38 {offsets = [0, 96], sizes = [16, 32], strides = [1, 1]} : vector<16x128xf32> to vector<16x32xf32>
    %63 = vector.shape_cast %59 : vector<16x32xf32> to vector<1x16x32xf32>
    %64 = vector.shape_cast %60 : vector<16x32xf32> to vector<1x16x32xf32>
    %65 = vector.shape_cast %61 : vector<16x32xf32> to vector<1x16x32xf32>
    %66 = vector.shape_cast %62 : vector<16x32xf32> to vector<1x16x32xf32>
    %67 = tpu.concatenate %63, %64, %65, %66 in 0 : vector<1x16x32xf32>, vector<1x16x32xf32>, vector<1x16x32xf32>, vector<1x16x32xf32> -> vector<4x16x32xf32>
    %68 = arith.truncf %67 : vector<4x16x32xf32> to vector<4x16x32xbf16>
    "tpu.trace_start"() <{level = 10 : i32, message = "hqd,hkd->hqk"}> : () -> ()
    %cst_19 = arith.constant dense<0.000000e+00> : vector<4x16x16xf32>
    %69 = tpu.matmul %48, %58, %cst_19 {dimension_numbers = #tpu.dot_dimension_numbers<[2], [2], [1], [1], [0, 0, 0, 1, 1, 1], [0], [0]>} : vector<4x16x32xbf16>, vector<4x16x32xbf16>, vector<4x16x16xf32> -> vector<4x16x16xf32>
    "tpu.trace_stop"() : () -> ()
    %cst_20 = arith.constant 0.176776692 : f32
    %70 = vector.broadcast %cst_20 : f32 to vector<4x16x16xf32>
    %71 = arith.mulf %69, %70 : vector<4x16x16xf32>
    %cst_21 = arith.constant dense<0xFF800000> : vector<4x16xf32>
    %72 = vector.multi_reduction <maximumf>, %71, %cst_21 [2] : vector<4x16x16xf32> to vector<4x16xf32>
    %73 = vector.shape_cast %72 : vector<4x16xf32> to vector<4x16x1xf32>
    %74 = vector.broadcast %73 : vector<4x16x1xf32> to vector<4x16x16xf32>
    %75 = arith.subf %71, %74 : vector<4x16x16xf32>
    %76 = math.exp %75 : vector<4x16x16xf32>
    %cst_22 = arith.constant dense<0.000000e+00> : vector<4x16xf32>
    %77 = vector.multi_reduction <add>, %76, %cst_22 [2] : vector<4x16x16xf32> to vector<4x16xf32>
    %78 = vector.shape_cast %77 : vector<4x16xf32> to vector<4x16x1xf32>
    %79 = tpu.reciprocal %78 {approx = true} : vector<4x16x1xf32> -> vector<4x16x1xf32>
    %80 = vector.broadcast %79 : vector<4x16x1xf32> to vector<4x16x16xf32>
    %81 = arith.mulf %76, %80 : vector<4x16x16xf32>
    %82 = arith.truncf %81 : vector<4x16x16xf32> to vector<4x16x16xbf16>
    "tpu.trace_start"() <{level = 10 : i32, message = "hqk,hkd->hqd"}> : () -> ()
    %cst_23 = arith.constant dense<0.000000e+00> : vector<4x16x32xf32>
    %83 = tpu.matmul %82, %68, %cst_23 {dimension_numbers = #tpu.dot_dimension_numbers<[2], [1], [1], [2], [0, 0, 0, 1, 1, 2], [0], [0]>} : vector<4x16x16xbf16>, vector<4x16x32xbf16>, vector<4x16x32xf32> -> vector<4x16x32xf32>
    "tpu.trace_stop"() : () -> ()
    %84 = vector.extract_strided_slice %83 {offsets = [0, 0, 0], sizes = [1, 16, 32], strides = [1, 1, 1]} : vector<4x16x32xf32> to vector<1x16x32xf32>
    %85 = vector.shape_cast %84 : vector<1x16x32xf32> to vector<16x32xf32>
    %86 = vector.extract_strided_slice %83 {offsets = [1, 0, 0], sizes = [1, 16, 32], strides = [1, 1, 1]} : vector<4x16x32xf32> to vector<1x16x32xf32>
    %87 = vector.shape_cast %86 : vector<1x16x32xf32> to vector<16x32xf32>
    %88 = vector.extract_strided_slice %83 {offsets = [2, 0, 0], sizes = [1, 16, 32], strides = [1, 1, 1]} : vector<4x16x32xf32> to vector<1x16x32xf32>
    %89 = vector.shape_cast %88 : vector<1x16x32xf32> to vector<16x32xf32>
    %90 = vector.extract_strided_slice %83 {offsets = [3, 0, 0], sizes = [1, 16, 32], strides = [1, 1, 1]} : vector<4x16x32xf32> to vector<1x16x32xf32>
    %91 = vector.shape_cast %90 : vector<1x16x32xf32> to vector<16x32xf32>
    %92 = tpu.concatenate %85, %87, %89, %91 in 1 : vector<16x32xf32>, vector<16x32xf32>, vector<16x32xf32>, vector<16x32xf32> -> vector<16x128xf32>
    %93 = arith.truncf %92 : vector<16x128xf32> to vector<16x128xbf16>
    %c0_24 = arith.constant 0 : index
    %c0_25 = arith.constant 0 : index
    %c0_26 = arith.constant 0 : index
    %94 = vector.load %arg7[%c0_24, %c0_25, %c0_26] : memref<2x128x128xbf16, #tpu.memory_space<vmem>>, vector<1x128x128xbf16>
    %95 = vector.shape_cast %94 : vector<1x128x128xbf16> to vector<128x128xbf16>
    %cst_27 = arith.constant dense<0.000000e+00> : vector<16x128xf32>
    %96 = tpu.matmul %93, %95, %cst_27 {dimension_numbers = #tpu.dot_dimension_numbers<[1], [0], [0], [1], [0, 0, 1, 1], [], []>} : vector<16x128xbf16>, vector<128x128xbf16>, vector<16x128xf32> -> vector<16x128xf32>
    %c0_28 = arith.constant 0 : index
    %c0_29 = arith.constant 0 : index
    %c0_30 = arith.constant 0 : index
    %97 = vector.load %arg8[%c0_28, %c0_29, %c0_30] : memref<2x1x128xf32, #tpu.memory_space<vmem>>, vector<1x1x128xf32>
    %98 = vector.shape_cast %97 : vector<1x1x128xf32> to vector<1x128xf32>
    %99 = vector.broadcast %98 : vector<1x128xf32> to vector<16x128xf32>
    %100 = arith.addf %96, %99 : vector<16x128xf32>
    %101 = arith.addf %27, %100 : vector<16x128xf32>
    %c0_31 = arith.constant 0 : index
    %c0_32 = arith.constant 0 : index
    %c0_33 = arith.constant 0 : index
    %102 = vector.load %arg9[%c0_31, %c0_32, %c0_33] : memref<2x1x128xf32, #tpu.memory_space<vmem>>, vector<1x1x128xf32>
    %103 = vector.shape_cast %102 : vector<1x1x128xf32> to vector<1x128xf32>
    %c0_34 = arith.constant 0 : index
    %c0_35 = arith.constant 0 : index
    %c0_36 = arith.constant 0 : index
    %104 = vector.load %arg10[%c0_34, %c0_35, %c0_36] : memref<2x1x128xf32, #tpu.memory_space<vmem>>, vector<1x1x128xf32>
    %105 = vector.shape_cast %104 : vector<1x1x128xf32> to vector<1x128xf32>
    %cst_37 = arith.constant dense<0.000000e+00> : vector<16xf32>
    %106 = vector.multi_reduction <add>, %101, %cst_37 [1] : vector<16x128xf32> to vector<16xf32>
    %107 = vector.shape_cast %106 : vector<16xf32> to vector<16x1xf32>
    %cst_38 = arith.constant 1.280000e+02 : f32
    %108 = vector.broadcast %cst_38 : f32 to vector<16x1xf32>
    %109 = arith.divf %107, %108 : vector<16x1xf32>
    %110 = vector.broadcast %109 : vector<16x1xf32> to vector<16x128xf32>
    %111 = arith.subf %101, %110 : vector<16x128xf32>
    %112 = arith.mulf %111, %111 : vector<16x128xf32>
    %cst_39 = arith.constant dense<0.000000e+00> : vector<16xf32>
    %113 = vector.multi_reduction <add>, %112, %cst_39 [1] : vector<16x128xf32> to vector<16xf32>
    %114 = vector.shape_cast %113 : vector<16xf32> to vector<16x1xf32>
    %cst_40 = arith.constant 1.280000e+02 : f32
    %115 = vector.broadcast %cst_40 : f32 to vector<16x1xf32>
    %116 = arith.divf %114, %115 : vector<16x1xf32>
    %117 = vector.broadcast %109 : vector<16x1xf32> to vector<16x128xf32>
    %118 = arith.subf %101, %117 : vector<16x128xf32>
    %cst_41 = arith.constant 9.99999974E-6 : f32
    %119 = vector.broadcast %cst_41 : f32 to vector<16x1xf32>
    %120 = arith.addf %116, %119 : vector<16x1xf32>
    %121 = math.rsqrt %120 : vector<16x1xf32>
    %122 = vector.broadcast %121 : vector<16x1xf32> to vector<16x128xf32>
    %123 = arith.mulf %118, %122 : vector<16x128xf32>
    %124 = vector.broadcast %103 : vector<1x128xf32> to vector<16x128xf32>
    %125 = arith.mulf %123, %124 : vector<16x128xf32>
    %126 = vector.broadcast %105 : vector<1x128xf32> to vector<16x128xf32>
    %127 = arith.addf %125, %126 : vector<16x128xf32>
    %128 = arith.truncf %127 : vector<16x128xf32> to vector<16x128xbf16>
    %c0_42 = arith.constant 0 : index
    %c0_43 = arith.constant 0 : index
    %c0_44 = arith.constant 0 : index
    %129 = vector.load %arg11[%c0_42, %c0_43, %c0_44] : memref<2x128x256xbf16, #tpu.memory_space<vmem>>, vector<1x128x256xbf16>
    %130 = vector.shape_cast %129 : vector<1x128x256xbf16> to vector<128x256xbf16>
    %cst_45 = arith.constant dense<0.000000e+00> : vector<16x256xf32>
    %131 = tpu.matmul %128, %130, %cst_45 {dimension_numbers = #tpu.dot_dimension_numbers<[1], [0], [0], [1], [0, 0, 1, 1], [], []>} : vector<16x128xbf16>, vector<128x256xbf16>, vector<16x256xf32> -> vector<16x256xf32>
    %c0_46 = arith.constant 0 : index
    %c0_47 = arith.constant 0 : index
    %c0_48 = arith.constant 0 : index
    %132 = vector.load %arg12[%c0_46, %c0_47, %c0_48] : memref<2x1x256xf32, #tpu.memory_space<vmem>>, vector<1x1x256xf32>
    %133 = vector.shape_cast %132 : vector<1x1x256xf32> to vector<1x256xf32>
    %134 = vector.broadcast %133 : vector<1x256xf32> to vector<16x256xf32>
    %135 = arith.addf %131, %134 : vector<16x256xf32>
    %cst_49 = arith.constant 0.000000e+00 : f32
    %136 = vector.broadcast %cst_49 : f32 to vector<16x256xf32>
    %137 = arith.maximumf %135, %136 : vector<16x256xf32>
    %138 = arith.truncf %137 : vector<16x256xf32> to vector<16x256xbf16>
    %c0_50 = arith.constant 0 : index
    %c0_51 = arith.constant 0 : index
    %c0_52 = arith.constant 0 : index
    %139 = vector.load %arg13[%c0_50, %c0_51, %c0_52] : memref<2x256x128xbf16, #tpu.memory_space<vmem>>, vector<1x256x128xbf16>
    %140 = vector.shape_cast %139 : vector<1x256x128xbf16> to vector<256x128xbf16>
    %cst_53 = arith.constant dense<0.000000e+00> : vector<16x128xf32>
    %141 = tpu.matmul %138, %140, %cst_53 {dimension_numbers = #tpu.dot_dimension_numbers<[1], [0], [0], [1], [0, 0, 1, 1], [], []>} : vector<16x256xbf16>, vector<256x128xbf16>, vector<16x128xf32> -> vector<16x128xf32>
    %c0_54 = arith.constant 0 : index
    %c0_55 = arith.constant 0 : index
    %c0_56 = arith.constant 0 : index
    %142 = vector.load %arg14[%c0_54, %c0_55, %c0_56] : memref<2x1x128xf32, #tpu.memory_space<vmem>>, vector<1x1x128xf32>
    %143 = vector.shape_cast %142 : vector<1x1x128xf32> to vector<1x128xf32>
    %144 = vector.broadcast %143 : vector<1x128xf32> to vector<16x128xf32>
    %145 = arith.addf %141, %144 : vector<16x128xf32>
    %146 = arith.addf %127, %145 : vector<16x128xf32>
    %c0_57 = arith.constant 0 : index
    %c0_58 = arith.constant 0 : index
    %c0_59 = arith.constant 0 : index
    %147 = vector.load %arg15[%c0_57, %c0_58, %c0_59] : memref<2x1x128xf32, #tpu.memory_space<vmem>>, vector<1x1x128xf32>
    %148 = vector.shape_cast %147 : vector<1x1x128xf32> to vector<1x128xf32>
    %c0_60 = arith.constant 0 : index
    %c0_61 = arith.constant 0 : index
    %c0_62 = arith.constant 0 : index
    %149 = vector.load %arg16[%c0_60, %c0_61, %c0_62] : memref<2x1x128xf32, #tpu.memory_space<vmem>>, vector<1x1x128xf32>
    %150 = vector.shape_cast %149 : vector<1x1x128xf32> to vector<1x128xf32>
    %cst_63 = arith.constant dense<0.000000e+00> : vector<16xf32>
    %151 = vector.multi_reduction <add>, %146, %cst_63 [1] : vector<16x128xf32> to vector<16xf32>
    %152 = vector.shape_cast %151 : vector<16xf32> to vector<16x1xf32>
    %cst_64 = arith.constant 1.280000e+02 : f32
    %153 = vector.broadcast %cst_64 : f32 to vector<16x1xf32>
    %154 = arith.divf %152, %153 : vector<16x1xf32>
    %155 = vector.broadcast %154 : vector<16x1xf32> to vector<16x128xf32>
    %156 = arith.subf %146, %155 : vector<16x128xf32>
    %157 = arith.mulf %156, %156 : vector<16x128xf32>
    %cst_65 = arith.constant dense<0.000000e+00> : vector<16xf32>
    %158 = vector.multi_reduction <add>, %157, %cst_65 [1] : vector<16x128xf32> to vector<16xf32>
    %159 = vector.shape_cast %158 : vector<16xf32> to vector<16x1xf32>
    %cst_66 = arith.constant 1.280000e+02 : f32
    %160 = vector.broadcast %cst_66 : f32 to vector<16x1xf32>
    %161 = arith.divf %159, %160 : vector<16x1xf32>
    %162 = vector.broadcast %154 : vector<16x1xf32> to vector<16x128xf32>
    %163 = arith.subf %146, %162 : vector<16x128xf32>
    %cst_67 = arith.constant 9.99999974E-6 : f32
    %164 = vector.broadcast %cst_67 : f32 to vector<16x1xf32>
    %165 = arith.addf %161, %164 : vector<16x1xf32>
    %166 = math.rsqrt %165 : vector<16x1xf32>
    %167 = vector.broadcast %166 : vector<16x1xf32> to vector<16x128xf32>
    %168 = arith.mulf %163, %167 : vector<16x128xf32>
    %169 = vector.broadcast %148 : vector<1x128xf32> to vector<16x128xf32>
    %170 = arith.mulf %168, %169 : vector<16x128xf32>
    %171 = vector.broadcast %150 : vector<1x128xf32> to vector<16x128xf32>
    %172 = arith.addf %170, %171 : vector<16x128xf32>
    %173 = arith.truncf %172 : vector<16x128xf32> to vector<16x128xbf16>
    %c1 = arith.constant 1 : index
    %c0_68 = arith.constant 0 : index
    %c0_69 = arith.constant 0 : index
    %174 = vector.load %arg5[%c1, %c0_68, %c0_69] : memref<2x128x384xbf16, #tpu.memory_space<vmem>>, vector<1x128x384xbf16>
    %175 = vector.shape_cast %174 : vector<1x128x384xbf16> to vector<128x384xbf16>
    %cst_70 = arith.constant dense<0.000000e+00> : vector<16x384xf32>
    %176 = tpu.matmul %173, %175, %cst_70 {dimension_numbers = #tpu.dot_dimension_numbers<[1], [0], [0], [1], [0, 0, 1, 1], [], []>} : vector<16x128xbf16>, vector<128x384xbf16>, vector<16x384xf32> -> vector<16x384xf32>
    %c1_71 = arith.constant 1 : index
    %c0_72 = arith.constant 0 : index
    %c0_73 = arith.constant 0 : index
    %177 = vector.load %arg6[%c1_71, %c0_72, %c0_73] : memref<2x1x384xf32, #tpu.memory_space<vmem>>, vector<1x1x384xf32>
    %178 = vector.shape_cast %177 : vector<1x1x384xf32> to vector<1x384xf32>
    %179 = vector.broadcast %178 : vector<1x384xf32> to vector<16x384xf32>
    %180 = arith.addf %176, %179 : vector<16x384xf32>
    %181 = vector.extract_strided_slice %180 {offsets = [0, 0], sizes = [16, 128], strides = [1, 1]} : vector<16x384xf32> to vector<16x128xf32>
    %182 = vector.extract_strided_slice %180 {offsets = [0, 128], sizes = [16, 128], strides = [1, 1]} : vector<16x384xf32> to vector<16x128xf32>
    %183 = vector.extract_strided_slice %180 {offsets = [0, 256], sizes = [16, 128], strides = [1, 1]} : vector<16x384xf32> to vector<16x128xf32>
    %184 = vector.extract_strided_slice %181 {offsets = [0, 0], sizes = [16, 32], strides = [1, 1]} : vector<16x128xf32> to vector<16x32xf32>
    %185 = vector.extract_strided_slice %181 {offsets = [0, 32], sizes = [16, 32], strides = [1, 1]} : vector<16x128xf32> to vector<16x32xf32>
    %186 = vector.extract_strided_slice %181 {offsets = [0, 64], sizes = [16, 32], strides = [1, 1]} : vector<16x128xf32> to vector<16x32xf32>
    %187 = vector.extract_strided_slice %181 {offsets = [0, 96], sizes = [16, 32], strides = [1, 1]} : vector<16x128xf32> to vector<16x32xf32>
    %188 = vector.shape_cast %184 : vector<16x32xf32> to vector<1x16x32xf32>
    %189 = vector.shape_cast %185 : vector<16x32xf32> to vector<1x16x32xf32>
    %190 = vector.shape_cast %186 : vector<16x32xf32> to vector<1x16x32xf32>
    %191 = vector.shape_cast %187 : vector<16x32xf32> to vector<1x16x32xf32>
    %192 = tpu.concatenate %188, %189, %190, %191 in 0 : vector<1x16x32xf32>, vector<1x16x32xf32>, vector<1x16x32xf32>, vector<1x16x32xf32> -> vector<4x16x32xf32>
    %193 = arith.truncf %192 : vector<4x16x32xf32> to vector<4x16x32xbf16>
    %194 = vector.extract_strided_slice %182 {offsets = [0, 0], sizes = [16, 32], strides = [1, 1]} : vector<16x128xf32> to vector<16x32xf32>
    %195 = vector.extract_strided_slice %182 {offsets = [0, 32], sizes = [16, 32], strides = [1, 1]} : vector<16x128xf32> to vector<16x32xf32>
    %196 = vector.extract_strided_slice %182 {offsets = [0, 64], sizes = [16, 32], strides = [1, 1]} : vector<16x128xf32> to vector<16x32xf32>
    %197 = vector.extract_strided_slice %182 {offsets = [0, 96], sizes = [16, 32], strides = [1, 1]} : vector<16x128xf32> to vector<16x32xf32>
    %198 = vector.shape_cast %194 : vector<16x32xf32> to vector<1x16x32xf32>
    %199 = vector.shape_cast %195 : vector<16x32xf32> to vector<1x16x32xf32>
    %200 = vector.shape_cast %196 : vector<16x32xf32> to vector<1x16x32xf32>
    %201 = vector.shape_cast %197 : vector<16x32xf32> to vector<1x16x32xf32>
    %202 = tpu.concatenate %198, %199, %200, %201 in 0 : vector<1x16x32xf32>, vector<1x16x32xf32>, vector<1x16x32xf32>, vector<1x16x32xf32> -> vector<4x16x32xf32>
    %203 = arith.truncf %202 : vector<4x16x32xf32> to vector<4x16x32xbf16>
    %204 = vector.extract_strided_slice %183 {offsets = [0, 0], sizes = [16, 32], strides = [1, 1]} : vector<16x128xf32> to vector<16x32xf32>
    %205 = vector.extract_strided_slice %183 {offsets = [0, 32], sizes = [16, 32], strides = [1, 1]} : vector<16x128xf32> to vector<16x32xf32>
    %206 = vector.extract_strided_slice %183 {offsets = [0, 64], sizes = [16, 32], strides = [1, 1]} : vector<16x128xf32> to vector<16x32xf32>
    %207 = vector.extract_strided_slice %183 {offsets = [0, 96], sizes = [16, 32], strides = [1, 1]} : vector<16x128xf32> to vector<16x32xf32>
    %208 = vector.shape_cast %204 : vector<16x32xf32> to vector<1x16x32xf32>
    %209 = vector.shape_cast %205 : vector<16x32xf32> to vector<1x16x32xf32>
    %210 = vector.shape_cast %206 : vector<16x32xf32> to vector<1x16x32xf32>
    %211 = vector.shape_cast %207 : vector<16x32xf32> to vector<1x16x32xf32>
    %212 = tpu.concatenate %208, %209, %210, %211 in 0 : vector<1x16x32xf32>, vector<1x16x32xf32>, vector<1x16x32xf32>, vector<1x16x32xf32> -> vector<4x16x32xf32>
    %213 = arith.truncf %212 : vector<4x16x32xf32> to vector<4x16x32xbf16>
    "tpu.trace_start"() <{level = 10 : i32, message = "hqd,hkd->hqk"}> : () -> ()
    %cst_74 = arith.constant dense<0.000000e+00> : vector<4x16x16xf32>
    %214 = tpu.matmul %193, %203, %cst_74 {dimension_numbers = #tpu.dot_dimension_numbers<[2], [2], [1], [1], [0, 0, 0, 1, 1, 1], [0], [0]>} : vector<4x16x32xbf16>, vector<4x16x32xbf16>, vector<4x16x16xf32> -> vector<4x16x16xf32>
    "tpu.trace_stop"() : () -> ()
    %cst_75 = arith.constant 0.176776692 : f32
    %215 = vector.broadcast %cst_75 : f32 to vector<4x16x16xf32>
    %216 = arith.mulf %214, %215 : vector<4x16x16xf32>
    %cst_76 = arith.constant dense<0xFF800000> : vector<4x16xf32>
    %217 = vector.multi_reduction <maximumf>, %216, %cst_76 [2] : vector<4x16x16xf32> to vector<4x16xf32>
    %218 = vector.shape_cast %217 : vector<4x16xf32> to vector<4x16x1xf32>
    %219 = vector.broadcast %218 : vector<4x16x1xf32> to vector<4x16x16xf32>
    %220 = arith.subf %216, %219 : vector<4x16x16xf32>
    %221 = math.exp %220 : vector<4x16x16xf32>
    %cst_77 = arith.constant dense<0.000000e+00> : vector<4x16xf32>
    %222 = vector.multi_reduction <add>, %221, %cst_77 [2] : vector<4x16x16xf32> to vector<4x16xf32>
    %223 = vector.shape_cast %222 : vector<4x16xf32> to vector<4x16x1xf32>
    %224 = tpu.reciprocal %223 {approx = true} : vector<4x16x1xf32> -> vector<4x16x1xf32>
    %225 = vector.broadcast %224 : vector<4x16x1xf32> to vector<4x16x16xf32>
    %226 = arith.mulf %221, %225 : vector<4x16x16xf32>
    %227 = arith.truncf %226 : vector<4x16x16xf32> to vector<4x16x16xbf16>
    "tpu.trace_start"() <{level = 10 : i32, message = "hqk,hkd->hqd"}> : () -> ()
    %cst_78 = arith.constant dense<0.000000e+00> : vector<4x16x32xf32>
    %228 = tpu.matmul %227, %213, %cst_78 {dimension_numbers = #tpu.dot_dimension_numbers<[2], [1], [1], [2], [0, 0, 0, 1, 1, 2], [0], [0]>} : vector<4x16x16xbf16>, vector<4x16x32xbf16>, vector<4x16x32xf32> -> vector<4x16x32xf32>
    "tpu.trace_stop"() : () -> ()
    %229 = vector.extract_strided_slice %228 {offsets = [0, 0, 0], sizes = [1, 16, 32], strides = [1, 1, 1]} : vector<4x16x32xf32> to vector<1x16x32xf32>
    %230 = vector.shape_cast %229 : vector<1x16x32xf32> to vector<16x32xf32>
    %231 = vector.extract_strided_slice %228 {offsets = [1, 0, 0], sizes = [1, 16, 32], strides = [1, 1, 1]} : vector<4x16x32xf32> to vector<1x16x32xf32>
    %232 = vector.shape_cast %231 : vector<1x16x32xf32> to vector<16x32xf32>
    %233 = vector.extract_strided_slice %228 {offsets = [2, 0, 0], sizes = [1, 16, 32], strides = [1, 1, 1]} : vector<4x16x32xf32> to vector<1x16x32xf32>
    %234 = vector.shape_cast %233 : vector<1x16x32xf32> to vector<16x32xf32>
    %235 = vector.extract_strided_slice %228 {offsets = [3, 0, 0], sizes = [1, 16, 32], strides = [1, 1, 1]} : vector<4x16x32xf32> to vector<1x16x32xf32>
    %236 = vector.shape_cast %235 : vector<1x16x32xf32> to vector<16x32xf32>
    %237 = tpu.concatenate %230, %232, %234, %236 in 1 : vector<16x32xf32>, vector<16x32xf32>, vector<16x32xf32>, vector<16x32xf32> -> vector<16x128xf32>
    %238 = arith.truncf %237 : vector<16x128xf32> to vector<16x128xbf16>
    %c1_79 = arith.constant 1 : index
    %c0_80 = arith.constant 0 : index
    %c0_81 = arith.constant 0 : index
    %239 = vector.load %arg7[%c1_79, %c0_80, %c0_81] : memref<2x128x128xbf16, #tpu.memory_space<vmem>>, vector<1x128x128xbf16>
    %240 = vector.shape_cast %239 : vector<1x128x128xbf16> to vector<128x128xbf16>
    %cst_82 = arith.constant dense<0.000000e+00> : vector<16x128xf32>
    %241 = tpu.matmul %238, %240, %cst_82 {dimension_numbers = #tpu.dot_dimension_numbers<[1], [0], [0], [1], [0, 0, 1, 1], [], []>} : vector<16x128xbf16>, vector<128x128xbf16>, vector<16x128xf32> -> vector<16x128xf32>
    %c1_83 = arith.constant 1 : index
    %c0_84 = arith.constant 0 : index
    %c0_85 = arith.constant 0 : index
    %242 = vector.load %arg8[%c1_83, %c0_84, %c0_85] : memref<2x1x128xf32, #tpu.memory_space<vmem>>, vector<1x1x128xf32>
    %243 = vector.shape_cast %242 : vector<1x1x128xf32> to vector<1x128xf32>
    %244 = vector.broadcast %243 : vector<1x128xf32> to vector<16x128xf32>
    %245 = arith.addf %241, %244 : vector<16x128xf32>
    %246 = arith.addf %172, %245 : vector<16x128xf32>
    %c1_86 = arith.constant 1 : index
    %c0_87 = arith.constant 0 : index
    %c0_88 = arith.constant 0 : index
    %247 = vector.load %arg9[%c1_86, %c0_87, %c0_88] : memref<2x1x128xf32, #tpu.memory_space<vmem>>, vector<1x1x128xf32>
    %248 = vector.shape_cast %247 : vector<1x1x128xf32> to vector<1x128xf32>
    %c1_89 = arith.constant 1 : index
    %c0_90 = arith.constant 0 : index
    %c0_91 = arith.constant 0 : index
    %249 = vector.load %arg10[%c1_89, %c0_90, %c0_91] : memref<2x1x128xf32, #tpu.memory_space<vmem>>, vector<1x1x128xf32>
    %250 = vector.shape_cast %249 : vector<1x1x128xf32> to vector<1x128xf32>
    %cst_92 = arith.constant dense<0.000000e+00> : vector<16xf32>
    %251 = vector.multi_reduction <add>, %246, %cst_92 [1] : vector<16x128xf32> to vector<16xf32>
    %252 = vector.shape_cast %251 : vector<16xf32> to vector<16x1xf32>
    %cst_93 = arith.constant 1.280000e+02 : f32
    %253 = vector.broadcast %cst_93 : f32 to vector<16x1xf32>
    %254 = arith.divf %252, %253 : vector<16x1xf32>
    %255 = vector.broadcast %254 : vector<16x1xf32> to vector<16x128xf32>
    %256 = arith.subf %246, %255 : vector<16x128xf32>
    %257 = arith.mulf %256, %256 : vector<16x128xf32>
    %cst_94 = arith.constant dense<0.000000e+00> : vector<16xf32>
    %258 = vector.multi_reduction <add>, %257, %cst_94 [1] : vector<16x128xf32> to vector<16xf32>
    %259 = vector.shape_cast %258 : vector<16xf32> to vector<16x1xf32>
    %cst_95 = arith.constant 1.280000e+02 : f32
    %260 = vector.broadcast %cst_95 : f32 to vector<16x1xf32>
    %261 = arith.divf %259, %260 : vector<16x1xf32>
    %262 = vector.broadcast %254 : vector<16x1xf32> to vector<16x128xf32>
    %263 = arith.subf %246, %262 : vector<16x128xf32>
    %cst_96 = arith.constant 9.99999974E-6 : f32
    %264 = vector.broadcast %cst_96 : f32 to vector<16x1xf32>
    %265 = arith.addf %261, %264 : vector<16x1xf32>
    %266 = math.rsqrt %265 : vector<16x1xf32>
    %267 = vector.broadcast %266 : vector<16x1xf32> to vector<16x128xf32>
    %268 = arith.mulf %263, %267 : vector<16x128xf32>
    %269 = vector.broadcast %248 : vector<1x128xf32> to vector<16x128xf32>
    %270 = arith.mulf %268, %269 : vector<16x128xf32>
    %271 = vector.broadcast %250 : vector<1x128xf32> to vector<16x128xf32>
    %272 = arith.addf %270, %271 : vector<16x128xf32>
    %273 = arith.truncf %272 : vector<16x128xf32> to vector<16x128xbf16>
    %c1_97 = arith.constant 1 : index
    %c0_98 = arith.constant 0 : index
    %c0_99 = arith.constant 0 : index
    %274 = vector.load %arg11[%c1_97, %c0_98, %c0_99] : memref<2x128x256xbf16, #tpu.memory_space<vmem>>, vector<1x128x256xbf16>
    %275 = vector.shape_cast %274 : vector<1x128x256xbf16> to vector<128x256xbf16>
    %cst_100 = arith.constant dense<0.000000e+00> : vector<16x256xf32>
    %276 = tpu.matmul %273, %275, %cst_100 {dimension_numbers = #tpu.dot_dimension_numbers<[1], [0], [0], [1], [0, 0, 1, 1], [], []>} : vector<16x128xbf16>, vector<128x256xbf16>, vector<16x256xf32> -> vector<16x256xf32>
    %c1_101 = arith.constant 1 : index
    %c0_102 = arith.constant 0 : index
    %c0_103 = arith.constant 0 : index
    %277 = vector.load %arg12[%c1_101, %c0_102, %c0_103] : memref<2x1x256xf32, #tpu.memory_space<vmem>>, vector<1x1x256xf32>
    %278 = vector.shape_cast %277 : vector<1x1x256xf32> to vector<1x256xf32>
    %279 = vector.broadcast %278 : vector<1x256xf32> to vector<16x256xf32>
    %280 = arith.addf %276, %279 : vector<16x256xf32>
    %cst_104 = arith.constant 0.000000e+00 : f32
    %281 = vector.broadcast %cst_104 : f32 to vector<16x256xf32>
    %282 = arith.maximumf %280, %281 : vector<16x256xf32>
    %283 = arith.truncf %282 : vector<16x256xf32> to vector<16x256xbf16>
    %c1_105 = arith.constant 1 : index
    %c0_106 = arith.constant 0 : index
    %c0_107 = arith.constant 0 : index
    %284 = vector.load %arg13[%c1_105, %c0_106, %c0_107] : memref<2x256x128xbf16, #tpu.memory_space<vmem>>, vector<1x256x128xbf16>
    %285 = vector.shape_cast %284 : vector<1x256x128xbf16> to vector<256x128xbf16>
    %cst_108 = arith.constant dense<0.000000e+00> : vector<16x128xf32>
    %286 = tpu.matmul %283, %285, %cst_108 {dimension_numbers = #tpu.dot_dimension_numbers<[1], [0], [0], [1], [0, 0, 1, 1], [], []>} : vector<16x256xbf16>, vector<256x128xbf16>, vector<16x128xf32> -> vector<16x128xf32>
    %c1_109 = arith.constant 1 : index
    %c0_110 = arith.constant 0 : index
    %c0_111 = arith.constant 0 : index
    %287 = vector.load %arg14[%c1_109, %c0_110, %c0_111] : memref<2x1x128xf32, #tpu.memory_space<vmem>>, vector<1x1x128xf32>
    %288 = vector.shape_cast %287 : vector<1x1x128xf32> to vector<1x128xf32>
    %289 = vector.broadcast %288 : vector<1x128xf32> to vector<16x128xf32>
    %290 = arith.addf %286, %289 : vector<16x128xf32>
    %291 = arith.addf %272, %290 : vector<16x128xf32>
    %c1_112 = arith.constant 1 : index
    %c0_113 = arith.constant 0 : index
    %c0_114 = arith.constant 0 : index
    %292 = vector.load %arg15[%c1_112, %c0_113, %c0_114] : memref<2x1x128xf32, #tpu.memory_space<vmem>>, vector<1x1x128xf32>
    %293 = vector.shape_cast %292 : vector<1x1x128xf32> to vector<1x128xf32>
    %c1_115 = arith.constant 1 : index
    %c0_116 = arith.constant 0 : index
    %c0_117 = arith.constant 0 : index
    %294 = vector.load %arg16[%c1_115, %c0_116, %c0_117] : memref<2x1x128xf32, #tpu.memory_space<vmem>>, vector<1x1x128xf32>
    %295 = vector.shape_cast %294 : vector<1x1x128xf32> to vector<1x128xf32>
    %cst_118 = arith.constant dense<0.000000e+00> : vector<16xf32>
    %296 = vector.multi_reduction <add>, %291, %cst_118 [1] : vector<16x128xf32> to vector<16xf32>
    %297 = vector.shape_cast %296 : vector<16xf32> to vector<16x1xf32>
    %cst_119 = arith.constant 1.280000e+02 : f32
    %298 = vector.broadcast %cst_119 : f32 to vector<16x1xf32>
    %299 = arith.divf %297, %298 : vector<16x1xf32>
    %300 = vector.broadcast %299 : vector<16x1xf32> to vector<16x128xf32>
    %301 = arith.subf %291, %300 : vector<16x128xf32>
    %302 = arith.mulf %301, %301 : vector<16x128xf32>
    %cst_120 = arith.constant dense<0.000000e+00> : vector<16xf32>
    %303 = vector.multi_reduction <add>, %302, %cst_120 [1] : vector<16x128xf32> to vector<16xf32>
    %304 = vector.shape_cast %303 : vector<16xf32> to vector<16x1xf32>
    %cst_121 = arith.constant 1.280000e+02 : f32
    %305 = vector.broadcast %cst_121 : f32 to vector<16x1xf32>
    %306 = arith.divf %304, %305 : vector<16x1xf32>
    %307 = vector.broadcast %299 : vector<16x1xf32> to vector<16x128xf32>
    %308 = arith.subf %291, %307 : vector<16x128xf32>
    %cst_122 = arith.constant 9.99999974E-6 : f32
    %309 = vector.broadcast %cst_122 : f32 to vector<16x1xf32>
    %310 = arith.addf %306, %309 : vector<16x1xf32>
    %311 = math.rsqrt %310 : vector<16x1xf32>
    %312 = vector.broadcast %311 : vector<16x1xf32> to vector<16x128xf32>
    %313 = arith.mulf %308, %312 : vector<16x128xf32>
    %314 = vector.broadcast %293 : vector<1x128xf32> to vector<16x128xf32>
    %315 = arith.mulf %313, %314 : vector<16x128xf32>
    %316 = vector.broadcast %295 : vector<1x128xf32> to vector<16x128xf32>
    %317 = arith.addf %315, %316 : vector<16x128xf32>
    %318 = arith.truncf %317 : vector<16x128xf32> to vector<16x128xbf16>
    %c0_123 = arith.constant 0 : index
    %c0_124 = arith.constant 0 : index
    %319 = vector.load %arg17[%c0_123, %c0_124] : memref<128x256xbf16, #tpu.memory_space<vmem>>, vector<128x256xbf16>
    %cst_125 = arith.constant dense<0.000000e+00> : vector<16x256xf32>
    %320 = tpu.matmul %318, %319, %cst_125 {dimension_numbers = #tpu.dot_dimension_numbers<[1], [0], [0], [1], [0, 0, 1, 1], [], []>} : vector<16x128xbf16>, vector<128x256xbf16>, vector<16x256xf32> -> vector<16x256xf32>
    %c0_126 = arith.constant 0 : index
    %c0_127 = arith.constant 0 : index
    %321 = vector.load %arg18[%c0_126, %c0_127] : memref<1x256xf32, #tpu.memory_space<vmem>>, vector<1x256xf32>
    %322 = vector.broadcast %321 : vector<1x256xf32> to vector<16x256xf32>
    %323 = arith.addf %320, %322 : vector<16x256xf32>
    %c0_128 = arith.constant 0 : index
    %c0_129 = arith.constant 0 : index
    %c0_130 = arith.constant 0 : index
    %324 = vector.load %arg19[%c0_128, %c0_129, %c0_130] : memref<1x16x256xf32, #tpu.memory_space<vmem>>, vector<1x16x256xf32>
    %325 = vector.shape_cast %324 : vector<1x16x256xf32> to vector<16x256xf32>
    %326 = vector.shape_cast %323 : vector<16x256xf32> to vector<1x16x256xf32>
    tpu.vector_store %arg19[%c0_128, %c0_129, %c0_130], %326 {strides = array<i32>} : memref<1x16x256xf32, #tpu.memory_space<vmem>>, vector<1x16x256xf32>,
    return
  }
  func.func @transform_0(%arg0: i32) -> (i32, i32, i32) {
    %c0_i32 = arith.constant 0 : i32
    %c0_i32_0 = arith.constant 0 : i32
    %c0_i32_1 = arith.constant 0 : i32
    return %arg0, %c0_i32, %c0_i32_0 : i32, i32, i32
  }
  func.func @transform_1(%arg0: i32) -> (i32, i32) {
    %c0_i32 = arith.constant 0 : i32
    %c0_i32_0 = arith.constant 0 : i32
    %c0_i32_1 = arith.constant 0 : i32
    return %c0_i32, %c0_i32_0 : i32, i32
  }
  func.func @transform_2(%arg0: i32) -> (i32, i32) {
    %c0_i32 = arith.constant 0 : i32
    %c0_i32_0 = arith.constant 0 : i32
    %c0_i32_1 = arith.constant 0 : i32
    return %c0_i32, %c0_i32_0 : i32, i32
  }
  func.func @transform_3(%arg0: i32) -> (i32, i32) {
    %c0_i32 = arith.constant 0 : i32
    %c0_i32_0 = arith.constant 0 : i32
    %c0_i32_1 = arith.constant 0 : i32
    return %c0_i32, %c0_i32_0 : i32, i32
  }
  func.func @transform_4(%arg0: i32) -> (i32, i32, i32) {
    %c0_i32 = arith.constant 0 : i32
    %c0_i32_0 = arith.constant 0 : i32
    %c0_i32_1 = arith.constant 0 : i32
    %c0_i32_2 = arith.constant 0 : i32
    return %c0_i32, %c0_i32_0, %c0_i32_1 : i32, i32, i32
  }
  func.func @transform_5(%arg0: i32) -> (i32, i32, i32) {
    %c0_i32 = arith.constant 0 : i32
    %c0_i32_0 = arith.constant 0 : i32
    %c0_i32_1 = arith.constant 0 : i32
    %c0_i32_2 = arith.constant 0 : i32
    return %c0_i32, %c0_i32_0, %c0_i32_1 : i32, i32, i32
  }
  func.func @transform_6(%arg0: i32) -> (i32, i32, i32) {
    %c0_i32 = arith.constant 0 : i32
    %c0_i32_0 = arith.constant 0 : i32
    %c0_i32_1 = arith.constant 0 : i32
    %c0_i32_2 = arith.constant 0 : i32
    return %c0_i32, %c0_i32_0, %c0_i32_1 : i32, i32, i32
  }
  func.func @transform_7(%arg0: i32) -> (i32, i32, i32) {
    %c0_i32 = arith.constant 0 : i32
    %c0_i32_0 = arith.constant 0 : i32
    %c0_i32_1 = arith.constant 0 : i32
    %c0_i32_2 = arith.constant 0 : i32
    return %c0_i32, %c0_i32_0, %c0_i32_1 : i32, i32, i32
  }
  func.func @transform_8(%arg0: i32) -> (i32, i32, i32) {
    %c0_i32 = arith.constant 0 : i32
    %c0_i32_0 = arith.constant 0 : i32
    %c0_i32_1 = arith.constant 0 : i32
    %c0_i32_2 = arith.constant 0 : i32
    return %c0_i32, %c0_i32_0, %c0_i32_1 : i32, i32, i32
  }
  func.func @transform_9(%arg0: i32) -> (i32, i32, i32) {
    %c0_i32 = arith.constant 0 : i32
    %c0_i32_0 = arith.constant 0 : i32
    %c0_i32_1 = arith.constant 0 : i32
    %c0_i32_2 = arith.constant 0 : i32
    return %c0_i32, %c0_i32_0, %c0_i32_1 : i32, i32, i32
  }
  func.func @transform_10(%arg0: i32) -> (i32, i32, i32) {
    %c0_i32 = arith.constant 0 : i32
    %c0_i32_0 = arith.constant 0 : i32
    %c0_i32_1 = arith.constant 0 : i32
    %c0_i32_2 = arith.constant 0 : i32
    return %c0_i32, %c0_i32_0, %c0_i32_1 : i32, i32, i32
  }
  func.func @transform_11(%arg0: i32) -> (i32, i32, i32) {
    %c0_i32 = arith.constant 0 : i32
    %c0_i32_0 = arith.constant 0 : i32
    %c0_i32_1 = arith.constant 0 : i32
    %c0_i32_2 = arith.constant 0 : i32
    return %c0_i32, %c0_i32_0, %c0_i32_1 : i32, i32, i32
  }
  func.func @transform_12(%arg0: i32) -> (i32, i32, i32) {
    %c0_i32 = arith.constant 0 : i32
    %c0_i32_0 = arith.constant 0 : i32
    %c0_i32_1 = arith.constant 0 : i32
    %c0_i32_2 = arith.constant 0 : i32
    return %c0_i32, %c0_i32_0, %c0_i32_1 : i32, i32, i32
  }
  func.func @transform_13(%arg0: i32) -> (i32, i32, i32) {
    %c0_i32 = arith.constant 0 : i32
    %c0_i32_0 = arith.constant 0 : i32
    %c0_i32_1 = arith.constant 0 : i32
    %c0_i32_2 = arith.constant 0 : i32
    return %c0_i32, %c0_i32_0, %c0_i32_1 : i32, i32, i32
  }
  func.func @transform_14(%arg0: i32) -> (i32, i32, i32) {
    %c0_i32 = arith.constant 0 : i32
    %c0_i32_0 = arith.constant 0 : i32
    %c0_i32_1 = arith.constant 0 : i32
    %c0_i32_2 = arith.constant 0 : i32
    return %c0_i32, %c0_i32_0, %c0_i32_1 : i32, i32, i32
  }
  func.func @transform_15(%arg0: i32) -> (i32, i32, i32) {
    %c0_i32 = arith.constant 0 : i32
    %c0_i32_0 = arith.constant 0 : i32
    %c0_i32_1 = arith.constant 0 : i32
    %c0_i32_2 = arith.constant 0 : i32
    return %c0_i32, %c0_i32_0, %c0_i32_1 : i32, i32, i32
  }
  func.func @transform_16(%arg0: i32) -> (i32, i32) {
    %c0_i32 = arith.constant 0 : i32
    %c0_i32_0 = arith.constant 0 : i32
    %c0_i32_1 = arith.constant 0 : i32
    return %c0_i32, %c0_i32_0 : i32, i32
  }
  func.func @transform_17(%arg0: i32) -> (i32, i32) {
    %c0_i32 = arith.constant 0 : i32
    %c0_i32_0 = arith.constant 0 : i32
    %c0_i32_1 = arith.constant 0 : i32
    return %c0_i32, %c0_i32_0 : i32, i32
  }
  func.func @transform_18(%arg0: i32) -> (i32, i32, i32) {
    %c0_i32 = arith.constant 0 : i32
    %c0_i32_0 = arith.constant 0 : i32
    %c0_i32_1 = arith.constant 0 : i32
    return %arg0, %c0_i32, %c0_i32_0 : i32, i32, i32
  }
}

</mosaic_0001>

<llo_original>
// kernel: minigpt_forward.1
$region0: #{minigpt_forward.1}
  #allocation0 [shape = 'u32[]', space=smem, size = 0x4, offset = 0x4, fixed_abs, tag = 'smem constant byte address 0x4 - core index']
  #allocation1 [shape = 'u32[144,128]{1,0:T(1,128)}', space=vmem, size = 0x12000, scoped, tag = 'internal scratch']
  %s0 = inlined_call_operand.vmem [shape: f32[2,16,128], index: 0, kind: input, shape index: {}]
  %s1 = inlined_call_operand.vmem [shape: f32[16,128], index: 1, kind: input, shape index: {}]
  %s2 = inlined_call_operand.vmem [shape: f32[1,128], index: 2, kind: input, shape index: {}]
  %s3 = inlined_call_operand.vmem [shape: f32[1,128], index: 3, kind: input, shape index: {}]
  %s4 = inlined_call_operand.vmem [shape: bf16[2,128,384], index: 4, kind: input, shape index: {}]
  %s5 = inlined_call_operand.vmem [shape: f32[2,1,384], index: 5, kind: input, shape index: {}]
  %s6 = inlined_call_operand.hbm [shape: bf16[2,128,128], index: 6, kind: input, shape index: {}]
  %s7 = inlined_call_operand.vmem [shape: f32[2,1,128], index: 7, kind: input, shape index: {}]
  %s8 = inlined_call_operand.vmem [shape: f32[2,1,128], index: 8, kind: input, shape index: {}]
  %s9 = inlined_call_operand.vmem [shape: f32[2,1,128], index: 9, kind: input, shape index: {}]
  %s10 = inlined_call_operand.hbm [shape: bf16[2,128,256], index: 10, kind: input, shape index: {}]
  %s11 = inlined_call_operand.vmem [shape: f32[2,1,256], index: 11, kind: input, shape index: {}]
  %s12 = inlined_call_operand.hbm [shape: bf16[2,256,128], index: 12, kind: input, shape index: {}]
  %s13 = inlined_call_operand.vmem [shape: f32[2,1,128], index: 13, kind: input, shape index: {}]
  %s14 = inlined_call_operand.vmem [shape: f32[2,1,128], index: 14, kind: input, shape index: {}]
  %s15 = inlined_call_operand.vmem [shape: f32[2,1,128], index: 15, kind: input, shape index: {}]
  %s16 = inlined_call_operand.hbm [shape: bf16[128,256], index: 16, kind: input, shape index: {}]
  %s17 = inlined_call_operand.vmem [shape: f32[1,256], index: 17, kind: input, shape index: {}]
  %s18 = inlined_call_operand.hbm [shape: f32[2,16,256], index: 18, kind: output, shape index: {}]
  %s19 = sld [smem:[#allocation0]]
  $region121: #{minigpt_forward.1} parent=0
    _
  %s21 = ssub.s32 1, %s19
  %s22 = scalar_select 0, %s21, %s19
  $region1: #{minigpt_forward.1} parent=0
    #allocation2 [shape = 'u8[65536]{0}', space=vmem, size = 0x10000, scoped, tag = 'input window, operand 6, single buffered']
    #allocation3 [shape = 's32[2]{0}', space=sflag, size = 0x8, scoped, tag = 'scoped memory for minigpt_forward.1']
    #allocation4 [shape = 's32[2]{0}', space=sflag, size = 0x8, scoped, tag = 'scoped memory for minigpt_forward.1']
    #allocation5 [shape = 'u8[131072]{0}', space=vmem, size = 0x20000, scoped, tag = 'input window, operand 10, single buffered']
    #allocation6 [shape = 's32[1]{0}', space=sflag, size = 0x4, scoped, tag = 'scoped memory for minigpt_forward.1']
    #allocation7 [shape = 'u8[131072]{0}', space=vmem, size = 0x20000, scoped, tag = 'input window, operand 12, single buffered']
    #allocation8 [shape = 'u8[65536]{0}', space=vmem, size = 0x10000, scoped, tag = 'input window, operand 16, single buffered']
    #allocation9 [shape = 's32[1]{0}', space=sflag, size = 0x4, scoped, tag = 'scoped memory for minigpt_forward.1']
    #allocation10 [shape = 'u8[32768]{0}', space=vmem, size = 0x8000, scoped, tag = 'output window, operand 0']
    %23 = vsyncpa [#allocation3], 0
    %24 = vsyncpa [#allocation6], 0
    %25 = vsyncpa [#allocation9], 0
    %26 = vsyncpa [#allocation4], 0
    %s27 = scalar_lea.sflag [#allocation4], 1
    %28 = vsyncpa %s27, 0
    loop: start=0, step=1, limit=4
    $region2: #{minigpt_forward.1} parent=1 // loop_pre_header
      _
    $region3: #{minigpt_forward.1} parent=1 // loop_header
      %s30 = sphi 0, %s34
      %p31 = scmp.ge.s32.totalorder %s30, 4
      %s40 = sphi 0, %s42
      %s43 = sphi 0, %s40
      %s44 = sphi 0, %s43
      %s60 = sphi 0, %s44
      %s64 = sphi 0, %s64
      %s66 = sphi 0, %s64
      %s67 = sphi 0, %s66
      %s81 = sphi 0, %s67
      %s85 = sphi 0, %s85
      %s87 = sphi 0, %s85
      %s88 = sphi 0, %s87
      %s102 = sphi 0, %s88
      %s106 = sphi 0, %s106
      %s108 = sphi 0, %s106
      %s109 = sphi 0, %s108
      %s123 = sphi 0, %s109
      %s127 = sphi 0, %s127
      %s129 = sphi 0, %s127
      %s130 = sphi 0, %s129
      %s144 = sphi 0, %s130
      %s148 = sphi 0, %s148
      %s150 = sphi 0, %s148
      %s151 = sphi 0, %s150
      %s165 = sphi 0, %s151
      %s169 = sphi 0, %s169
      %s171 = sphi 0, %s169
      %s172 = sphi 0, %s171
      %s186 = sphi 0, %s172
      %s190 = sphi 0, %s190
      %s192 = sphi 0, %s190
      %s193 = sphi 0, %s192
      %s207 = sphi 0, %s193
      %s211 = sphi 0, %s211
      %s213 = sphi 0, %s211
      %s214 = sphi 0, %s213
      %s228 = sphi 0, %s214
      %s232 = sphi 0, %s232
      %s234 = sphi 0, %s232
      %s235 = sphi 0, %s234
      %s249 = sphi 0, %s235
      %s253 = sphi 0, %s253
      %s255 = sphi 0, %s253
      %s256 = sphi 0, %s255
      %s270 = sphi 0, %s256
      %s274 = sphi 0, %s274
      %s276 = sphi 0, %s274
      %s277 = sphi 0, %s276
      %s291 = sphi 0, %s277
      %s295 = sphi 0, %s295
      %s297 = sphi 0, %s295
      %s298 = sphi 0, %s297
      %s312 = sphi 0, %s298
      %s316 = sphi 0, %s316
      %s318 = sphi 0, %s316
      %s319 = sphi 0, %s318
      %s333 = sphi 0, %s319
      %s337 = sphi 0, %s337
      %s339 = sphi 0, %s337
      %s340 = sphi 0, %s339
      %s354 = sphi 0, %s340
      %s358 = sphi 0, %s358
      %s360 = sphi 0, %s358
      %s361 = sphi 0, %s360
      %s375 = sphi 0, %s361
      %s379 = sphi 0, %s379
      %s381 = sphi 0, %s379
      %s382 = sphi 0, %s381
      %s396 = sphi 0, %s382
      %s400 = sphi 0, %s400
      %s402 = sphi 0, %s400
      %s403 = sphi 0, %s402
      %s417 = sphi 0, %s403
      %s423 = sphi 0, %s425
      %s426 = sphi 0, %s423
      %s427 = sphi 0, %s426
      %s443 = sphi 0, %s427
    $region4: #{minigpt_forward.1} parent=1 // loop_header_branch
      %33 = sbr.rel (%p31) target = $region8
    $region5: #{minigpt_forward.1} parent=1 // loop_body
      %s35 = ssub.s32 %s30, 1
      %s36 = ssub.s32 %s30, 2
      %s37 = sadd.s32 %s30, 1
      %s38 = ssub.s32 %s30, %s37
      %p39 = scmp.eq.s32.totalorder %s38, 0
      %s41 = sadd.s32 %s40, 1
      %s42 = scalar_select %p39, %s40, %s41
      %p45 = pneg %p39
      %p46 = scmp.eq.s32.totalorder %s30, 1
      %p47 = por %p45, %p46
      %p48 = scmp.ne.s32.totalorder %s40, %s43
      %p49 = scmp.eq.s32.totalorder %s30, 0
      %p50 = por %p48, %p49
      %p51 = scmp.ne.s32.totalorder %s40, %s43
      %p52 = scmp.eq.s32.totalorder %s35, 1
      %p53 = por %p51, %p52
      %p54 = scmp.ne.s32.totalorder %s43, %s44
      %p55 = scmp.eq.s32.totalorder %s35, 0
      %p56 = por %p54, %p55
      %p57 = scmp.ne.s32.totalorder %s43, %s44
      %p58 = scmp.eq.s32.totalorder %s36, 1
      %p59 = por %p57, %p58
      %p61 = scmp.ne.s32.totalorder %s44, %s60
      %p62 = scmp.eq.s32.totalorder %s36, 0
      %p63 = por %p61, %p62
      %s65 = sadd.s32 %s64, 1
      %p68 = scmp.eq.s32.totalorder %s30, 1
      %p69 = scmp.ne.s32.totalorder %s64, %s66
      %p70 = scmp.eq.s32.totalorder %s30, 0
      %p71 = por %p69, %p70
      %p72 = scmp.ne.s32.totalorder %s64, %s66
      %p73 = scmp.eq.s32.totalorder %s35, 1
      %p74 = por %p72, %p73
      %p75 = scmp.ne.s32.totalorder %s66, %s67
      %p76 = scmp.eq.s32.totalorder %s35, 0
      %p77 = por %p75, %p76
      %p78 = scmp.ne.s32.totalorder %s66, %s67
      %p79 = scmp.eq.s32.totalorder %s36, 1
      %p80 = por %p78, %p79
      %p82 = scmp.ne.s32.totalorder %s67, %s81
      %p83 = scmp.eq.s32.totalorder %s36, 0
      %p84 = por %p82, %p83
      %s86 = sadd.s32 %s85, 1
      %p89 = scmp.eq.s32.totalorder %s30, 1
      %p90 = scmp.ne.s32.totalorder %s85, %s87
      %p91 = scmp.eq.s32.totalorder %s30, 0
      %p92 = por %p90, %p91
      %p93 = scmp.ne.s32.totalorder %s85, %s87
      %p94 = scmp.eq.s32.totalorder %s35, 1
      %p95 = por %p93, %p94
      %p96 = scmp.ne.s32.totalorder %s87, %s88
      %p97 = scmp.eq.s32.totalorder %s35, 0
      %p98 = por %p96, %p97
      %p99 = scmp.ne.s32.totalorder %s87, %s88
      %p100 = scmp.eq.s32.totalorder %s36, 1
      %p101 = por %p99, %p100
      %p103 = scmp.ne.s32.totalorder %s88, %s102
      %p104 = scmp.eq.s32.totalorder %s36, 0
      %p105 = por %p103, %p104
      %s107 = sadd.s32 %s106, 1
      %p110 = scmp.eq.s32.totalorder %s30, 1
      %p111 = scmp.ne.s32.totalorder %s106, %s108
      %p112 = scmp.eq.s32.totalorder %s30, 0
      %p113 = por %p111, %p112
      %p114 = scmp.ne.s32.totalorder %s106, %s108
      %p115 = scmp.eq.s32.totalorder %s35, 1
      %p116 = por %p114, %p115
      %p117 = scmp.ne.s32.totalorder %s108, %s109
      %p118 = scmp.eq.s32.totalorder %s35, 0
      %p119 = por %p117, %p118
      %p120 = scmp.ne.s32.totalorder %s108, %s109
      %p121 = scmp.eq.s32.totalorder %s36, 1
      %p122 = por %p120, %p121
      %p124 = scmp.ne.s32.totalorder %s109, %s123
      %p125 = scmp.eq.s32.totalorder %s36, 0
      %p126 = por %p124, %p125
      %s128 = sadd.s32 %s127, 1
      %p131 = scmp.eq.s32.totalorder %s30, 1
      %p132 = scmp.ne.s32.totalorder %s127, %s129
      %p133 = scmp.eq.s32.totalorder %s30, 0
      %p134 = por %p132, %p133
      %p135 = scmp.ne.s32.totalorder %s127, %s129
      %p136 = scmp.eq.s32.totalorder %s35, 1
      %p137 = por %p135, %p136
      %p138 = scmp.ne.s32.totalorder %s129, %s130
      %p139 = scmp.eq.s32.totalorder %s35, 0
      %p140 = por %p138, %p139
      %p141 = scmp.ne.s32.totalorder %s129, %s130
      %p142 = scmp.eq.s32.totalorder %s36, 1
      %p143 = por %p141, %p142
      %p145 = scmp.ne.s32.totalorder %s130, %s144
      %p146 = scmp.eq.s32.totalorder %s36, 0
      %p147 = por %p145, %p146
      %s149 = sadd.s32 %s148, 1
      %p152 = scmp.eq.s32.totalorder %s30, 1
      %p153 = scmp.ne.s32.totalorder %s148, %s150
      %p154 = scmp.eq.s32.totalorder %s30, 0
      %p155 = por %p153, %p154
      %p156 = scmp.ne.s32.totalorder %s148, %s150
      %p157 = scmp.eq.s32.totalorder %s35, 1
      %p158 = por %p156, %p157
      %p159 = scmp.ne.s32.totalorder %s150, %s151
      %p160 = scmp.eq.s32.totalorder %s35, 0
      %p161 = por %p159, %p160
      %p162 = scmp.ne.s32.totalorder %s150, %s151
      %p163 = scmp.eq.s32.totalorder %s36, 1
      %p164 = por %p162, %p163
      %p166 = scmp.ne.s32.totalorder %s151, %s165
      %p167 = scmp.eq.s32.totalorder %s36, 0
      %p168 = por %p166, %p167
      %s170 = sadd.s32 %s169, 1
      %p173 = scmp.eq.s32.totalorder %s30, 1
      %p174 = scmp.ne.s32.totalorder %s169, %s171
      %p175 = scmp.eq.s32.totalorder %s30, 0
      %p176 = por %p174, %p175
      %p177 = scmp.ne.s32.totalorder %s169, %s171
      %p178 = scmp.eq.s32.totalorder %s35, 1
      %p179 = por %p177, %p178
      %p180 = scmp.ne.s32.totalorder %s171, %s172
      %p181 = scmp.eq.s32.totalorder %s35, 0
      %p182 = por %p180, %p181
      %p183 = scmp.ne.s32.totalorder %s171, %s172
      %p184 = scmp.eq.s32.totalorder %s36, 1
      %p185 = por %p183, %p184
      %p187 = scmp.ne.s32.totalorder %s172, %s186
      %p188 = scmp.eq.s32.totalorder %s36, 0
      %p189 = por %p187, %p188
      %s191 = sadd.s32 %s190, 1
      %p194 = scmp.eq.s32.totalorder %s30, 1
      %p195 = scmp.ne.s32.totalorder %s190, %s192
      %p196 = scmp.eq.s32.totalorder %s30, 0
      %p197 = por %p195, %p196
      %p198 = scmp.ne.s32.totalorder %s190, %s192
      %p199 = scmp.eq.s32.totalorder %s35, 1
      %p200 = por %p198, %p199
      %p201 = scmp.ne.s32.totalorder %s192, %s193
      %p202 = scmp.eq.s32.totalorder %s35, 0
      %p203 = por %p201, %p202
      %p204 = scmp.ne.s32.totalorder %s192, %s193
      %p205 = scmp.eq.s32.totalorder %s36, 1
      %p206 = por %p204, %p205
      %p208 = scmp.ne.s32.totalorder %s193, %s207
      %p209 = scmp.eq.s32.totalorder %s36, 0
      %p210 = por %p208, %p209
      %s212 = sadd.s32 %s211, 1
      %p215 = scmp.eq.s32.totalorder %s30, 1
      %p216 = scmp.ne.s32.totalorder %s211, %s213
      %p217 = scmp.eq.s32.totalorder %s30, 0
      %p218 = por %p216, %p217
      %p219 = scmp.ne.s32.totalorder %s211, %s213
      %p220 = scmp.eq.s32.totalorder %s35, 1
      %p221 = por %p219, %p220
      %p222 = scmp.ne.s32.totalorder %s213, %s214
      %p223 = scmp.eq.s32.totalorder %s35, 0
      %p224 = por %p222, %p223
      %p225 = scmp.ne.s32.totalorder %s213, %s214
      %p226 = scmp.eq.s32.totalorder %s36, 1
      %p227 = por %p225, %p226
      %p229 = scmp.ne.s32.totalorder %s214, %s228
      %p230 = scmp.eq.s32.totalorder %s36, 0
      %p231 = por %p229, %p230
      %s233 = sadd.s32 %s232, 1
      %p236 = scmp.eq.s32.totalorder %s30, 1
      %p237 = scmp.ne.s32.totalorder %s232, %s234
      %p238 = scmp.eq.s32.totalorder %s30, 0
      %p239 = por %p237, %p238
      %p240 = scmp.ne.s32.totalorder %s232, %s234
      %p241 = scmp.eq.s32.totalorder %s35, 1
      %p242 = por %p240, %p241
      %p243 = scmp.ne.s32.totalorder %s234, %s235
      %p244 = scmp.eq.s32.totalorder %s35, 0
      %p245 = por %p243, %p244
      %p246 = scmp.ne.s32.totalorder %s234, %s235
      %p247 = scmp.eq.s32.totalorder %s36, 1
      %p248 = por %p246, %p247
      %p250 = scmp.ne.s32.totalorder %s235, %s249
      %p251 = scmp.eq.s32.totalorder %s36, 0
      %p252 = por %p250, %p251
      %s254 = sadd.s32 %s253, 1
      %p257 = scmp.eq.s32.totalorder %s30, 1
      %p258 = scmp.ne.s32.totalorder %s253, %s255
      %p259 = scmp.eq.s32.totalorder %s30, 0
      %p260 = por %p258, %p259
      %p261 = scmp.ne.s32.totalorder %s253, %s255
      %p262 = scmp.eq.s32.totalorder %s35, 1
      %p263 = por %p261, %p262
      %p264 = scmp.ne.s32.totalorder %s255, %s256
      %p265 = scmp.eq.s32.totalorder %s35, 0
      %p266 = por %p264, %p265
      %p267 = scmp.ne.s32.totalorder %s255, %s256
      %p268 = scmp.eq.s32.totalorder %s36, 1
      %p269 = por %p267, %p268
      %p271 = scmp.ne.s32.totalorder %s256, %s270
      %p272 = scmp.eq.s32.totalorder %s36, 0
      %p273 = por %p271, %p272
      %s275 = sadd.s32 %s274, 1
      %p278 = scmp.eq.s32.totalorder %s30, 1
      %p279 = scmp.ne.s32.totalorder %s274, %s276
      %p280 = scmp.eq.s32.totalorder %s30, 0
      %p281 = por %p279, %p280
      %p282 = scmp.ne.s32.totalorder %s274, %s276
      %p283 = scmp.eq.s32.totalorder %s35, 1
      %p284 = por %p282, %p283
      %p285 = scmp.ne.s32.totalorder %s276, %s277
      %p286 = scmp.eq.s32.totalorder %s35, 0
      %p287 = por %p285, %p286
      %p288 = scmp.ne.s32.totalorder %s276, %s277
      %p289 = scmp.eq.s32.totalorder %s36, 1
      %p290 = por %p288, %p289
      %p292 = scmp.ne.s32.totalorder %s277, %s291
      %p293 = scmp.eq.s32.totalorder %s36, 0
      %p294 = por %p292, %p293
      %s296 = sadd.s32 %s295, 1
      %p299 = scmp.eq.s32.totalorder %s30, 1
      %p300 = scmp.ne.s32.totalorder %s295, %s297
      %p301 = scmp.eq.s32.totalorder %s30, 0
      %p302 = por %p300, %p301
      %p303 = scmp.ne.s32.totalorder %s295, %s297
      %p304 = scmp.eq.s32.totalorder %s35, 1
      %p305 = por %p303, %p304
      %p306 = scmp.ne.s32.totalorder %s297, %s298
      %p307 = scmp.eq.s32.totalorder %s35, 0
      %p308 = por %p306, %p307
      %p309 = scmp.ne.s32.totalorder %s297, %s298
      %p310 = scmp.eq.s32.totalorder %s36, 1
      %p311 = por %p309, %p310
      %p313 = scmp.ne.s32.totalorder %s298, %s312
      %p314 = scmp.eq.s32.totalorder %s36, 0
      %p315 = por %p313, %p314
      %s317 = sadd.s32 %s316, 1
      %p320 = scmp.eq.s32.totalorder %s30, 1
      %p321 = scmp.ne.s32.totalorder %s316, %s318
      %p322 = scmp.eq.s32.totalorder %s30, 0
      %p323 = por %p321, %p322
      %p324 = scmp.ne.s32.totalorder %s316, %s318
      %p325 = scmp.eq.s32.totalorder %s35, 1
      %p326 = por %p324, %p325
      %p327 = scmp.ne.s32.totalorder %s318, %s319
      %p328 = scmp.eq.s32.totalorder %s35, 0
      %p329 = por %p327, %p328
      %p330 = scmp.ne.s32.totalorder %s318, %s319
      %p331 = scmp.eq.s32.totalorder %s36, 1
      %p332 = por %p330, %p331
      %p334 = scmp.ne.s32.totalorder %s319, %s333
      %p335 = scmp.eq.s32.totalorder %s36, 0
      %p336 = por %p334, %p335
      %s338 = sadd.s32 %s337, 1
      %p341 = scmp.eq.s32.totalorder %s30, 1
      %p342 = scmp.ne.s32.totalorder %s337, %s339
      %p343 = scmp.eq.s32.totalorder %s30, 0
      %p344 = por %p342, %p343
      %p345 = scmp.ne.s32.totalorder %s337, %s339
      %p346 = scmp.eq.s32.totalorder %s35, 1
      %p347 = por %p345, %p346
      %p348 = scmp.ne.s32.totalorder %s339, %s340
      %p349 = scmp.eq.s32.totalorder %s35, 0
      %p350 = por %p348, %p349
      %p351 = scmp.ne.s32.totalorder %s339, %s340
      %p352 = scmp.eq.s32.totalorder %s36, 1
      %p353 = por %p351, %p352
      %p355 = scmp.ne.s32.totalorder %s340, %s354
      %p356 = scmp.eq.s32.totalorder %s36, 0
      %p357 = por %p355, %p356
      %s359 = sadd.s32 %s358, 1
      %p362 = scmp.eq.s32.totalorder %s30, 1
      %p363 = scmp.ne.s32.totalorder %s358, %s360
      %p364 = scmp.eq.s32.totalorder %s30, 0
      %p365 = por %p363, %p364
      %p366 = scmp.ne.s32.totalorder %s358, %s360
      %p367 = scmp.eq.s32.totalorder %s35, 1
      %p368 = por %p366, %p367
      %p369 = scmp.ne.s32.totalorder %s360, %s361
      %p370 = scmp.eq.s32.totalorder %s35, 0
      %p371 = por %p369, %p370
      %p372 = scmp.ne.s32.totalorder %s360, %s361
      %p373 = scmp.eq.s32.totalorder %s36, 1
      %p374 = por %p372, %p373
      %p376 = scmp.ne.s32.totalorder %s361, %s375
      %p377 = scmp.eq.s32.totalorder %s36, 0
      %p378 = por %p376, %p377
      %s380 = sadd.s32 %s379, 1
      %p383 = scmp.eq.s32.totalorder %s30, 1
      %p384 = scmp.ne.s32.totalorder %s379, %s381
      %p385 = scmp.eq.s32.totalorder %s30, 0
      %p386 = por %p384, %p385
      %p387 = scmp.ne.s32.totalorder %s379, %s381
      %p388 = scmp.eq.s32.totalorder %s35, 1
      %p389 = por %p387, %p388
      %p390 = scmp.ne.s32.totalorder %s381, %s382
      %p391 = scmp.eq.s32.totalorder %s35, 0
      %p392 = por %p390, %p391
      %p393 = scmp.ne.s32.totalorder %s381, %s382
      %p394 = scmp.eq.s32.totalorder %s36, 1
      %p395 = por %p393, %p394
      %p397 = scmp.ne.s32.totalorder %s382, %s396
      %p398 = scmp.eq.s32.totalorder %s36, 0
      %p399 = por %p397, %p398
      %s401 = sadd.s32 %s400, 1
      %p404 = scmp.eq.s32.totalorder %s30, 1
      %p405 = scmp.ne.s32.totalorder %s400, %s402
      %p406 = scmp.eq.s32.totalorder %s30, 0
      %p407 = por %p405, %p406
      %p408 = scmp.ne.s32.totalorder %s400, %s402
      %p409 = scmp.eq.s32.totalorder %s35, 1
      %p410 = por %p408, %p409
      %p411 = scmp.ne.s32.totalorder %s402, %s403
      %p412 = scmp.eq.s32.totalorder %s35, 0
      %p413 = por %p411, %p412
      %p414 = scmp.ne.s32.totalorder %s402, %s403
      %p415 = scmp.eq.s32.totalorder %s36, 1
      %p416 = por %p414, %p415
      %p418 = scmp.ne.s32.totalorder %s403, %s417
      %p419 = scmp.eq.s32.totalorder %s36, 0
      %p420 = por %p418, %p419
      %s421 = ssub.s32 %s30, %s37
      %p422 = scmp.eq.s32.totalorder %s421, 0
      %s424 = sadd.s32 %s423, 1
      %s425 = scalar_select %p422, %s423, %s424
      %p428 = pneg %p422
      %p429 = scmp.eq.s32.totalorder %s30, 1
      %p430 = por %p428, %p429
      %p431 = scmp.ne.s32.totalorder %s423, %s426
      %p432 = scmp.eq.s32.totalorder %s30, 0
      %p433 = por %p431, %p432
      %p434 = scmp.ne.s32.totalorder %s423, %s426
      %p435 = scmp.eq.s32.totalorder %s35, 1
      %p436 = por %p434, %p435
      %p437 = scmp.ne.s32.totalorder %s426, %s427
      %p438 = scmp.eq.s32.totalorder %s35, 0
      %p439 = por %p437, %p438
      %p440 = scmp.ne.s32.totalorder %s426, %s427
      %p441 = scmp.eq.s32.totalorder %s36, 1
      %p442 = por %p440, %p441
      %p444 = scmp.ne.s32.totalorder %s427, %s443
      %p445 = scmp.eq.s32.totalorder %s36, 0
      %p446 = por %p444, %p445
      %p447 = scmp.le.s32.totalorder 1, %s30
      %p448 = scmp.lt.s32.totalorder %s30, 3
      %p449 = pnand %p447, %p448
      %p450 = pneg %p449
      // Predicated region
      $region9: #{minigpt_forward.1} parent=5 // pred_check
        _
      $region10: #{minigpt_forward.1} parent=5 // pred_check_branch
        %452 = sbr.rel (%p449) target = $region12
      $region11: #{minigpt_forward.1} parent=5 // pred_region
        %s453 = ssub.s32 %s30, 1
        // Predicated region
        $region13: #{minigpt_forward.1} parent=11 // pred_check
          %p454 = pneg %p77
        $region14: #{minigpt_forward.1} parent=11 // pred_check_branch
          %456 = sbr.rel (%p454) target = $region16
        $region15: #{minigpt_forward.1} parent=11 // pred_region
          _
        $region16: #{minigpt_forward.1} parent=11 // pred_fallthru
          _
        // Predicated region
        $region17: #{minigpt_forward.1} parent=11 // pred_check
          %p457 = pneg %p98
        $region18: #{minigpt_forward.1} parent=11 // pred_check_branch
          %459 = sbr.rel (%p457) target = $region20
        $region19: #{minigpt_forward.1} parent=11 // pred_region
          _
        $region20: #{minigpt_forward.1} parent=11 // pred_fallthru
          _
        // Predicated region
        $region21: #{minigpt_forward.1} parent=11 // pred_check
          %p460 = pneg %p119
        $region22: #{minigpt_forward.1} parent=11 // pred_check_branch
          %462 = sbr.rel (%p460) target = $region24
        $region23: #{minigpt_forward.1} parent=11 // pred_region
          _
        $region24: #{minigpt_forward.1} parent=11 // pred_fallthru
          _
        // Predicated region
        $region25: #{minigpt_forward.1} parent=11 // pred_check
          %p463 = pneg %p140
        $region26: #{minigpt_forward.1} parent=11 // pred_check_branch
          %465 = sbr.rel (%p463) target = $region28
        $region27: #{minigpt_forward.1} parent=11 // pred_region
          _
        $region28: #{minigpt_forward.1} parent=11 // pred_fallthru
          _
        // Predicated region
        $region29: #{minigpt_forward.1} parent=11 // pred_check
          %p466 = pneg %p161
        $region30: #{minigpt_forward.1} parent=11 // pred_check_branch
          %468 = sbr.rel (%p466) target = $region32
        $region31: #{minigpt_forward.1} parent=11 // pred_region
          _
        $region32: #{minigpt_forward.1} parent=11 // pred_fallthru
          _
        // Predicated region
        $region33: #{minigpt_forward.1} parent=11 // pred_check
          %p469 = pneg %p182
        $region34: #{minigpt_forward.1} parent=11 // pred_check_branch
          %471 = sbr.rel (%p469) target = $region36
        $region35: #{minigpt_forward.1} parent=11 // pred_region
          %s473 = ssub.s32 2048, 2048
          %474 = vsyncadd [#allocation3], %s473
          %s475 = sshll.u32 [#allocation2], 4
          %s476 = int_to_ptr.vmem [resolvable:$true] %s475
          %481 = dma.hbm_to_vmem [thread:$0]  %s6, 2048, %s476, [#allocation3], 64, 64, 4
        $region36: #{minigpt_forward.1} parent=11 // pred_fallthru
          _
        // Predicated region
        $region37: #{minigpt_forward.1} parent=11 // pred_check
          %p482 = pneg %p203
        $region38: #{minigpt_forward.1} parent=11 // pred_check_branch
          %484 = sbr.rel (%p482) target = $region40
        $region39: #{minigpt_forward.1} parent=11 // pred_region
          _
        $region40: #{minigpt_forward.1} parent=11 // pred_fallthru
          _
        // Predicated region
        $region41: #{minigpt_forward.1} parent=11 // pred_check
          %p485 = pneg %p224
        $region42: #{minigpt_forward.1} parent=11 // pred_check_branch
          %487 = sbr.rel (%p485) target = $region44
        $region43: #{minigpt_forward.1} parent=11 // pred_region
          _
        $region44: #{minigpt_forward.1} parent=11 // pred_fallthru
          _
        // Predicated region
        $region45: #{minigpt_forward.1} parent=11 // pred_check
          %p488 = pneg %p245
        $region46: #{minigpt_forward.1} parent=11 // pred_check_branch
          %490 = sbr.rel (%p488) target = $region48
        $region47: #{minigpt_forward.1} parent=11 // pred_region
          _
        $region48: #{minigpt_forward.1} parent=11 // pred_fallthru
          _
        // Predicated region
        $region49: #{minigpt_forward.1} parent=11 // pred_check
          %p491 = pneg %p266
        $region50: #{minigpt_forward.1} parent=11 // pred_check_branch
          %493 = sbr.rel (%p491) target = $region52
        $region51: #{minigpt_forward.1} parent=11 // pred_region
          %s495 = ssub.s32 4096, 4096
          %496 = vsyncadd [#allocation6], %s495
          %s497 = sshll.u32 [#allocation5], 4
          %s498 = int_to_ptr.vmem [resolvable:$true] %s497
          %503 = dma.hbm_to_vmem [thread:$0]  %s10, 4096, %s498, [#allocation6], 128, 128, 8
        $region52: #{minigpt_forward.1} parent=11 // pred_fallthru
          _
        // Predicated region
        $region53: #{minigpt_forward.1} parent=11 // pred_check
          %p504 = pneg %p287
        $region54: #{minigpt_forward.1} parent=11 // pred_check_branch
          %506 = sbr.rel (%p504) target = $region56
        $region55: #{minigpt_forward.1} parent=11 // pred_region
          _
        $region56: #{minigpt_forward.1} parent=11 // pred_fallthru
          _
        // Predicated region
        $region57: #{minigpt_forward.1} parent=11 // pred_check
          %p507 = pneg %p308
        $region58: #{minigpt_forward.1} parent=11 // pred_check_branch
          %509 = sbr.rel (%p507) target = $region60
        $region59: #{minigpt_forward.1} parent=11 // pred_region
          %s511 = ssub.s32 4096, 4096
          %512 = vsyncadd [#allocation6], %s511
          %s513 = sshll.u32 [#allocation7], 4
          %s514 = int_to_ptr.vmem [resolvable:$true] %s513
          %519 = dma.hbm_to_vmem [thread:$0]  %s12, 4096, %s514, [#allocation6], 64, 64, 4
        $region60: #{minigpt_forward.1} parent=11 // pred_fallthru
          _
        // Predicated region
        $region61: #{minigpt_forward.1} parent=11 // pred_check
          %p520 = pneg %p329
        $region62: #{minigpt_forward.1} parent=11 // pred_check_branch
          %522 = sbr.rel (%p520) target = $region64
        $region63: #{minigpt_forward.1} parent=11 // pred_region
          _
        $region64: #{minigpt_forward.1} parent=11 // pred_fallthru
          _
        // Predicated region
        $region65: #{minigpt_forward.1} parent=11 // pred_check
          %p523 = pneg %p350
        $region66: #{minigpt_forward.1} parent=11 // pred_check_branch
          %525 = sbr.rel (%p523) target = $region68
        $region67: #{minigpt_forward.1} parent=11 // pred_region
          _
        $region68: #{minigpt_forward.1} parent=11 // pred_fallthru
          _
        // Predicated region
        $region69: #{minigpt_forward.1} parent=11 // pred_check
          %p526 = pneg %p371
        $region70: #{minigpt_forward.1} parent=11 // pred_check_branch
          %528 = sbr.rel (%p526) target = $region72
        $region71: #{minigpt_forward.1} parent=11 // pred_region
          _
        $region72: #{minigpt_forward.1} parent=11 // pred_fallthru
          _
        // Predicated region
        $region73: #{minigpt_forward.1} parent=11 // pred_check
          %p529 = pneg %p392
        $region74: #{minigpt_forward.1} parent=11 // pred_check_branch
          %531 = sbr.rel (%p529) target = $region76
        $region75: #{minigpt_forward.1} parent=11 // pred_region
          %s533 = ssub.s32 2048, 2048
          %534 = vsyncadd [#allocation9], %s533
          %s535 = sshll.u32 [#allocation8], 4
          %s536 = int_to_ptr.vmem [resolvable:$true] %s535
          %541 = dma.hbm_to_vmem [thread:$0]  %s16, 2048, %s536, [#allocation9], 128, 128, 8
        $region76: #{minigpt_forward.1} parent=11 // pred_fallthru
          _
        // Predicated region
        $region77: #{minigpt_forward.1} parent=11 // pred_check
          %p542 = pneg %p413
        $region78: #{minigpt_forward.1} parent=11 // pred_check_branch
          %544 = sbr.rel (%p542) target = $region80
        $region79: #{minigpt_forward.1} parent=11 // pred_region
          _
        $region80: #{minigpt_forward.1} parent=11 // pred_fallthru
          _
      $region12: #{minigpt_forward.1} parent=5 // pred_fallthru
        _
      %p545 = scmp.lt.s32.totalorder %s30, 2
      // Predicated region
      $region81: #{minigpt_forward.1} parent=5 // pred_check
        %p546 = pneg %p545
      $region82: #{minigpt_forward.1} parent=5 // pred_check_branch
        %548 = sbr.rel (%p546) target = $region84
      $region83: #{minigpt_forward.1} parent=5 // pred_region
        // Predicated region
        $region85: #{minigpt_forward.1} parent=83 // pred_check
          %p549 = pneg %p50
        $region86: #{minigpt_forward.1} parent=83 // pred_check_branch
          %551 = sbr.rel (%p549) target = $region88
        $region87: #{minigpt_forward.1} parent=83 // pred_region
          %p552 = scmp.lt.s32.totalorder %s30, 1
          %s553 = scalar_select %p552, %s30, 1
          %s554 = smul.addr %s553, 2
          %s555 = smul.addr %s554, 8
          %s556 = scalar_lea.vmem %s0, %s555
        $region88: #{minigpt_forward.1} parent=83 // pred_fallthru
          _
      $region84: #{minigpt_forward.1} parent=5 // pred_fallthru
        _
      %p557 = scmp.le.s32.totalorder 1, %s30
      %p558 = scmp.lt.s32.totalorder %s30, 3
      %p559 = pnand %p557, %p558
      %p560 = pneg %p559
      // Predicated region
      $region89: #{minigpt_forward.1} parent=5 // pred_check
        _
      $region90: #{minigpt_forward.1} parent=5 // pred_check_branch
        %562 = sbr.rel (%p559) target = $region92
      $region91: #{minigpt_forward.1} parent=5 // pred_region
        %s563 = ssub.s32 %s30, 1
        // Predicated region
        $region93: #{minigpt_forward.1} parent=91 // pred_check
          %p564 = pneg %p182
        $region94: #{minigpt_forward.1} parent=91 // pred_check_branch
          %566 = sbr.rel (%p564) target = $region96
        $region95: #{minigpt_forward.1} parent=91 // pred_region
          %567 = dma.done [#allocation3], 2048
        $region96: #{minigpt_forward.1} parent=91 // pred_fallthru
          _
        // Predicated region
        $region97: #{minigpt_forward.1} parent=91 // pred_check
          %p568 = pneg %p266
        $region98: #{minigpt_forward.1} parent=91 // pred_check_branch
          %570 = sbr.rel (%p568) target = $region100
        $region99: #{minigpt_forward.1} parent=91 // pred_region
          %571 = dma.done [#allocation6], 4096
        $region100: #{minigpt_forward.1} parent=91 // pred_fallthru
          _
        // Predicated region
        $region101: #{minigpt_forward.1} parent=91 // pred_check
          %p572 = pneg %p308
        $region102: #{minigpt_forward.1} parent=91 // pred_check_branch
          %574 = sbr.rel (%p572) target = $region104
        $region103: #{minigpt_forward.1} parent=91 // pred_region
          %575 = dma.done [#allocation6], 4096
        $region104: #{minigpt_forward.1} parent=91 // pred_fallthru
          _
        // Predicated region
        $region105: #{minigpt_forward.1} parent=91 // pred_check
          %p576 = pneg %p392
        $region106: #{minigpt_forward.1} parent=91 // pred_check_branch
          %578 = sbr.rel (%p576) target = $region108
        $region107: #{minigpt_forward.1} parent=91 // pred_region
          %579 = dma.done [#allocation9], 2048
        $region108: #{minigpt_forward.1} parent=91 // pred_fallthru
          _
        %p580 = scmp.lt.s32.totalorder %s35, 1
        %s581 = scalar_select %p580, %s35, 1
        %s582 = smul.addr %s581, 2
        %s583 = smul.addr %s582, 8
        %s584 = scalar_lea.vmem %s0, %s583
        %p585 = pneg %p56
        %p586 = pneg %p53
        %p587 = pneg %p77
        %p588 = pneg %p74
        %p589 = pneg %p98
        %p590 = pneg %p95
        %p591 = pneg %p119
        %p592 = pneg %p116
        %p593 = pneg %p140
        %p594 = pneg %p137
        %p595 = pneg %p161
        %p596 = pneg %p158
        %p597 = pneg %p182
        %p598 = pneg %p179
        %p599 = pneg %p203
        %p600 = pneg %p200
        %p601 = pneg %p224
        %p602 = pneg %p221
        %p603 = pneg %p245
        %p604 = pneg %p242
        %p605 = pneg %p266
        %p606 = pneg %p263
        %p607 = pneg %p287
        %p608 = pneg %p284
        %p609 = pneg %p308
        %p610 = pneg %p305
        %p611 = pneg %p329
        %p612 = pneg %p326
        %p613 = pneg %p350
        %p614 = pneg %p347
        %p615 = pneg %p371
        %p616 = pneg %p368
        %p617 = pneg %p392
        %p618 = pneg %p389
        %p619 = pneg %p413
        %p620 = pneg %p410
        %p621 = pneg %p439
        %p622 = pneg %p436
        %s623 = sand.u32 %s426, 1
        %s624 = scalar_lea.sflag [#allocation4], %s623
        %s625 = sand.u32 %s426, 1
        %s626 = smul.addr %s625, 32
        %s627 = scalar_lea.vmem [#allocation10], %s626
        %p628 = scmp.lt.s32.totalorder %s35, 1
        %s629 = scalar_select %p628, %s35, 1
        %s630 = smul.addr %s629, 2
        %s631 = smul.addr %s630, 8
        %s632 = scalar_lea.vmem %s0, %s631
        %v634 = vld [vmem:[%s632] sm:$0xff]
        %v635 = vld [vmem:[%s632 + $0x8] sm:$0xff]
        %v636 = vld [vmem:[%s1] sm:$0xff]
        %v637 = vld [vmem:[%s1 + $0x8] sm:$0xff]
        %v638 = vadd.f32 %v634, %v636
        %v639 = vadd.f32 %v635, %v637
        %v640 = vld [vmem:[%s2] sm:$0x1]
        %v641 = vld [vmem:[%s3] sm:$0x1]
        %642 = vadd.xlane.f32.xlu0 %v638
        %v643 = vpop.xlane.xlu0 %642
        %644 = vadd.xlane.f32.xlu0 %v639
        %v645 = vpop.xlane.xlu0 %644
        %v646 = vrcp.pop 128.0
        %v647 = vmul.f32 %v643, %v646
        %v648 = vmul.f32 %v645, %v646
        %v649 = vsub.f32 %v638, %v647
        %v650 = vsub.f32 %v639, %v648
        %v651 = vmul.f32 %v649, %v649
        %v652 = vmul.f32 %v650, %v650
        %653 = vadd.xlane.f32.xlu0 %v651
        %v654 = vpop.xlane.xlu0 %653
        %655 = vadd.xlane.f32.xlu0 %v652
        %v656 = vpop.xlane.xlu0 %655
        %v657 = vmul.f32 %v654, %v646
        %v658 = vmul.f32 %v656, %v646
        %v659 = vadd.f32 %v657, 1e-05
        %v660 = vadd.f32 %v658, 1e-05
        %v661 = vrsqrt.pop %v659
        %v662 = vrsqrt.pop %v660
        %v663 = vmul.f32 %v649, %v661
        %v664 = vmul.f32 %v650, %v662
        %v666 = vlaneseq
        %v667 = vshrl.u32 %v666, 7
        %v668 = vsub.s32 0, %v667
        %v669 = vrot.slane %v640, %v668
        %v671 = vmul.f32 %v663, %v669
        %v672 = vmul.f32 %v664, %v669
        %v674 = vlaneseq
        %v675 = vshrl.u32 %v674, 7
        %v676 = vsub.s32 0, %v675
        %v677 = vrot.slane %v641, %v676
        %v679 = vadd.f32 %v671, %v677
        %v680 = vadd.f32 %v672, %v677
        %v681 = vpack.c.bf16 %v680, %v679
        %v682 = vld [vmem:[%s4] sm:$0xff]
        %v683 = vld [vmem:[%s4 + $0x8] sm:$0xf]
        %v684 = vld [vmem:[%s4 + $0xc] sm:$0xff]
        %v685 = vld [vmem:[%s4 + $0x14] sm:$0xf]
        %v686 = vld [vmem:[%s4 + $0x18] sm:$0xff]
        %v687 = vld [vmem:[%s4 + $0x20] sm:$0xf]
        %v688 = vld [vmem:[%s4 + $0x24] sm:$0xff]
        %v689 = vld [vmem:[%s4 + $0x2c] sm:$0xf]
        %v690 = vld [vmem:[%s4 + $0x30] sm:$0xff]
        %v691 = vld [vmem:[%s4 + $0x38] sm:$0xf]
        %v692 = vld [vmem:[%s4 + $0x3c] sm:$0xff]
        %v693 = vld [vmem:[%s4 + $0x44] sm:$0xf]
        %v694 = vld [vmem:[%s4 + $0x48] sm:$0xff]
        %v695 = vld [vmem:[%s4 + $0x50] sm:$0xf]
        %v696 = vld [vmem:[%s4 + $0x54] sm:$0xff]
        %v697 = vld [vmem:[%s4 + $0x5c] sm:$0xf]
        %v698 = vld [vmem:[%s4 + $0x60] sm:$0xff]
        %v699 = vld [vmem:[%s4 + $0x68] sm:$0xf]
        %v700 = vld [vmem:[%s4 + $0x6c] sm:$0xff]
        %v701 = vld [vmem:[%s4 + $0x74] sm:$0xf]
        %v702 = vld [vmem:[%s4 + $0x78] sm:$0xff]
        %v703 = vld [vmem:[%s4 + $0x80] sm:$0xf]
        %v704 = vld [vmem:[%s4 + $0x84] sm:$0xff]
        %v705 = vld [vmem:[%s4 + $0x8c] sm:$0xf]
        %v706 = vld [vmem:[%s4 + $0x90] sm:$0xff]
        %v707 = vld [vmem:[%s4 + $0x98] sm:$0xf]
        %v708 = vld [vmem:[%s4 + $0x9c] sm:$0xff]
        %v709 = vld [vmem:[%s4 + $0xa4] sm:$0xf]
        %v710 = vld [vmem:[%s4 + $0xa8] sm:$0xff]
        %v711 = vld [vmem:[%s4 + $0xb0] sm:$0xf]
        %v712 = vld [vmem:[%s4 + $0xb4] sm:$0xff]
        %v713 = vld [vmem:[%s4 + $0xbc] sm:$0xf]
        %v714 = vld [vmem:[%s5] sm:$0x7]
        %v716 = vlaneseq
        %v717 = vshrl.u32 %v716, 7
        %v718 = vsub.s32 0, %v717
        %v719 = vrot.slane %v714, %v718
        %v720 = vlaneseq
        %v721 = vshrl.u32 %v720, 7
        %v722 = vsub.s32 1, %v721
        %v723 = vrot.slane %v714, %v722
        %v724 = vlaneseq
        %v725 = vshrl.u32 %v724, 7
        %v726 = vsub.s32 2, %v725
        %v727 = vrot.slane %v714, %v726
        %v763 = vunpack.c.l.b16 %v682
        %v764 = vunpack.c.h.b16 %v682
        %v765 = vunpack.c.l.b16 %v683
        %v766 = vunpack.c.l.b16 %v684
        %v767 = vunpack.c.h.b16 %v684
        %v768 = vunpack.c.l.b16 %v685
        %v769 = vunpack.c.l.b16 %v686
        %v770 = vunpack.c.h.b16 %v686
        %v771 = vunpack.c.l.b16 %v687
        %v772 = vunpack.c.l.b16 %v688
        %v773 = vunpack.c.h.b16 %v688
        %v774 = vunpack.c.l.b16 %v689
        %v775 = vunpack.c.l.b16 %v690
        %v776 = vunpack.c.h.b16 %v690
        %v777 = vunpack.c.l.b16 %v691
        %v778 = vunpack.c.l.b16 %v692
        %v779 = vunpack.c.h.b16 %v692
        %v780 = vunpack.c.l.b16 %v693
        %v781 = vunpack.c.l.b16 %v694
        %v782 = vunpack.c.h.b16 %v694
        %v783 = vunpack.c.l.b16 %v695
        %v784 = vunpack.c.l.b16 %v696
        %v785 = vunpack.c.h.b16 %v696
        %v786 = vunpack.c.l.b16 %v697
        %v787 = vunpack.c.l.b16 %v698
        %v788 = vunpack.c.h.b16 %v698
        %v789 = vunpack.c.l.b16 %v699
        %v790 = vunpack.c.l.b16 %v700
        %v791 = vunpack.c.h.b16 %v700
        %v792 = vunpack.c.l.b16 %v701
        %v793 = vunpack.c.l.b16 %v702
        %v794 = vunpack.c.h.b16 %v702
        %v795 = vunpack.c.l.b16 %v703
        %v796 = vunpack.c.l.b16 %v704
        %v797 = vunpack.c.h.b16 %v704
        %v798 = vunpack.c.l.b16 %v705
        %v799 = vunpack.c.l.b16 %v706
        %v800 = vunpack.c.h.b16 %v706
        %v801 = vunpack.c.l.b16 %v707
        %v802 = vunpack.c.l.b16 %v708
        %v803 = vunpack.c.h.b16 %v708
        %v804 = vunpack.c.l.b16 %v709
        %v805 = vunpack.c.l.b16 %v710
        %v806 = vunpack.c.h.b16 %v710
        %v807 = vunpack.c.l.b16 %v711
        %v808 = vunpack.c.l.b16 %v712
        %v809 = vunpack.c.h.b16 %v712
        %v810 = vunpack.c.l.b16 %v713
        %v811 = vpack.c.b16 %v766, %v763
        %v812 = vpack.c.b16 %v767, %v764
        %v813 = vpack.c.b16 %v768, %v765
        %v814 = vpack.c.b16 %v772, %v769
        %v815 = vpack.c.b16 %v773, %v770
        %v816 = vpack.c.b16 %v774, %v771
        %v817 = vpack.c.b16 %v778, %v775
        %v818 = vpack.c.b16 %v779, %v776
        %v819 = vpack.c.b16 %v780, %v777
        %v820 = vpack.c.b16 %v784, %v781
        %v821 = vpack.c.b16 %v785, %v782
        %v822 = vpack.c.b16 %v786, %v783
        %v823 = vpack.c.b16 %v790, %v787
        %v824 = vpack.c.b16 %v791, %v788
        %v825 = vpack.c.b16 %v792, %v789
        %v826 = vpack.c.b16 %v796, %v793
        %v827 = vpack.c.b16 %v797, %v794
        %v828 = vpack.c.b16 %v798, %v795
        %v829 = vpack.c.b16 %v802, %v799
        %v830 = vpack.c.b16 %v803, %v800
        %v831 = vpack.c.b16 %v804, %v801
        %v832 = vpack.c.b16 %v808, %v805
        %v833 = vpack.c.b16 %v809, %v806
        %v834 = vpack.c.b16 %v810, %v807
        %859 = vmatprep.subr.bf16.mxu0 %v812
        %860 = vmatpush1.bf16.msra.mxu0 %v811
        %861 = vmatprep.subr.bf16.mxu0 %v815
        %862 = vmatpush1.bf16.msra.mxu0 %v814
        %863 = vmatprep.subr.bf16.mxu0 %v818
        %864 = vmatpush1.bf16.msra.mxu0 %v817
        %865 = vmatprep.subr.bf16.mxu0 %v821
        %866 = vmatpush1.bf16.msra.mxu0 %v820
        %867 = vmatprep.subr.bf16.mxu0 %v824
        %868 = vmatpush1.bf16.msra.mxu0 %v823
        %869 = vmatprep.subr.bf16.mxu0 %v827
        %870 = vmatpush1.bf16.msra.mxu0 %v826
        %871 = vmatprep.subr.bf16.mxu0 %v830
        %872 = vmatpush1.bf16.msra.mxu0 %v829
        %873 = vmatprep.subr.bf16.mxu0 %v833
        %874 = vmatpush1.bf16.msra.mxu0 %v832
        %875 = vmatprep.subr.bf16.mxu0 0
        %876 = vmatpush1.bf16.msra.mxu0 0
        %877 = vmatprep.subr.bf16.mxu0 0
        %878 = vmatpush1.bf16.msra.mxu0 0
        %879 = vmatprep.subr.bf16.mxu0 0
        %880 = vmatpush1.bf16.msra.mxu0 0
        %881 = vmatprep.subr.bf16.mxu0 0
        %882 = vmatpush1.bf16.msra.mxu0 0
        %883 = vmatprep.subr.bf16.mxu0 0
        %884 = vmatpush1.bf16.msra.mxu0 0
        %885 = vmatprep.subr.bf16.mxu0 0
        %886 = vmatpush1.bf16.msra.mxu0 0
        %887 = vmatprep.subr.bf16.mxu0 0
        %888 = vmatpush1.bf16.msra.mxu0 0
        %889 = vmatprep.subr.bf16.mxu0 0
        %890 = vmatpush1.bf16.msra.mxu0 0
        %891 = vmatprep.mubr.bf16.mxu0 0
        %892 = vmatmul.mubr.bf16.gmra.mrb[0].mxu0 %v681
        %v893 = vpop.f32.mrb[0].mxu0
        %v894 = vadd.f32 %v719, %v893
        %v895 = vpop.f32.mrb[0].mxu0
        %v896 = vadd.f32 %v723, %v895
        %v897 = vpop.f32.mrb[0].mxu0
        %v898 = vadd.f32 %v719, %v897
        %v899 = vpop.f32.mrb[0].mxu0
        %v900 = vadd.f32 %v723, %v899
        %901 = vdwg.mxu0
        %902 = vmatprep.subr.bf16.mxu0 0
        %903 = vmatpush1.bf16.msra.mxu0 %v813
        %904 = vmatprep.subr.bf16.mxu0 0
        %905 = vmatpush1.bf16.msra.mxu0 %v816
        %906 = vmatprep.subr.bf16.mxu0 0
        %907 = vmatpush1.bf16.msra.mxu0 %v819
        %908 = vmatprep.subr.bf16.mxu0 0
        %909 = vmatpush1.bf16.msra.mxu0 %v822
        %910 = vmatprep.subr.bf16.mxu0 0
        %911 = vmatpush1.bf16.msra.mxu0 %v825
        %912 = vmatprep.subr.bf16.mxu0 0
        %913 = vmatpush1.bf16.msra.mxu0 %v828
        %914 = vmatprep.subr.bf16.mxu0 0
        %915 = vmatpush1.bf16.msra.mxu0 %v831
        %916 = vmatprep.subr.bf16.mxu0 0
        %917 = vmatpush1.bf16.msra.mxu0 %v834
        %918 = vmatprep.subr.bf16.mxu0 0
        %919 = vmatpush1.bf16.msra.mxu0 0
        %920 = vmatprep.subr.bf16.mxu0 0
        %921 = vmatpush1.bf16.msra.mxu0 0
        %922 = vmatprep.subr.bf16.mxu0 0
        %923 = vmatpush1.bf16.msra.mxu0 0
        %924 = vmatprep.subr.bf16.mxu0 0
        %925 = vmatpush1.bf16.msra.mxu0 0
        %926 = vmatprep.subr.bf16.mxu0 0
        %927 = vmatpush1.bf16.msra.mxu0 0
        %928 = vmatprep.subr.bf16.mxu0 0
        %929 = vmatpush1.bf16.msra.mxu0 0
        %930 = vmatprep.subr.bf16.mxu0 0
        %931 = vmatpush1.bf16.msra.mxu0 0
        %932 = vmatprep.subr.bf16.mxu0 0
        %933 = vmatpush1.bf16.msra.mxu0 0
        %934 = vmatprep.mubr.bf16.mxu0 0
        %935 = vmatmul.mubr.bf16.gmra.mrb[0].mxu0 %v681
        %v936 = vpop.f32.mrb[0].mxu0
        %v937 = vadd.f32 %v727, %v936
        %v938 = vpop.f32.mrb[0].mxu0
        %v939 = vpop.f32.mrb[0].mxu0
        %v940 = vadd.f32 %v727, %v939
        %v941 = vpop.f32.mrb[0].mxu0
        %942 = vdwg.mxu0
        %945 = vrot.lane.b32.xlu0 %v894, 96
        %v946 = vpop.permute.xlu0 %945
        %947 = vrot.lane.b32.xlu0 %v898, 96
        %v948 = vpop.permute.xlu0 %947
        %951 = vrot.lane.b32.xlu0 %v894, 64
        %v952 = vpop.permute.xlu0 %951
        %953 = vrot.lane.b32.xlu0 %v898, 64
        %v954 = vpop.permute.xlu0 %953
        %957 = vrot.lane.b32.xlu0 %v894, 32
        %v958 = vpop.permute.xlu0 %957
        %959 = vrot.lane.b32.xlu0 %v898, 32
        %v960 = vpop.permute.xlu0 %959
        %v963 = vpack.c.bf16 %v898, %v894
        %v964 = vpack.c.bf16 %v948, %v946
        %v965 = vpack.c.bf16 %v954, %v952
        %v966 = vpack.c.bf16 %v960, %v958
        %969 = vrot.lane.b32.xlu0 %v896, 96
        %v970 = vpop.permute.xlu0 %969
        %971 = vrot.lane.b32.xlu0 %v900, 96
        %v972 = vpop.permute.xlu0 %971
        %975 = vrot.lane.b32.xlu0 %v896, 64
        %v976 = vpop.permute.xlu0 %975
        %977 = vrot.lane.b32.xlu0 %v900, 64
        %v978 = vpop.permute.xlu0 %977
        %981 = vrot.lane.b32.xlu0 %v896, 32
        %v982 = vpop.permute.xlu0 %981
        %983 = vrot.lane.b32.xlu0 %v900, 32
        %v984 = vpop.permute.xlu0 %983
        %v987 = vpack.c.bf16 %v900, %v896
        %v988 = vpack.c.bf16 %v972, %v970
        %v989 = vpack.c.bf16 %v978, %v976
        %v990 = vpack.c.bf16 %v984, %v982
        %993 = vrot.lane.b32.xlu0 %v937, 96
        %v994 = vpop.permute.xlu0 %993
        %995 = vrot.lane.b32.xlu0 %v940, 96
        %v996 = vpop.permute.xlu0 %995
        %999 = vrot.lane.b32.xlu0 %v937, 64
        %v1000 = vpop.permute.xlu0 %999
        %1001 = vrot.lane.b32.xlu0 %v940, 64
        %v1002 = vpop.permute.xlu0 %1001
        %1005 = vrot.lane.b32.xlu0 %v937, 32
        %v1006 = vpop.permute.xlu0 %1005
        %1007 = vrot.lane.b32.xlu0 %v940, 32
        %v1008 = vpop.permute.xlu0 %1007
        %v1011 = vpack.c.bf16 %v940, %v937
        %v1012 = vpack.c.bf16 %v996, %v994
        %v1013 = vpack.c.bf16 %v1002, %v1000
        %v1014 = vpack.c.bf16 %v1008, %v1006
        %vm1015 = vcmask 261120
        %v1017 = vsel %vm1015, %v963, 0
        %v1020 = vsel %vm1015, %v987, 0
        %1022 = vmatprep.subr.bf16.mxu0 0
        %1023 = vmatpush1.bf16.xpose.msra.mxu0 %v1020
        %1024 = vmatprep.subr.bf16.mxu0 0
        %1025 = vmatpush1.bf16.xpose.msra.mxu0 0
        %1026 = vmatprep.subr.bf16.mxu0 0
        %1027 = vmatpush1.bf16.xpose.msra.mxu0 0
        %1028 = vmatprep.subr.bf16.mxu0 0
        %1029 = vmatpush1.bf16.xpose.msra.mxu0 0
        %1030 = vmatprep.subr.bf16.mxu0 0
        %1031 = vmatpush1.bf16.xpose.msra.mxu0 0
        %1032 = vmatprep.subr.bf16.mxu0 0
        %1033 = vmatpush1.bf16.xpose.msra.mxu0 0
        %1034 = vmatprep.subr.bf16.mxu0 0
        %1035 = vmatpush1.bf16.xpose.msra.mxu0 0
        %1036 = vmatprep.subr.bf16.mxu0 0
        %1037 = vmatpush1.bf16.xpose.msra.mxu0 0
        %1038 = vmatprep.subr.bf16.mxu0 0
        %1039 = vmatpush1.bf16.xpose.msra.mxu0 0
        %1040 = vmatprep.subr.bf16.mxu0 0
        %1041 = vmatpush1.bf16.xpose.msra.mxu0 0
        %1042 = vmatprep.subr.bf16.mxu0 0
        %1043 = vmatpush1.bf16.xpose.msra.mxu0 0
        %1044 = vmatprep.subr.bf16.mxu0 0
        %1045 = vmatpush1.bf16.xpose.msra.mxu0 0
        %1046 = vmatprep.subr.bf16.mxu0 0
        %1047 = vmatpush1.bf16.xpose.msra.mxu0 0
        %1048 = vmatprep.subr.bf16.mxu0 0
        %1049 = vmatpush1.bf16.xpose.msra.mxu0 0
        %1050 = vmatprep.subr.bf16.mxu0 0
        %1051 = vmatpush1.bf16.xpose.msra.mxu0 0
        %1052 = vmatprep.subr.bf16.mxu0 0
        %1053 = vmatpush1.bf16.xpose.msra.mxu0 0
        %1054 = vmatprep.mubr.bf16.mxu0 0
        %1055 = vmatmul.mubr.bf16.gmra.mrb[0].mxu0 %v1017
        %v1056 = vpop.f32.mrb[0].mxu0
        %v1057 = vadd.f32 0.0, %v1056
        %v1058 = vpop.f32.mrb[0].mxu0
        %v1059 = vpop.f32.mrb[0].mxu0
        %v1060 = vadd.f32 0.0, %v1059
        %v1061 = vpop.f32.mrb[0].mxu0
        %1062 = vdwg.mxu0
        %v1064 = vsel %vm1015, %v964, 0
        %v1067 = vsel %vm1015, %v988, 0
        %1069 = vmatprep.subr.bf16.mxu0 0
        %1070 = vmatpush1.bf16.xpose.msra.mxu0 %v1067
        %1071 = vmatprep.subr.bf16.mxu0 0
        %1072 = vmatpush1.bf16.xpose.msra.mxu0 0
        %1073 = vmatprep.subr.bf16.mxu0 0
        %1074 = vmatpush1.bf16.xpose.msra.mxu0 0
        %1075 = vmatprep.subr.bf16.mxu0 0
        %1076 = vmatpush1.bf16.xpose.msra.mxu0 0
        %1077 = vmatprep.subr.bf16.mxu0 0
        %1078 = vmatpush1.bf16.xpose.msra.mxu0 0
        %1079 = vmatprep.subr.bf16.mxu0 0
        %1080 = vmatpush1.bf16.xpose.msra.mxu0 0
        %1081 = vmatprep.subr.bf16.mxu0 0
        %1082 = vmatpush1.bf16.xpose.msra.mxu0 0
        %1083 = vmatprep.subr.bf16.mxu0 0
        %1084 = vmatpush1.bf16.xpose.msra.mxu0 0
        %1085 = vmatprep.subr.bf16.mxu0 0
        %1086 = vmatpush1.bf16.xpose.msra.mxu0 0
        %1087 = vmatprep.subr.bf16.mxu0 0
        %1088 = vmatpush1.bf16.xpose.msra.mxu0 0
        %1089 = vmatprep.subr.bf16.mxu0 0
        %1090 = vmatpush1.bf16.xpose.msra.mxu0 0
        %1091 = vmatprep.subr.bf16.mxu0 0
        %1092 = vmatpush1.bf16.xpose.msra.mxu0 0
        %1093 = vmatprep.subr.bf16.mxu0 0
        %1094 = vmatpush1.bf16.xpose.msra.mxu0 0
        %1095 = vmatprep.subr.bf16.mxu0 0
        %1096 = vmatpush1.bf16.xpose.msra.mxu0 0
        %1097 = vmatprep.subr.bf16.mxu0 0
        %1098 = vmatpush1.bf16.xpose.msra.mxu0 0
        %1099 = vmatprep.subr.bf16.mxu0 0
        %1100 = vmatpush1.bf16.xpose.msra.mxu0 0
        %1101 = vmatprep.mubr.bf16.mxu0 0
        %1102 = vmatmul.mubr.bf16.gmra.mrb[0].mxu0 %v1064
        %v1103 = vpop.f32.mrb[0].mxu0
        %v1104 = vadd.f32 0.0, %v1103
        %v1105 = vpop.f32.mrb[0].mxu0
        %v1106 = vpop.f32.mrb[0].mxu0
        %v1107 = vadd.f32 0.0, %v1106
        %v1108 = vpop.f32.mrb[0].mxu0
        %1109 = vdwg.mxu0
        %v1111 = vsel %vm1015, %v965, 0
        %v1114 = vsel %vm1015, %v989, 0
        %1116 = vmatprep.subr.bf16.mxu0 0
        %1117 = vmatpush1.bf16.xpose.msra.mxu0 %v1114
        %1118 = vmatprep.subr.bf16.mxu0 0
        %1119 = vmatpush1.bf16.xpose.msra.mxu0 0
        %1120 = vmatprep.subr.bf16.mxu0 0
        %1121 = vmatpush1.bf16.xpose.msra.mxu0 0
        %1122 = vmatprep.subr.bf16.mxu0 0
        %1123 = vmatpush1.bf16.xpose.msra.mxu0 0
        %1124 = vmatprep.subr.bf16.mxu0 0
        %1125 = vmatpush1.bf16.xpose.msra.mxu0 0
        %1126 = vmatprep.subr.bf16.mxu0 0
        %1127 = vmatpush1.bf16.xpose.msra.mxu0 0
        %1128 = vmatprep.subr.bf16.mxu0 0
        %1129 = vmatpush1.bf16.xpose.msra.mxu0 0
        %1130 = vmatprep.subr.bf16.mxu0 0
        %1131 = vmatpush1.bf16.xpose.msra.mxu0 0
        %1132 = vmatprep.subr.bf16.mxu0 0
        %1133 = vmatpush1.bf16.xpose.msra.mxu0 0
        %1134 = vmatprep.subr.bf16.mxu0 0
        %1135 = vmatpush1.bf16.xpose.msra.mxu0 0
        %1136 = vmatprep.subr.bf16.mxu0 0
        %1137 = vmatpush1.bf16.xpose.msra.mxu0 0
        %1138 = vmatprep.subr.bf16.mxu0 0
        %1139 = vmatpush1.bf16.xpose.msra.mxu0 0
        %1140 = vmatprep.subr.bf16.mxu0 0
        %1141 = vmatpush1.bf16.xpose.msra.mxu0 0
        %1142 = vmatprep.subr.bf16.mxu0 0
        %1143 = vmatpush1.bf16.xpose.msra.mxu0 0
        %1144 = vmatprep.subr.bf16.mxu0 0
        %1145 = vmatpush1.bf16.xpose.msra.mxu0 0
        %1146 = vmatprep.subr.bf16.mxu0 0
        %1147 = vmatpush1.bf16.xpose.msra.mxu0 0
        %1148 = vmatprep.mubr.bf16.mxu0 0
        %1149 = vmatmul.mubr.bf16.gmra.mrb[0].mxu0 %v1111
        %v1150 = vpop.f32.mrb[0].mxu0
        %v1151 = vadd.f32 0.0, %v1150
        %v1152 = vpop.f32.mrb[0].mxu0
        %v1153 = vpop.f32.mrb[0].mxu0
        %v1154 = vadd.f32 0.0, %v1153
        %v1155 = vpop.f32.mrb[0].mxu0
        %1156 = vdwg.mxu0
        %v1158 = vsel %vm1015, %v966, 0
        %v1161 = vsel %vm1015, %v990, 0
        %1163 = vmatprep.subr.bf16.mxu0 0
        %1164 = vmatpush1.bf16.xpose.msra.mxu0 %v1161
        %1165 = vmatprep.subr.bf16.mxu0 0
        %1166 = vmatpush1.bf16.xpose.msra.mxu0 0
        %1167 = vmatprep.subr.bf16.mxu0 0
        %1168 = vmatpush1.bf16.xpose.msra.mxu0 0
        %1169 = vmatprep.subr.bf16.mxu0 0
        %1170 = vmatpush1.bf16.xpose.msra.mxu0 0
        %1171 = vmatprep.subr.bf16.mxu0 0
        %1172 = vmatpush1.bf16.xpose.msra.mxu0 0
        %1173 = vmatprep.subr.bf16.mxu0 0
        %1174 = vmatpush1.bf16.xpose.msra.mxu0 0
        %1175 = vmatprep.subr.bf16.mxu0 0
        %1176 = vmatpush1.bf16.xpose.msra.mxu0 0
        %1177 = vmatprep.subr.bf16.mxu0 0
        %1178 = vmatpush1.bf16.xpose.msra.mxu0 0
        %1179 = vmatprep.subr.bf16.mxu0 0
        %1180 = vmatpush1.bf16.xpose.msra.mxu0 0
        %1181 = vmatprep.subr.bf16.mxu0 0
        %1182 = vmatpush1.bf16.xpose.msra.mxu0 0
        %1183 = vmatprep.subr.bf16.mxu0 0
        %1184 = vmatpush1.bf16.xpose.msra.mxu0 0
        %1185 = vmatprep.subr.bf16.mxu0 0
        %1186 = vmatpush1.bf16.xpose.msra.mxu0 0
        %1187 = vmatprep.subr.bf16.mxu0 0
        %1188 = vmatpush1.bf16.xpose.msra.mxu0 0
        %1189 = vmatprep.subr.bf16.mxu0 0
        %1190 = vmatpush1.bf16.xpose.msra.mxu0 0
        %1191 = vmatprep.subr.bf16.mxu0 0
        %1192 = vmatpush1.bf16.xpose.msra.mxu0 0
        %1193 = vmatprep.subr.bf16.mxu0 0
        %1194 = vmatpush1.bf16.xpose.msra.mxu0 0
        %1195 = vmatprep.mubr.bf16.mxu0 0
        %1196 = vmatmul.mubr.bf16.gmra.mrb[0].mxu0 %v1158
        %v1197 = vpop.f32.mrb[0].mxu0
        %v1198 = vadd.f32 0.0, %v1197
        %v1199 = vpop.f32.mrb[0].mxu0
        %v1200 = vpop.f32.mrb[0].mxu0
        %v1201 = vadd.f32 0.0, %v1200
        %v1202 = vpop.f32.mrb[0].mxu0
        %1203 = vdwg.mxu0
        %v1204 = vmul.f32 %v1057, 0.17677669
        %v1205 = vmul.f32 %v1060, 0.17677669
        %v1206 = vmul.f32 %v1104, 0.17677669
        %v1207 = vmul.f32 %v1107, 0.17677669
        %v1208 = vmul.f32 %v1151, 0.17677669
        %v1209 = vmul.f32 %v1154, 0.17677669
        %v1210 = vmul.f32 %v1198, 0.17677669
        %v1211 = vmul.f32 %v1201, 0.17677669
        %vm1212 = vcmask 130048
        %v1213 = vsel %vm1212, %v1204, -inf
        %1214 = vmax.xlane.f32.xlu0 %v1213
        %v1215 = vpop.xlane.xlu0 %1214
        %v1216 = vsel %vm1212, %v1205, -inf
        %1217 = vmax.xlane.f32.xlu0 %v1216
        %v1218 = vpop.xlane.xlu0 %1217
        %v1219 = vsel %vm1212, %v1206, -inf
        %1220 = vmax.xlane.f32.xlu0 %v1219
        %v1221 = vpop.xlane.xlu0 %1220
        %v1222 = vsel %vm1212, %v1207, -inf
        %1223 = vmax.xlane.f32.xlu0 %v1222
        %v1224 = vpop.xlane.xlu0 %1223
        %v1225 = vsel %vm1212, %v1208, -inf
        %1226 = vmax.xlane.f32.xlu0 %v1225
        %v1227 = vpop.xlane.xlu0 %1226
        %v1228 = vsel %vm1212, %v1209, -inf
        %1229 = vmax.xlane.f32.xlu0 %v1228
        %v1230 = vpop.xlane.xlu0 %1229
        %v1231 = vsel %vm1212, %v1210, -inf
        %1232 = vmax.xlane.f32.xlu0 %v1231
        %v1233 = vpop.xlane.xlu0 %1232
        %v1234 = vsel %vm1212, %v1211, -inf
        %1235 = vmax.xlane.f32.xlu0 %v1234
        %v1236 = vpop.xlane.xlu0 %1235
        %v1237 = vsub.f32 %v1204, %v1215
        %v1238 = vsub.f32 %v1205, %v1218
        %v1239 = vsub.f32 %v1206, %v1221
        %v1240 = vsub.f32 %v1207, %v1224
        %v1241 = vsub.f32 %v1208, %v1227
        %v1242 = vsub.f32 %v1209, %v1230
        %v1243 = vsub.f32 %v1210, %v1233
        %v1244 = vsub.f32 %v1211, %v1236
        %v1245 = vmul.f32 %v1237, 1.442695
        %v1246 = vpow.pop %v1245
        %v1247 = vmul.f32 %v1238, 1.442695
        %v1248 = vpow.pop %v1247
        %v1249 = vmul.f32 %v1239, 1.442695
        %v1250 = vpow.pop %v1249
        %v1251 = vmul.f32 %v1240, 1.442695
        %v1252 = vpow.pop %v1251
        %v1253 = vmul.f32 %v1241, 1.442695
        %v1254 = vpow.pop %v1253
        %v1255 = vmul.f32 %v1242, 1.442695
        %v1256 = vpow.pop %v1255
        %v1257 = vmul.f32 %v1243, 1.442695
        %v1258 = vpow.pop %v1257
        %v1259 = vmul.f32 %v1244, 1.442695
        %v1260 = vpow.pop %v1259
        %v1261 = vsel %vm1212, %v1246, 0.0
        %1262 = vadd.xlane.f32.xlu0 %v1261
        %v1263 = vpop.xlane.xlu0 %1262
        %v1264 = vsel %vm1212, %v1248, 0.0
        %1265 = vadd.xlane.f32.xlu0 %v1264
        %v1266 = vpop.xlane.xlu0 %1265
        %v1267 = vsel %vm1212, %v1250, 0.0
        %1268 = vadd.xlane.f32.xlu0 %v1267
        %v1269 = vpop.xlane.xlu0 %1268
        %v1270 = vsel %vm1212, %v1252, 0.0
        %1271 = vadd.xlane.f32.xlu0 %v1270
        %v1272 = vpop.xlane.xlu0 %1271
        %v1273 = vsel %vm1212, %v1254, 0.0
        %1274 = vadd.xlane.f32.xlu0 %v1273
        %v1275 = vpop.xlane.xlu0 %1274
        %v1276 = vsel %vm1212, %v1256, 0.0
        %1277 = vadd.xlane.f32.xlu0 %v1276
        %v1278 = vpop.xlane.xlu0 %1277
        %v1279 = vsel %vm1212, %v1258, 0.0
        %1280 = vadd.xlane.f32.xlu0 %v1279
        %v1281 = vpop.xlane.xlu0 %1280
        %v1282 = vsel %vm1212, %v1260, 0.0
        %1283 = vadd.xlane.f32.xlu0 %v1282
        %v1284 = vpop.xlane.xlu0 %1283
        %v1285 = vrcp.pop %v1263
        %v1286 = vrcp.pop %v1266
        %v1287 = vrcp.pop %v1269
        %v1288 = vrcp.pop %v1272
        %v1289 = vrcp.pop %v1275
        %v1290 = vrcp.pop %v1278
        %v1291 = vrcp.pop %v1281
        %v1292 = vrcp.pop %v1284
        %v1293 = vmul.f32 %v1246, %v1285
        %v1294 = vmul.f32 %v1248, %v1286
        %v1295 = vmul.f32 %v1250, %v1287
        %v1296 = vmul.f32 %v1252, %v1288
        %v1297 = vmul.f32 %v1254, %v1289
        %v1298 = vmul.f32 %v1256, %v1290
        %v1299 = vmul.f32 %v1258, %v1291
        %v1300 = vmul.f32 %v1260, %v1292
        %v1301 = vpack.c.bf16 %v1294, %v1293
        %v1302 = vpack.c.bf16 %v1296, %v1295
        %v1303 = vpack.c.bf16 %v1298, %v1297
        %v1304 = vpack.c.bf16 %v1300, %v1299
        %v1306 = vsel %vm1212, %v1301, 0
        %1308 = vmatprep.subr.bf16.mxu0 0
        %1309 = vmatpush1.bf16.msra.mxu0 %v1011
        %1310 = vmatprep.subr.bf16.mxu0 0
        %1311 = vmatpush1.bf16.msra.mxu0 0
        %1312 = vmatprep.subr.bf16.mxu0 0
        %1313 = vmatpush1.bf16.msra.mxu0 0
        %1314 = vmatprep.subr.bf16.mxu0 0
        %1315 = vmatpush1.bf16.msra.mxu0 0
        %1316 = vmatprep.subr.bf16.mxu0 0
        %1317 = vmatpush1.bf16.msra.mxu0 0
        %1318 = vmatprep.subr.bf16.mxu0 0
        %1319 = vmatpush1.bf16.msra.mxu0 0
        %1320 = vmatprep.subr.bf16.mxu0 0
        %1321 = vmatpush1.bf16.msra.mxu0 0
        %1322 = vmatprep.subr.bf16.mxu0 0
        %1323 = vmatpush1.bf16.msra.mxu0 0
        %1324 = vmatprep.subr.bf16.mxu0 0
        %1325 = vmatpush1.bf16.msra.mxu0 0
        %1326 = vmatprep.subr.bf16.mxu0 0
        %1327 = vmatpush1.bf16.msra.mxu0 0
        %1328 = vmatprep.subr.bf16.mxu0 0
        %1329 = vmatpush1.bf16.msra.mxu0 0
        %1330 = vmatprep.subr.bf16.mxu0 0
        %1331 = vmatpush1.bf16.msra.mxu0 0
        %1332 = vmatprep.subr.bf16.mxu0 0
        %1333 = vmatpush1.bf16.msra.mxu0 0
        %1334 = vmatprep.subr.bf16.mxu0 0
        %1335 = vmatpush1.bf16.msra.mxu0 0
        %1336 = vmatprep.subr.bf16.mxu0 0
        %1337 = vmatpush1.bf16.msra.mxu0 0
        %1338 = vmatprep.subr.bf16.mxu0 0
        %1339 = vmatpush1.bf16.msra.mxu0 0
        %1340 = vmatprep.mubr.bf16.mxu0 0
        %1341 = vmatmul.mubr.bf16.gmra.mrb[0].mxu0 %v1306
        %v1342 = vpop.f32.mrb[0].mxu0
        %v1343 = vadd.f32 0.0, %v1342
        %v1344 = vpop.f32.mrb[0].mxu0
        %v1345 = vpop.f32.mrb[0].mxu0
        %v1346 = vadd.f32 0.0, %v1345
        %v1347 = vpop.f32.mrb[0].mxu0
        %1348 = vdwg.mxu0
        %v1350 = vsel %vm1212, %v1302, 0
        %1352 = vmatprep.subr.bf16.mxu0 0
        %1353 = vmatpush1.bf16.msra.mxu0 %v1012
        %1354 = vmatprep.subr.bf16.mxu0 0
        %1355 = vmatpush1.bf16.msra.mxu0 0
        %1356 = vmatprep.subr.bf16.mxu0 0
        %1357 = vmatpush1.bf16.msra.mxu0 0
        %1358 = vmatprep.subr.bf16.mxu0 0
        %1359 = vmatpush1.bf16.msra.mxu0 0
        %1360 = vmatprep.subr.bf16.mxu0 0
        %1361 = vmatpush1.bf16.msra.mxu0 0
        %1362 = vmatprep.subr.bf16.mxu0 0
        %1363 = vmatpush1.bf16.msra.mxu0 0
        %1364 = vmatprep.subr.bf16.mxu0 0
        %1365 = vmatpush1.bf16.msra.mxu0 0
        %1366 = vmatprep.subr.bf16.mxu0 0
        %1367 = vmatpush1.bf16.msra.mxu0 0
        %1368 = vmatprep.subr.bf16.mxu0 0
        %1369 = vmatpush1.bf16.msra.mxu0 0
        %1370 = vmatprep.subr.bf16.mxu0 0
        %1371 = vmatpush1.bf16.msra.mxu0 0
        %1372 = vmatprep.subr.bf16.mxu0 0
        %1373 = vmatpush1.bf16.msra.mxu0 0
        %1374 = vmatprep.subr.bf16.mxu0 0
        %1375 = vmatpush1.bf16.msra.mxu0 0
        %1376 = vmatprep.subr.bf16.mxu0 0
        %1377 = vmatpush1.bf16.msra.mxu0 0
        %1378 = vmatprep.subr.bf16.mxu0 0
        %1379 = vmatpush1.bf16.msra.mxu0 0
        %1380 = vmatprep.subr.bf16.mxu0 0
        %1381 = vmatpush1.bf16.msra.mxu0 0
        %1382 = vmatprep.subr.bf16.mxu0 0
        %1383 = vmatpush1.bf16.msra.mxu0 0
        %1384 = vmatprep.mubr.bf16.mxu0 0
        %1385 = vmatmul.mubr.bf16.gmra.mrb[0].mxu0 %v1350
        %v1386 = vpop.f32.mrb[0].mxu0
        %v1387 = vadd.f32 0.0, %v1386
        %v1388 = vpop.f32.mrb[0].mxu0
        %v1389 = vpop.f32.mrb[0].mxu0
        %v1390 = vadd.f32 0.0, %v1389
        %v1391 = vpop.f32.mrb[0].mxu0
        %1392 = vdwg.mxu0
        %v1394 = vsel %vm1212, %v1303, 0
        %1396 = vmatprep.subr.bf16.mxu0 0
        %1397 = vmatpush1.bf16.msra.mxu0 %v1013
        %1398 = vmatprep.subr.bf16.mxu0 0
        %1399 = vmatpush1.bf16.msra.mxu0 0
        %1400 = vmatprep.subr.bf16.mxu0 0
        %1401 = vmatpush1.bf16.msra.mxu0 0
        %1402 = vmatprep.subr.bf16.mxu0 0
        %1403 = vmatpush1.bf16.msra.mxu0 0
        %1404 = vmatprep.subr.bf16.mxu0 0
        %1405 = vmatpush1.bf16.msra.mxu0 0
        %1406 = vmatprep.subr.bf16.mxu0 0
        %1407 = vmatpush1.bf16.msra.mxu0 0
        %1408 = vmatprep.subr.bf16.mxu0 0
        %1409 = vmatpush1.bf16.msra.mxu0 0
        %1410 = vmatprep.subr.bf16.mxu0 0
        %1411 = vmatpush1.bf16.msra.mxu0 0
        %1412 = vmatprep.subr.bf16.mxu0 0
        %1413 = vmatpush1.bf16.msra.mxu0 0
        %1414 = vmatprep.subr.bf16.mxu0 0
        %1415 = vmatpush1.bf16.msra.mxu0 0
        %1416 = vmatprep.subr.bf16.mxu0 0
        %1417 = vmatpush1.bf16.msra.mxu0 0
        %1418 = vmatprep.subr.bf16.mxu0 0
        %1419 = vmatpush1.bf16.msra.mxu0 0
        %1420 = vmatprep.subr.bf16.mxu0 0
        %1421 = vmatpush1.bf16.msra.mxu0 0
        %1422 = vmatprep.subr.bf16.mxu0 0
        %1423 = vmatpush1.bf16.msra.mxu0 0
        %1424 = vmatprep.subr.bf16.mxu0 0
        %1425 = vmatpush1.bf16.msra.mxu0 0
        %1426 = vmatprep.subr.bf16.mxu0 0
        %1427 = vmatpush1.bf16.msra.mxu0 0
        %1428 = vmatprep.mubr.bf16.mxu0 0
        %1429 = vmatmul.mubr.bf16.gmra.mrb[0].mxu0 %v1394
        %v1430 = vpop.f32.mrb[0].mxu0
        %v1431 = vadd.f32 0.0, %v1430
        %v1432 = vpop.f32.mrb[0].mxu0
        %v1433 = vpop.f32.mrb[0].mxu0
        %v1434 = vadd.f32 0.0, %v1433
        %v1435 = vpop.f32.mrb[0].mxu0
        %1436 = vdwg.mxu0
        %v1438 = vsel %vm1212, %v1304, 0
        %1440 = vmatprep.subr.bf16.mxu0 0
        %1441 = vmatpush1.bf16.msra.mxu0 %v1014
        %1442 = vmatprep.subr.bf16.mxu0 0
        %1443 = vmatpush1.bf16.msra.mxu0 0
        %1444 = vmatprep.subr.bf16.mxu0 0
        %1445 = vmatpush1.bf16.msra.mxu0 0
        %1446 = vmatprep.subr.bf16.mxu0 0
        %1447 = vmatpush1.bf16.msra.mxu0 0
        %1448 = vmatprep.subr.bf16.mxu0 0
        %1449 = vmatpush1.bf16.msra.mxu0 0
        %1450 = vmatprep.subr.bf16.mxu0 0
        %1451 = vmatpush1.bf16.msra.mxu0 0
        %1452 = vmatprep.subr.bf16.mxu0 0
        %1453 = vmatpush1.bf16.msra.mxu0 0
        %1454 = vmatprep.subr.bf16.mxu0 0
        %1455 = vmatpush1.bf16.msra.mxu0 0
        %1456 = vmatprep.subr.bf16.mxu0 0
        %1457 = vmatpush1.bf16.msra.mxu0 0
        %1458 = vmatprep.subr.bf16.mxu0 0
        %1459 = vmatpush1.bf16.msra.mxu0 0
        %1460 = vmatprep.subr.bf16.mxu0 0
        %1461 = vmatpush1.bf16.msra.mxu0 0
        %1462 = vmatprep.subr.bf16.mxu0 0
        %1463 = vmatpush1.bf16.msra.mxu0 0
        %1464 = vmatprep.subr.bf16.mxu0 0
        %1465 = vmatpush1.bf16.msra.mxu0 0
        %1466 = vmatprep.subr.bf16.mxu0 0
        %1467 = vmatpush1.bf16.msra.mxu0 0
        %1468 = vmatprep.subr.bf16.mxu0 0
        %1469 = vmatpush1.bf16.msra.mxu0 0
        %1470 = vmatprep.subr.bf16.mxu0 0
        %1471 = vmatpush1.bf16.msra.mxu0 0
        %1472 = vmatprep.mubr.bf16.mxu0 0
        %1473 = vmatmul.mubr.bf16.gmra.mrb[0].mxu0 %v1438
        %v1474 = vpop.f32.mrb[0].mxu0
        %v1475 = vadd.f32 0.0, %v1474
        %v1476 = vpop.f32.mrb[0].mxu0
        %v1477 = vpop.f32.mrb[0].mxu0
        %v1478 = vadd.f32 0.0, %v1477
        %v1479 = vpop.f32.mrb[0].mxu0
        %1480 = vdwg.mxu0
        %1483 = vrot.lane.b32.xlu0 %v1387, 32
        %v1484 = vpop.permute.xlu0 %1483
        %1485 = vrot.lane.b32.xlu0 %v1390, 32
        %v1486 = vpop.permute.xlu0 %1485
        %1491 = vrot.lane.b32.xlu0 %v1431, 64
        %v1492 = vpop.permute.xlu0 %1491
        %1493 = vrot.lane.b32.xlu0 %v1434, 64
        %v1494 = vpop.permute.xlu0 %1493
        %1499 = vrot.lane.b32.xlu0 %v1475, 96
        %v1500 = vpop.permute.xlu0 %1499
        %1501 = vrot.lane.b32.xlu0 %v1478, 96
        %v1502 = vpop.permute.xlu0 %1501
        %v1505 = vsel %vm1015, %v1343, %v1484
        %v1506 = vsel %vm1015, %v1346, %v1486
        %vm1507 = vcmask 523264
        %v1508 = vsel %vm1507, %v1505, %v1492
        %v1509 = vsel %vm1507, %v1506, %v1494
        %vm1510 = vcmask 785408
        %v1511 = vsel %vm1510, %v1508, %v1500
        %v1512 = vsel %vm1510, %v1509, %v1502
        %v1513 = vpack.c.bf16 %v1512, %v1511
        %v1514 = vld [vmem:[#allocation2] sm:$0xf]
        %v1515 = vld [vmem:[#allocation2 + $0x4] sm:$0xf]
        %v1516 = vld [vmem:[#allocation2 + $0x8] sm:$0xf]
        %v1517 = vld [vmem:[#allocation2 + $0xc] sm:$0xf]
        %v1518 = vld [vmem:[#allocation2 + $0x10] sm:$0xf]
        %v1519 = vld [vmem:[#allocation2 + $0x14] sm:$0xf]
        %v1520 = vld [vmem:[#allocation2 + $0x18] sm:$0xf]
        %v1521 = vld [vmem:[#allocation2 + $0x1c] sm:$0xf]
        %v1522 = vld [vmem:[#allocation2 + $0x20] sm:$0xf]
        %v1523 = vld [vmem:[#allocation2 + $0x24] sm:$0xf]
        %v1524 = vld [vmem:[#allocation2 + $0x28] sm:$0xf]
        %v1525 = vld [vmem:[#allocation2 + $0x2c] sm:$0xf]
        %v1526 = vld [vmem:[#allocation2 + $0x30] sm:$0xf]
        %v1527 = vld [vmem:[#allocation2 + $0x34] sm:$0xf]
        %v1528 = vld [vmem:[#allocation2 + $0x38] sm:$0xf]
        %v1529 = vld [vmem:[#allocation2 + $0x3c] sm:$0xf]
        %v1530 = vld [vmem:[%s7] sm:$0x1]
        %v1532 = vlaneseq
        %v1533 = vshrl.u32 %v1532, 7
        %v1534 = vsub.s32 0, %v1533
        %v1535 = vrot.slane %v1530, %v1534
        %v1553 = vunpack.c.l.b16 %v1514
        %v1554 = vunpack.c.l.b16 %v1515
        %v1555 = vunpack.c.l.b16 %v1516
        %v1556 = vunpack.c.l.b16 %v1517
        %v1557 = vunpack.c.l.b16 %v1518
        %v1558 = vunpack.c.l.b16 %v1519
        %v1559 = vunpack.c.l.b16 %v1520
        %v1560 = vunpack.c.l.b16 %v1521
        %v1561 = vunpack.c.l.b16 %v1522
        %v1562 = vunpack.c.l.b16 %v1523
        %v1563 = vunpack.c.l.b16 %v1524
        %v1564 = vunpack.c.l.b16 %v1525
        %v1565 = vunpack.c.l.b16 %v1526
        %v1566 = vunpack.c.l.b16 %v1527
        %v1567 = vunpack.c.l.b16 %v1528
        %v1568 = vunpack.c.l.b16 %v1529
        %v1569 = vpack.c.b16 %v1554, %v1553
        %v1570 = vpack.c.b16 %v1556, %v1555
        %v1571 = vpack.c.b16 %v1558, %v1557
        %v1572 = vpack.c.b16 %v1560, %v1559
        %v1573 = vpack.c.b16 %v1562, %v1561
        %v1574 = vpack.c.b16 %v1564, %v1563
        %v1575 = vpack.c.b16 %v1566, %v1565
        %v1576 = vpack.c.b16 %v1568, %v1567
        %1585 = vmatprep.subr.bf16.mxu0 0
        %1586 = vmatpush1.bf16.msra.mxu0 %v1569
        %1587 = vmatprep.subr.bf16.mxu0 0
        %1588 = vmatpush1.bf16.msra.mxu0 %v1570
        %1589 = vmatprep.subr.bf16.mxu0 0
        %1590 = vmatpush1.bf16.msra.mxu0 %v1571
        %1591 = vmatprep.subr.bf16.mxu0 0
        %1592 = vmatpush1.bf16.msra.mxu0 %v1572
        %1593 = vmatprep.subr.bf16.mxu0 0
        %1594 = vmatpush1.bf16.msra.mxu0 %v1573
        %1595 = vmatprep.subr.bf16.mxu0 0
        %1596 = vmatpush1.bf16.msra.mxu0 %v1574
        %1597 = vmatprep.subr.bf16.mxu0 0
        %1598 = vmatpush1.bf16.msra.mxu0 %v1575
        %1599 = vmatprep.subr.bf16.mxu0 0
        %1600 = vmatpush1.bf16.msra.mxu0 %v1576
        %1601 = vmatprep.subr.bf16.mxu0 0
        %1602 = vmatpush1.bf16.msra.mxu0 0
        %1603 = vmatprep.subr.bf16.mxu0 0
        %1604 = vmatpush1.bf16.msra.mxu0 0
        %1605 = vmatprep.subr.bf16.mxu0 0
        %1606 = vmatpush1.bf16.msra.mxu0 0
        %1607 = vmatprep.subr.bf16.mxu0 0
        %1608 = vmatpush1.bf16.msra.mxu0 0
        %1609 = vmatprep.subr.bf16.mxu0 0
        %1610 = vmatpush1.bf16.msra.mxu0 0
        %1611 = vmatprep.subr.bf16.mxu0 0
        %1612 = vmatpush1.bf16.msra.mxu0 0
        %1613 = vmatprep.subr.bf16.mxu0 0
        %1614 = vmatpush1.bf16.msra.mxu0 0
        %1615 = vmatprep.subr.bf16.mxu0 0
        %1616 = vmatpush1.bf16.msra.mxu0 0
        %1617 = vmatprep.mubr.bf16.mxu0 0
        %1618 = vmatmul.mubr.bf16.gmra.mrb[0].mxu0 %v1513
        %v1619 = vpop.f32.mrb[0].mxu0
        %v1620 = vadd.f32 %v1535, %v1619
        %v1621 = vpop.f32.mrb[0].mxu0
        %v1622 = vpop.f32.mrb[0].mxu0
        %v1623 = vadd.f32 %v1535, %v1622
        %v1624 = vpop.f32.mrb[0].mxu0
        %1625 = vdwg.mxu0
        %v1626 = vadd.f32 %v679, %v1620
        %v1627 = vadd.f32 %v680, %v1623
        %v1628 = vld [vmem:[%s8] sm:$0x1]
        %v1629 = vld [vmem:[%s9] sm:$0x1]
        %1630 = vadd.xlane.f32.xlu0 %v1626
        %v1631 = vpop.xlane.xlu0 %1630
        %1632 = vadd.xlane.f32.xlu0 %v1627
        %v1633 = vpop.xlane.xlu0 %1632
        %v1634 = vmul.f32 %v1631, %v646
        %v1635 = vmul.f32 %v1633, %v646
        %v1636 = vsub.f32 %v1626, %v1634
        %v1637 = vsub.f32 %v1627, %v1635
        %v1638 = vmul.f32 %v1636, %v1636
        %v1639 = vmul.f32 %v1637, %v1637
        %1640 = vadd.xlane.f32.xlu0 %v1638
        %v1641 = vpop.xlane.xlu0 %1640
        %1642 = vadd.xlane.f32.xlu0 %v1639
        %v1643 = vpop.xlane.xlu0 %1642
        %v1644 = vmul.f32 %v1641, %v646
        %v1645 = vmul.f32 %v1643, %v646
        %v1646 = vadd.f32 %v1644, 1e-05
        %v1647 = vadd.f32 %v1645, 1e-05
        %v1648 = vrsqrt.pop %v1646
        %v1649 = vrsqrt.pop %v1647
        %v1650 = vmul.f32 %v1636, %v1648
        %v1651 = vmul.f32 %v1637, %v1649
        %v1653 = vlaneseq
        %v1654 = vshrl.u32 %v1653, 7
        %v1655 = vsub.s32 0, %v1654
        %v1656 = vrot.slane %v1628, %v1655
        %v1658 = vmul.f32 %v1650, %v1656
        %v1659 = vmul.f32 %v1651, %v1656
        %v1661 = vlaneseq
        %v1662 = vshrl.u32 %v1661, 7
        %v1663 = vsub.s32 0, %v1662
        %v1664 = vrot.slane %v1629, %v1663
        %v1666 = vadd.f32 %v1658, %v1664
        %v1667 = vadd.f32 %v1659, %v1664
        %v1668 = vpack.c.bf16 %v1667, %v1666
        %v1669 = vld [vmem:[#allocation5] sm:$0xff]
        %v1670 = vld [vmem:[#allocation5 + $0x8] sm:$0xff]
        %v1671 = vld [vmem:[#allocation5 + $0x10] sm:$0xff]
        %v1672 = vld [vmem:[#allocation5 + $0x18] sm:$0xff]
        %v1673 = vld [vmem:[#allocation5 + $0x20] sm:$0xff]
        %v1674 = vld [vmem:[#allocation5 + $0x28] sm:$0xff]
        %v1675 = vld [vmem:[#allocation5 + $0x30] sm:$0xff]
        %v1676 = vld [vmem:[#allocation5 + $0x38] sm:$0xff]
        %v1677 = vld [vmem:[#allocation5 + $0x40] sm:$0xff]
        %v1678 = vld [vmem:[#allocation5 + $0x48] sm:$0xff]
        %v1679 = vld [vmem:[#allocation5 + $0x50] sm:$0xff]
        %v1680 = vld [vmem:[#allocation5 + $0x58] sm:$0xff]
        %v1681 = vld [vmem:[#allocation5 + $0x60] sm:$0xff]
        %v1682 = vld [vmem:[#allocation5 + $0x68] sm:$0xff]
        %v1683 = vld [vmem:[#allocation5 + $0x70] sm:$0xff]
        %v1684 = vld [vmem:[#allocation5 + $0x78] sm:$0xff]
        %v1685 = vld [vmem:[%s11] sm:$0x3]
        %v1687 = vlaneseq
        %v1688 = vshrl.u32 %v1687, 7
        %v1689 = vsub.s32 0, %v1688
        %v1690 = vrot.slane %v1685, %v1689
        %v1691 = vlaneseq
        %v1692 = vshrl.u32 %v1691, 7
        %v1693 = vsub.s32 1, %v1692
        %v1694 = vrot.slane %v1685, %v1693
        %v1713 = vunpack.c.l.b16 %v1669
        %v1714 = vunpack.c.h.b16 %v1669
        %v1715 = vunpack.c.l.b16 %v1670
        %v1716 = vunpack.c.h.b16 %v1670
        %v1717 = vunpack.c.l.b16 %v1671
        %v1718 = vunpack.c.h.b16 %v1671
        %v1719 = vunpack.c.l.b16 %v1672
        %v1720 = vunpack.c.h.b16 %v1672
        %v1721 = vunpack.c.l.b16 %v1673
        %v1722 = vunpack.c.h.b16 %v1673
        %v1723 = vunpack.c.l.b16 %v1674
        %v1724 = vunpack.c.h.b16 %v1674
        %v1725 = vunpack.c.l.b16 %v1675
        %v1726 = vunpack.c.h.b16 %v1675
        %v1727 = vunpack.c.l.b16 %v1676
        %v1728 = vunpack.c.h.b16 %v1676
        %v1729 = vunpack.c.l.b16 %v1677
        %v1730 = vunpack.c.h.b16 %v1677
        %v1731 = vunpack.c.l.b16 %v1678
        %v1732 = vunpack.c.h.b16 %v1678
        %v1733 = vunpack.c.l.b16 %v1679
        %v1734 = vunpack.c.h.b16 %v1679
        %v1735 = vunpack.c.l.b16 %v1680
        %v1736 = vunpack.c.h.b16 %v1680
        %v1737 = vunpack.c.l.b16 %v1681
        %v1738 = vunpack.c.h.b16 %v1681
        %v1739 = vunpack.c.l.b16 %v1682
        %v1740 = vunpack.c.h.b16 %v1682
        %v1741 = vunpack.c.l.b16 %v1683
        %v1742 = vunpack.c.h.b16 %v1683
        %v1743 = vunpack.c.l.b16 %v1684
        %v1744 = vunpack.c.h.b16 %v1684
        %v1745 = vpack.c.b16 %v1715, %v1713
        %v1746 = vpack.c.b16 %v1716, %v1714
        %v1747 = vpack.c.b16 %v1719, %v1717
        %v1748 = vpack.c.b16 %v1720, %v1718
        %v1749 = vpack.c.b16 %v1723, %v1721
        %v1750 = vpack.c.b16 %v1724, %v1722
        %v1751 = vpack.c.b16 %v1727, %v1725
        %v1752 = vpack.c.b16 %v1728, %v1726
        %v1753 = vpack.c.b16 %v1731, %v1729
        %v1754 = vpack.c.b16 %v1732, %v1730
        %v1755 = vpack.c.b16 %v1735, %v1733
        %v1756 = vpack.c.b16 %v1736, %v1734
        %v1757 = vpack.c.b16 %v1739, %v1737
        %v1758 = vpack.c.b16 %v1740, %v1738
        %v1759 = vpack.c.b16 %v1743, %v1741
        %v1760 = vpack.c.b16 %v1744, %v1742
        %1777 = vmatprep.subr.bf16.mxu0 %v1746
        %1778 = vmatpush1.bf16.msra.mxu0 %v1745
        %1779 = vmatprep.subr.bf16.mxu0 %v1748
        %1780 = vmatpush1.bf16.msra.mxu0 %v1747
        %1781 = vmatprep.subr.bf16.mxu0 %v1750
        %1782 = vmatpush1.bf16.msra.mxu0 %v1749
        %1783 = vmatprep.subr.bf16.mxu0 %v1752
        %1784 = vmatpush1.bf16.msra.mxu0 %v1751
        %1785 = vmatprep.subr.bf16.mxu0 %v1754
        %1786 = vmatpush1.bf16.msra.mxu0 %v1753
        %1787 = vmatprep.subr.bf16.mxu0 %v1756
        %1788 = vmatpush1.bf16.msra.mxu0 %v1755
        %1789 = vmatprep.subr.bf16.mxu0 %v1758
        %1790 = vmatpush1.bf16.msra.mxu0 %v1757
        %1791 = vmatprep.subr.bf16.mxu0 %v1760
        %1792 = vmatpush1.bf16.msra.mxu0 %v1759
        %1793 = vmatprep.subr.bf16.mxu0 0
        %1794 = vmatpush1.bf16.msra.mxu0 0
        %1795 = vmatprep.subr.bf16.mxu0 0
        %1796 = vmatpush1.bf16.msra.mxu0 0
        %1797 = vmatprep.subr.bf16.mxu0 0
        %1798 = vmatpush1.bf16.msra.mxu0 0
        %1799 = vmatprep.subr.bf16.mxu0 0
        %1800 = vmatpush1.bf16.msra.mxu0 0
        %1801 = vmatprep.subr.bf16.mxu0 0
        %1802 = vmatpush1.bf16.msra.mxu0 0
        %1803 = vmatprep.subr.bf16.mxu0 0
        %1804 = vmatpush1.bf16.msra.mxu0 0
        %1805 = vmatprep.subr.bf16.mxu0 0
        %1806 = vmatpush1.bf16.msra.mxu0 0
        %1807 = vmatprep.subr.bf16.mxu0 0
        %1808 = vmatpush1.bf16.msra.mxu0 0
        %1809 = vmatprep.mubr.bf16.mxu0 0
        %1810 = vmatmul.mubr.bf16.gmra.mrb[0].mxu0 %v1668
        %v1811 = vpop.f32.mrb[0].mxu0
        %v1812 = vadd.f32 %v1690, %v1811
        %v1813 = vpop.f32.mrb[0].mxu0
        %v1814 = vadd.f32 %v1694, %v1813
        %v1815 = vpop.f32.mrb[0].mxu0
        %v1816 = vadd.f32 %v1690, %v1815
        %v1817 = vpop.f32.mrb[0].mxu0
        %v1818 = vadd.f32 %v1694, %v1817
        %1819 = vdwg.mxu0
        %v1820 = vmax.f32 %v1812, 0.0
        %v1821 = vmax.f32 %v1814, 0.0
        %v1822 = vmax.f32 %v1816, 0.0
        %v1823 = vmax.f32 %v1818, 0.0
        %v1824 = vpack.c.bf16 %v1822, %v1820
        %v1825 = vpack.c.bf16 %v1823, %v1821
        %v1826 = vld [vmem:[#allocation7] sm:$0xf]
        %v1827 = vld [vmem:[#allocation7 + $0x4] sm:$0xf]
        %v1828 = vld [vmem:[#allocation7 + $0x8] sm:$0xf]
        %v1829 = vld [vmem:[#allocation7 + $0xc] sm:$0xf]
        %v1830 = vld [vmem:[#allocation7 + $0x10] sm:$0xf]
        %v1831 = vld [vmem:[#allocation7 + $0x14] sm:$0xf]
        %v1832 = vld [vmem:[#allocation7 + $0x18] sm:$0xf]
        %v1833 = vld [vmem:[#allocation7 + $0x1c] sm:$0xf]
        %v1834 = vld [vmem:[#allocation7 + $0x20] sm:$0xf]
        %v1835 = vld [vmem:[#allocation7 + $0x24] sm:$0xf]
        %v1836 = vld [vmem:[#allocation7 + $0x28] sm:$0xf]
        %v1837 = vld [vmem:[#allocation7 + $0x2c] sm:$0xf]
        %v1838 = vld [vmem:[#allocation7 + $0x30] sm:$0xf]
        %v1839 = vld [vmem:[#allocation7 + $0x34] sm:$0xf]
        %v1840 = vld [vmem:[#allocation7 + $0x38] sm:$0xf]
        %v1841 = vld [vmem:[#allocation7 + $0x3c] sm:$0xf]
        %v1842 = vld [vmem:[#allocation7 + $0x40] sm:$0xf]
        %v1843 = vld [vmem:[#allocation7 + $0x44] sm:$0xf]
        %v1844 = vld [vmem:[#allocation7 + $0x48] sm:$0xf]
        %v1845 = vld [vmem:[#allocation7 + $0x4c] sm:$0xf]
        %v1846 = vld [vmem:[#allocation7 + $0x50] sm:$0xf]
        %v1847 = vld [vmem:[#allocation7 + $0x54] sm:$0xf]
        %v1848 = vld [vmem:[#allocation7 + $0x58] sm:$0xf]
        %v1849 = vld [vmem:[#allocation7 + $0x5c] sm:$0xf]
        %v1850 = vld [vmem:[#allocation7 + $0x60] sm:$0xf]
        %v1851 = vld [vmem:[#allocation7 + $0x64] sm:$0xf]
        %v1852 = vld [vmem:[#allocation7 + $0x68] sm:$0xf]
        %v1853 = vld [vmem:[#allocation7 + $0x6c] sm:$0xf]
        %v1854 = vld [vmem:[#allocation7 + $0x70] sm:$0xf]
        %v1855 = vld [vmem:[#allocation7 + $0x74] sm:$0xf]
        %v1856 = vld [vmem:[#allocation7 + $0x78] sm:$0xf]
        %v1857 = vld [vmem:[#allocation7 + $0x7c] sm:$0xf]
        %v1858 = vld [vmem:[%s13] sm:$0x1]
        %v1860 = vlaneseq
        %v1861 = vshrl.u32 %v1860, 7
        %v1862 = vsub.s32 0, %v1861
        %v1863 = vrot.slane %v1858, %v1862
        %v1897 = vunpack.c.l.b16 %v1826
        %v1898 = vunpack.c.l.b16 %v1827
        %v1899 = vunpack.c.l.b16 %v1828
        %v1900 = vunpack.c.l.b16 %v1829
        %v1901 = vunpack.c.l.b16 %v1830
        %v1902 = vunpack.c.l.b16 %v1831
        %v1903 = vunpack.c.l.b16 %v1832
        %v1904 = vunpack.c.l.b16 %v1833
        %v1905 = vunpack.c.l.b16 %v1834
        %v1906 = vunpack.c.l.b16 %v1835
        %v1907 = vunpack.c.l.b16 %v1836
        %v1908 = vunpack.c.l.b16 %v1837
        %v1909 = vunpack.c.l.b16 %v1838
        %v1910 = vunpack.c.l.b16 %v1839
        %v1911 = vunpack.c.l.b16 %v1840
        %v1912 = vunpack.c.l.b16 %v1841
        %v1913 = vunpack.c.l.b16 %v1842
        %v1914 = vunpack.c.l.b16 %v1843
        %v1915 = vunpack.c.l.b16 %v1844
        %v1916 = vunpack.c.l.b16 %v1845
        %v1917 = vunpack.c.l.b16 %v1846
        %v1918 = vunpack.c.l.b16 %v1847
        %v1919 = vunpack.c.l.b16 %v1848
        %v1920 = vunpack.c.l.b16 %v1849
        %v1921 = vunpack.c.l.b16 %v1850
        %v1922 = vunpack.c.l.b16 %v1851
        %v1923 = vunpack.c.l.b16 %v1852
        %v1924 = vunpack.c.l.b16 %v1853
        %v1925 = vunpack.c.l.b16 %v1854
        %v1926 = vunpack.c.l.b16 %v1855
        %v1927 = vunpack.c.l.b16 %v1856
        %v1928 = vunpack.c.l.b16 %v1857
        %v1929 = vpack.c.b16 %v1898, %v1897
        %v1930 = vpack.c.b16 %v1900, %v1899
        %v1931 = vpack.c.b16 %v1902, %v1901
        %v1932 = vpack.c.b16 %v1904, %v1903
        %v1933 = vpack.c.b16 %v1906, %v1905
        %v1934 = vpack.c.b16 %v1908, %v1907
        %v1935 = vpack.c.b16 %v1910, %v1909
        %v1936 = vpack.c.b16 %v1912, %v1911
        %v1937 = vpack.c.b16 %v1914, %v1913
        %v1938 = vpack.c.b16 %v1916, %v1915
        %v1939 = vpack.c.b16 %v1918, %v1917
        %v1940 = vpack.c.b16 %v1920, %v1919
        %v1941 = vpack.c.b16 %v1922, %v1921
        %v1942 = vpack.c.b16 %v1924, %v1923
        %v1943 = vpack.c.b16 %v1926, %v1925
        %v1944 = vpack.c.b16 %v1928, %v1927
        %1961 = vmatprep.subr.bf16.mxu0 0
        %1962 = vmatpush1.bf16.msra.mxu0 %v1929
        %1963 = vmatprep.subr.bf16.mxu0 0
        %1964 = vmatpush1.bf16.msra.mxu0 %v1930
        %1965 = vmatprep.subr.bf16.mxu0 0
        %1966 = vmatpush1.bf16.msra.mxu0 %v1931
        %1967 = vmatprep.subr.bf16.mxu0 0
        %1968 = vmatpush1.bf16.msra.mxu0 %v1932
        %1969 = vmatprep.subr.bf16.mxu0 0
        %1970 = vmatpush1.bf16.msra.mxu0 %v1933
        %1971 = vmatprep.subr.bf16.mxu0 0
        %1972 = vmatpush1.bf16.msra.mxu0 %v1934
        %1973 = vmatprep.subr.bf16.mxu0 0
        %1974 = vmatpush1.bf16.msra.mxu0 %v1935
        %1975 = vmatprep.subr.bf16.mxu0 0
        %1976 = vmatpush1.bf16.msra.mxu0 %v1936
        %1977 = vmatprep.subr.bf16.mxu0 0
        %1978 = vmatpush1.bf16.msra.mxu0 %v1937
        %1979 = vmatprep.subr.bf16.mxu0 0
        %1980 = vmatpush1.bf16.msra.mxu0 %v1938
        %1981 = vmatprep.subr.bf16.mxu0 0
        %1982 = vmatpush1.bf16.msra.mxu0 %v1939
        %1983 = vmatprep.subr.bf16.mxu0 0
        %1984 = vmatpush1.bf16.msra.mxu0 %v1940
        %1985 = vmatprep.subr.bf16.mxu0 0
        %1986 = vmatpush1.bf16.msra.mxu0 %v1941
        %1987 = vmatprep.subr.bf16.mxu0 0
        %1988 = vmatpush1.bf16.msra.mxu0 %v1942
        %1989 = vmatprep.subr.bf16.mxu0 0
        %1990 = vmatpush1.bf16.msra.mxu0 %v1943
        %1991 = vmatprep.subr.bf16.mxu0 0
        %1992 = vmatpush1.bf16.msra.mxu0 %v1944
        %1993 = vmatprep.mubr.bf16.mxu0 %v1825
        %1994 = vmatmul.mubr.bf16.gmra.mrb[0].mxu0 %v1824
        %v1995 = vpop.f32.mrb[0].mxu0
        %v1996 = vadd.f32 %v1863, %v1995
        %v1997 = vpop.f32.mrb[0].mxu0
        %v1998 = vpop.f32.mrb[0].mxu0
        %v1999 = vadd.f32 %v1863, %v1998
        %v2000 = vpop.f32.mrb[0].mxu0
        %2001 = vdwg.mxu0
        %v2002 = vadd.f32 %v1666, %v1996
        %v2003 = vadd.f32 %v1667, %v1999
        %v2004 = vld [vmem:[%s14] sm:$0x1]
        %v2005 = vld [vmem:[%s15] sm:$0x1]
        %2006 = vadd.xlane.f32.xlu0 %v2002
        %v2007 = vpop.xlane.xlu0 %2006
        %2008 = vadd.xlane.f32.xlu0 %v2003
        %v2009 = vpop.xlane.xlu0 %2008
        %v2010 = vmul.f32 %v2007, %v646
        %v2011 = vmul.f32 %v2009, %v646
        %v2012 = vsub.f32 %v2002, %v2010
        %v2013 = vsub.f32 %v2003, %v2011
        %v2014 = vmul.f32 %v2012, %v2012
        %v2015 = vmul.f32 %v2013, %v2013
        %2016 = vadd.xlane.f32.xlu0 %v2014
        %v2017 = vpop.xlane.xlu0 %2016
        %2018 = vadd.xlane.f32.xlu0 %v2015
        %v2019 = vpop.xlane.xlu0 %2018
        %v2020 = vmul.f32 %v2017, %v646
        %v2021 = vmul.f32 %v2019, %v646
        %v2022 = vadd.f32 %v2020, 1e-05
        %v2023 = vadd.f32 %v2021, 1e-05
        %v2024 = vrsqrt.pop %v2022
        %v2025 = vrsqrt.pop %v2023
        %v2026 = vmul.f32 %v2012, %v2024
        %v2027 = vmul.f32 %v2013, %v2025
        %v2029 = vlaneseq
        %v2030 = vshrl.u32 %v2029, 7
        %v2031 = vsub.s32 0, %v2030
        %v2032 = vrot.slane %v2004, %v2031
        %v2034 = vmul.f32 %v2026, %v2032
        %v2035 = vmul.f32 %v2027, %v2032
        %v2037 = vlaneseq
        %v2038 = vshrl.u32 %v2037, 7
        %v2039 = vsub.s32 0, %v2038
        %v2040 = vrot.slane %v2005, %v2039
        %v2042 = vadd.f32 %v2034, %v2040
        %v2043 = vadd.f32 %v2035, %v2040
        %v2044 = vpack.c.bf16 %v2043, %v2042
        %s2045 = scalar_lea.vmem %s4, 192
        %v2046 = vld [vmem:[%s2045] sm:$0xff]
        %v2047 = vld [vmem:[%s2045 + $0x8] sm:$0xf]
        %v2048 = vld [vmem:[%s2045 + $0xc] sm:$0xff]
        %v2049 = vld [vmem:[%s2045 + $0x14] sm:$0xf]
        %v2050 = vld [vmem:[%s2045 + $0x18] sm:$0xff]
        %v2051 = vld [vmem:[%s2045 + $0x20] sm:$0xf]
        %v2052 = vld [vmem:[%s2045 + $0x24] sm:$0xff]
        %v2053 = vld [vmem:[%s2045 + $0x2c] sm:$0xf]
        %v2054 = vld [vmem:[%s2045 + $0x30] sm:$0xff]
        %v2055 = vld [vmem:[%s2045 + $0x38] sm:$0xf]
        %v2056 = vld [vmem:[%s2045 + $0x3c] sm:$0xff]
        %v2057 = vld [vmem:[%s2045 + $0x44] sm:$0xf]
        %v2058 = vld [vmem:[%s2045 + $0x48] sm:$0xff]
        %v2059 = vld [vmem:[%s2045 + $0x50] sm:$0xf]
        %v2060 = vld [vmem:[%s2045 + $0x54] sm:$0xff]
        %v2061 = vld [vmem:[%s2045 + $0x5c] sm:$0xf]
        %v2062 = vld [vmem:[%s2045 + $0x60] sm:$0xff]
        %v2063 = vld [vmem:[%s2045 + $0x68] sm:$0xf]
        %v2064 = vld [vmem:[%s2045 + $0x6c] sm:$0xff]
        %v2065 = vld [vmem:[%s2045 + $0x74] sm:$0xf]
        %v2066 = vld [vmem:[%s2045 + $0x78] sm:$0xff]
        %v2067 = vld [vmem:[%s2045 + $0x80] sm:$0xf]
        %v2068 = vld [vmem:[%s2045 + $0x84] sm:$0xff]
        %v2069 = vld [vmem:[%s2045 + $0x8c] sm:$0xf]
        %v2070 = vld [vmem:[%s2045 + $0x90] sm:$0xff]
        %v2071 = vld [vmem:[%s2045 + $0x98] sm:$0xf]
        %v2072 = vld [vmem:[%s2045 + $0x9c] sm:$0xff]
        %v2073 = vld [vmem:[%s2045 + $0xa4] sm:$0xf]
        %v2074 = vld [vmem:[%s2045 + $0xa8] sm:$0xff]
        %v2075 = vld [vmem:[%s2045 + $0xb0] sm:$0xf]
        %v2076 = vld [vmem:[%s2045 + $0xb4] sm:$0xff]
        %v2077 = vld [vmem:[%s2045 + $0xbc] sm:$0xf]
        %s2078 = scalar_lea.vmem %s5, 3
        %v2079 = vld [vmem:[%s2078] sm:$0x7]
        %v2081 = vlaneseq
        %v2082 = vshrl.u32 %v2081, 7
        %v2083 = vsub.s32 0, %v2082
        %v2084 = vrot.slane %v2079, %v2083
        %v2085 = vlaneseq
        %v2086 = vshrl.u32 %v2085, 7
        %v2087 = vsub.s32 1, %v2086
        %v2088 = vrot.slane %v2079, %v2087
        %v2089 = vlaneseq
        %v2090 = vshrl.u32 %v2089, 7
        %v2091 = vsub.s32 2, %v2090
        %v2092 = vrot.slane %v2079, %v2091
        %v2128 = vunpack.c.l.b16 %v2046
        %v2129 = vunpack.c.h.b16 %v2046
        %v2130 = vunpack.c.l.b16 %v2047
        %v2131 = vunpack.c.l.b16 %v2048
        %v2132 = vunpack.c.h.b16 %v2048
        %v2133 = vunpack.c.l.b16 %v2049
        %v2134 = vunpack.c.l.b16 %v2050
        %v2135 = vunpack.c.h.b16 %v2050
        %v2136 = vunpack.c.l.b16 %v2051
        %v2137 = vunpack.c.l.b16 %v2052
        %v2138 = vunpack.c.h.b16 %v2052
        %v2139 = vunpack.c.l.b16 %v2053
        %v2140 = vunpack.c.l.b16 %v2054
        %v2141 = vunpack.c.h.b16 %v2054
        %v2142 = vunpack.c.l.b16 %v2055
        %v2143 = vunpack.c.l.b16 %v2056
        %v2144 = vunpack.c.h.b16 %v2056
        %v2145 = vunpack.c.l.b16 %v2057
        %v2146 = vunpack.c.l.b16 %v2058
        %v2147 = vunpack.c.h.b16 %v2058
        %v2148 = vunpack.c.l.b16 %v2059
        %v2149 = vunpack.c.l.b16 %v2060
        %v2150 = vunpack.c.h.b16 %v2060
        %v2151 = vunpack.c.l.b16 %v2061
        %v2152 = vunpack.c.l.b16 %v2062
        %v2153 = vunpack.c.h.b16 %v2062
        %v2154 = vunpack.c.l.b16 %v2063
        %v2155 = vunpack.c.l.b16 %v2064
        %v2156 = vunpack.c.h.b16 %v2064
        %v2157 = vunpack.c.l.b16 %v2065
        %v2158 = vunpack.c.l.b16 %v2066
        %v2159 = vunpack.c.h.b16 %v2066
        %v2160 = vunpack.c.l.b16 %v2067
        %v2161 = vunpack.c.l.b16 %v2068
        %v2162 = vunpack.c.h.b16 %v2068
        %v2163 = vunpack.c.l.b16 %v2069
        %v2164 = vunpack.c.l.b16 %v2070
        %v2165 = vunpack.c.h.b16 %v2070
        %v2166 = vunpack.c.l.b16 %v2071
        %v2167 = vunpack.c.l.b16 %v2072
        %v2168 = vunpack.c.h.b16 %v2072
        %v2169 = vunpack.c.l.b16 %v2073
        %v2170 = vunpack.c.l.b16 %v2074
        %v2171 = vunpack.c.h.b16 %v2074
        %v2172 = vunpack.c.l.b16 %v2075
        %v2173 = vunpack.c.l.b16 %v2076
        %v2174 = vunpack.c.h.b16 %v2076
        %v2175 = vunpack.c.l.b16 %v2077
        %v2176 = vpack.c.b16 %v2131, %v2128
        %v2177 = vpack.c.b16 %v2132, %v2129
        %v2178 = vpack.c.b16 %v2133, %v2130
        %v2179 = vpack.c.b16 %v2137, %v2134
        %v2180 = vpack.c.b16 %v2138, %v2135
        %v2181 = vpack.c.b16 %v2139, %v2136
        %v2182 = vpack.c.b16 %v2143, %v2140
        %v2183 = vpack.c.b16 %v2144, %v2141
        %v2184 = vpack.c.b16 %v2145, %v2142
        %v2185 = vpack.c.b16 %v2149, %v2146
        %v2186 = vpack.c.b16 %v2150, %v2147
        %v2187 = vpack.c.b16 %v2151, %v2148
        %v2188 = vpack.c.b16 %v2155, %v2152
        %v2189 = vpack.c.b16 %v2156, %v2153
        %v2190 = vpack.c.b16 %v2157, %v2154
        %v2191 = vpack.c.b16 %v2161, %v2158
        %v2192 = vpack.c.b16 %v2162, %v2159
        %v2193 = vpack.c.b16 %v2163, %v2160
        %v2194 = vpack.c.b16 %v2167, %v2164
        %v2195 = vpack.c.b16 %v2168, %v2165
        %v2196 = vpack.c.b16 %v2169, %v2166
        %v2197 = vpack.c.b16 %v2173, %v2170
        %v2198 = vpack.c.b16 %v2174, %v2171
        %v2199 = vpack.c.b16 %v2175, %v2172
        %2224 = vmatprep.subr.bf16.mxu0 %v2177
        %2225 = vmatpush1.bf16.msra.mxu0 %v2176
        %2226 = vmatprep.subr.bf16.mxu0 %v2180
        %2227 = vmatpush1.bf16.msra.mxu0 %v2179
        %2228 = vmatprep.subr.bf16.mxu0 %v2183
        %2229 = vmatpush1.bf16.msra.mxu0 %v2182
        %2230 = vmatprep.subr.bf16.mxu0 %v2186
        %2231 = vmatpush1.bf16.msra.mxu0 %v2185
        %2232 = vmatprep.subr.bf16.mxu0 %v2189
        %2233 = vmatpush1.bf16.msra.mxu0 %v2188
        %2234 = vmatprep.subr.bf16.mxu0 %v2192
        %2235 = vmatpush1.bf16.msra.mxu0 %v2191
        %2236 = vmatprep.subr.bf16.mxu0 %v2195
        %2237 = vmatpush1.bf16.msra.mxu0 %v2194
        %2238 = vmatprep.subr.bf16.mxu0 %v2198
        %2239 = vmatpush1.bf16.msra.mxu0 %v2197
        %2240 = vmatprep.subr.bf16.mxu0 0
        %2241 = vmatpush1.bf16.msra.mxu0 0
        %2242 = vmatprep.subr.bf16.mxu0 0
        %2243 = vmatpush1.bf16.msra.mxu0 0
        %2244 = vmatprep.subr.bf16.mxu0 0
        %2245 = vmatpush1.bf16.msra.mxu0 0
        %2246 = vmatprep.subr.bf16.mxu0 0
        %2247 = vmatpush1.bf16.msra.mxu0 0
        %2248 = vmatprep.subr.bf16.mxu0 0
        %2249 = vmatpush1.bf16.msra.mxu0 0
        %2250 = vmatprep.subr.bf16.mxu0 0
        %2251 = vmatpush1.bf16.msra.mxu0 0
        %2252 = vmatprep.subr.bf16.mxu0 0
        %2253 = vmatpush1.bf16.msra.mxu0 0
        %2254 = vmatprep.subr.bf16.mxu0 0
        %2255 = vmatpush1.bf16.msra.mxu0 0
        %2256 = vmatprep.mubr.bf16.mxu0 0
        %2257 = vmatmul.mubr.bf16.gmra.mrb[0].mxu0 %v2044
        %v2258 = vpop.f32.mrb[0].mxu0
        %v2259 = vadd.f32 %v2084, %v2258
        %v2260 = vpop.f32.mrb[0].mxu0
        %v2261 = vadd.f32 %v2088, %v2260
        %v2262 = vpop.f32.mrb[0].mxu0
        %v2263 = vadd.f32 %v2084, %v2262
        %v2264 = vpop.f32.mrb[0].mxu0
        %v2265 = vadd.f32 %v2088, %v2264
        %2266 = vdwg.mxu0
        %2267 = vmatprep.subr.bf16.mxu0 0
        %2268 = vmatpush1.bf16.msra.mxu0 %v2178
        %2269 = vmatprep.subr.bf16.mxu0 0
        %2270 = vmatpush1.bf16.msra.mxu0 %v2181
        %2271 = vmatprep.subr.bf16.mxu0 0
        %2272 = vmatpush1.bf16.msra.mxu0 %v2184
        %2273 = vmatprep.subr.bf16.mxu0 0
        %2274 = vmatpush1.bf16.msra.mxu0 %v2187
        %2275 = vmatprep.subr.bf16.mxu0 0
        %2276 = vmatpush1.bf16.msra.mxu0 %v2190
        %2277 = vmatprep.subr.bf16.mxu0 0
        %2278 = vmatpush1.bf16.msra.mxu0 %v2193
        %2279 = vmatprep.subr.bf16.mxu0 0
        %2280 = vmatpush1.bf16.msra.mxu0 %v2196
        %2281 = vmatprep.subr.bf16.mxu0 0
        %2282 = vmatpush1.bf16.msra.mxu0 %v2199
        %2283 = vmatprep.subr.bf16.mxu0 0
        %2284 = vmatpush1.bf16.msra.mxu0 0
        %2285 = vmatprep.subr.bf16.mxu0 0
        %2286 = vmatpush1.bf16.msra.mxu0 0
        %2287 = vmatprep.subr.bf16.mxu0 0
        %2288 = vmatpush1.bf16.msra.mxu0 0
        %2289 = vmatprep.subr.bf16.mxu0 0
        %2290 = vmatpush1.bf16.msra.mxu0 0
        %2291 = vmatprep.subr.bf16.mxu0 0
        %2292 = vmatpush1.bf16.msra.mxu0 0
        %2293 = vmatprep.subr.bf16.mxu0 0
        %2294 = vmatpush1.bf16.msra.mxu0 0
        %2295 = vmatprep.subr.bf16.mxu0 0
        %2296 = vmatpush1.bf16.msra.mxu0 0
        %2297 = vmatprep.subr.bf16.mxu0 0
        %2298 = vmatpush1.bf16.msra.mxu0 0
        %2299 = vmatprep.mubr.bf16.mxu0 0
        %2300 = vmatmul.mubr.bf16.gmra.mrb[0].mxu0 %v2044
        %v2301 = vpop.f32.mrb[0].mxu0
        %v2302 = vadd.f32 %v2092, %v2301
        %v2303 = vpop.f32.mrb[0].mxu0
        %v2304 = vpop.f32.mrb[0].mxu0
        %v2305 = vadd.f32 %v2092, %v2304
        %v2306 = vpop.f32.mrb[0].mxu0
        %2307 = vdwg.mxu0
        %2310 = vrot.lane.b32.xlu0 %v2259, 96
        %v2311 = vpop.permute.xlu0 %2310
        %2312 = vrot.lane.b32.xlu0 %v2263, 96
        %v2313 = vpop.permute.xlu0 %2312
        %2316 = vrot.lane.b32.xlu0 %v2259, 64
        %v2317 = vpop.permute.xlu0 %2316
        %2318 = vrot.lane.b32.xlu0 %v2263, 64
        %v2319 = vpop.permute.xlu0 %2318
        %2322 = vrot.lane.b32.xlu0 %v2259, 32
        %v2323 = vpop.permute.xlu0 %2322
        %2324 = vrot.lane.b32.xlu0 %v2263, 32
        %v2325 = vpop.permute.xlu0 %2324
        %v2328 = vpack.c.bf16 %v2263, %v2259
        %v2329 = vpack.c.bf16 %v2313, %v2311
        %v2330 = vpack.c.bf16 %v2319, %v2317
        %v2331 = vpack.c.bf16 %v2325, %v2323
        %2334 = vrot.lane.b32.xlu0 %v2261, 96
        %v2335 = vpop.permute.xlu0 %2334
        %2336 = vrot.lane.b32.xlu0 %v2265, 96
        %v2337 = vpop.permute.xlu0 %2336
        %2340 = vrot.lane.b32.xlu0 %v2261, 64
        %v2341 = vpop.permute.xlu0 %2340
        %2342 = vrot.lane.b32.xlu0 %v2265, 64
        %v2343 = vpop.permute.xlu0 %2342
        %2346 = vrot.lane.b32.xlu0 %v2261, 32
        %v2347 = vpop.permute.xlu0 %2346
        %2348 = vrot.lane.b32.xlu0 %v2265, 32
        %v2349 = vpop.permute.xlu0 %2348
        %v2352 = vpack.c.bf16 %v2265, %v2261
        %v2353 = vpack.c.bf16 %v2337, %v2335
        %v2354 = vpack.c.bf16 %v2343, %v2341
        %v2355 = vpack.c.bf16 %v2349, %v2347
        %2358 = vrot.lane.b32.xlu0 %v2302, 96
        %v2359 = vpop.permute.xlu0 %2358
        %2360 = vrot.lane.b32.xlu0 %v2305, 96
        %v2361 = vpop.permute.xlu0 %2360
        %2364 = vrot.lane.b32.xlu0 %v2302, 64
        %v2365 = vpop.permute.xlu0 %2364
        %2366 = vrot.lane.b32.xlu0 %v2305, 64
        %v2367 = vpop.permute.xlu0 %2366
        %2370 = vrot.lane.b32.xlu0 %v2302, 32
        %v2371 = vpop.permute.xlu0 %2370
        %2372 = vrot.lane.b32.xlu0 %v2305, 32
        %v2373 = vpop.permute.xlu0 %2372
        %v2376 = vpack.c.bf16 %v2305, %v2302
        %v2377 = vpack.c.bf16 %v2361, %v2359
        %v2378 = vpack.c.bf16 %v2367, %v2365
        %v2379 = vpack.c.bf16 %v2373, %v2371
        %v2381 = vsel %vm1015, %v2328, 0
        %v2384 = vsel %vm1015, %v2352, 0
        %2386 = vmatprep.subr.bf16.mxu0 0
        %2387 = vmatpush1.bf16.xpose.msra.mxu0 %v2384
        %2388 = vmatprep.subr.bf16.mxu0 0
        %2389 = vmatpush1.bf16.xpose.msra.mxu0 0
        %2390 = vmatprep.subr.bf16.mxu0 0
        %2391 = vmatpush1.bf16.xpose.msra.mxu0 0
        %2392 = vmatprep.subr.bf16.mxu0 0
        %2393 = vmatpush1.bf16.xpose.msra.mxu0 0
        %2394 = vmatprep.subr.bf16.mxu0 0
        %2395 = vmatpush1.bf16.xpose.msra.mxu0 0
        %2396 = vmatprep.subr.bf16.mxu0 0
        %2397 = vmatpush1.bf16.xpose.msra.mxu0 0
        %2398 = vmatprep.subr.bf16.mxu0 0
        %2399 = vmatpush1.bf16.xpose.msra.mxu0 0
        %2400 = vmatprep.subr.bf16.mxu0 0
        %2401 = vmatpush1.bf16.xpose.msra.mxu0 0
        %2402 = vmatprep.subr.bf16.mxu0 0
        %2403 = vmatpush1.bf16.xpose.msra.mxu0 0
        %2404 = vmatprep.subr.bf16.mxu0 0
        %2405 = vmatpush1.bf16.xpose.msra.mxu0 0
        %2406 = vmatprep.subr.bf16.mxu0 0
        %2407 = vmatpush1.bf16.xpose.msra.mxu0 0
        %2408 = vmatprep.subr.bf16.mxu0 0
        %2409 = vmatpush1.bf16.xpose.msra.mxu0 0
        %2410 = vmatprep.subr.bf16.mxu0 0
        %2411 = vmatpush1.bf16.xpose.msra.mxu0 0
        %2412 = vmatprep.subr.bf16.mxu0 0
        %2413 = vmatpush1.bf16.xpose.msra.mxu0 0
        %2414 = vmatprep.subr.bf16.mxu0 0
        %2415 = vmatpush1.bf16.xpose.msra.mxu0 0
        %2416 = vmatprep.subr.bf16.mxu0 0
        %2417 = vmatpush1.bf16.xpose.msra.mxu0 0
        %2418 = vmatprep.mubr.bf16.mxu0 0
        %2419 = vmatmul.mubr.bf16.gmra.mrb[0].mxu0 %v2381
        %v2420 = vpop.f32.mrb[0].mxu0
        %v2421 = vadd.f32 0.0, %v2420
        %v2422 = vpop.f32.mrb[0].mxu0
        %v2423 = vpop.f32.mrb[0].mxu0
        %v2424 = vadd.f32 0.0, %v2423
        %v2425 = vpop.f32.mrb[0].mxu0
        %2426 = vdwg.mxu0
        %v2428 = vsel %vm1015, %v2329, 0
        %v2431 = vsel %vm1015, %v2353, 0
        %2433 = vmatprep.subr.bf16.mxu0 0
        %2434 = vmatpush1.bf16.xpose.msra.mxu0 %v2431
        %2435 = vmatprep.subr.bf16.mxu0 0
        %2436 = vmatpush1.bf16.xpose.msra.mxu0 0
        %2437 = vmatprep.subr.bf16.mxu0 0
        %2438 = vmatpush1.bf16.xpose.msra.mxu0 0
        %2439 = vmatprep.subr.bf16.mxu0 0
        %2440 = vmatpush1.bf16.xpose.msra.mxu0 0
        %2441 = vmatprep.subr.bf16.mxu0 0
        %2442 = vmatpush1.bf16.xpose.msra.mxu0 0
        %2443 = vmatprep.subr.bf16.mxu0 0
        %2444 = vmatpush1.bf16.xpose.msra.mxu0 0
        %2445 = vmatprep.subr.bf16.mxu0 0
        %2446 = vmatpush1.bf16.xpose.msra.mxu0 0
        %2447 = vmatprep.subr.bf16.mxu0 0
        %2448 = vmatpush1.bf16.xpose.msra.mxu0 0
        %2449 = vmatprep.subr.bf16.mxu0 0
        %2450 = vmatpush1.bf16.xpose.msra.mxu0 0
        %2451 = vmatprep.subr.bf16.mxu0 0
        %2452 = vmatpush1.bf16.xpose.msra.mxu0 0
        %2453 = vmatprep.subr.bf16.mxu0 0
        %2454 = vmatpush1.bf16.xpose.msra.mxu0 0
        %2455 = vmatprep.subr.bf16.mxu0 0
        %2456 = vmatpush1.bf16.xpose.msra.mxu0 0
        %2457 = vmatprep.subr.bf16.mxu0 0
        %2458 = vmatpush1.bf16.xpose.msra.mxu0 0
        %2459 = vmatprep.subr.bf16.mxu0 0
        %2460 = vmatpush1.bf16.xpose.msra.mxu0 0
        %2461 = vmatprep.subr.bf16.mxu0 0
        %2462 = vmatpush1.bf16.xpose.msra.mxu0 0
        %2463 = vmatprep.subr.bf16.mxu0 0
        %2464 = vmatpush1.bf16.xpose.msra.mxu0 0
        %2465 = vmatprep.mubr.bf16.mxu0 0
        %2466 = vmatmul.mubr.bf16.gmra.mrb[0].mxu0 %v2428
        %v2467 = vpop.f32.mrb[0].mxu0
        %v2468 = vadd.f32 0.0, %v2467
        %v2469 = vpop.f32.mrb[0].mxu0
        %v2470 = vpop.f32.mrb[0].mxu0
        %v2471 = vadd.f32 0.0, %v2470
        %v2472 = vpop.f32.mrb[0].mxu0
        %2473 = vdwg.mxu0
        %v2475 = vsel %vm1015, %v2330, 0
        %v2478 = vsel %vm1015, %v2354, 0
        %2480 = vmatprep.subr.bf16.mxu0 0
        %2481 = vmatpush1.bf16.xpose.msra.mxu0 %v2478
        %2482 = vmatprep.subr.bf16.mxu0 0
        %2483 = vmatpush1.bf16.xpose.msra.mxu0 0
        %2484 = vmatprep.subr.bf16.mxu0 0
        %2485 = vmatpush1.bf16.xpose.msra.mxu0 0
        %2486 = vmatprep.subr.bf16.mxu0 0
        %2487 = vmatpush1.bf16.xpose.msra.mxu0 0
        %2488 = vmatprep.subr.bf16.mxu0 0
        %2489 = vmatpush1.bf16.xpose.msra.mxu0 0
        %2490 = vmatprep.subr.bf16.mxu0 0
        %2491 = vmatpush1.bf16.xpose.msra.mxu0 0
        %2492 = vmatprep.subr.bf16.mxu0 0
        %2493 = vmatpush1.bf16.xpose.msra.mxu0 0
        %2494 = vmatprep.subr.bf16.mxu0 0
        %2495 = vmatpush1.bf16.xpose.msra.mxu0 0
        %2496 = vmatprep.subr.bf16.mxu0 0
        %2497 = vmatpush1.bf16.xpose.msra.mxu0 0
        %2498 = vmatprep.subr.bf16.mxu0 0
        %2499 = vmatpush1.bf16.xpose.msra.mxu0 0
        %2500 = vmatprep.subr.bf16.mxu0 0
        %2501 = vmatpush1.bf16.xpose.msra.mxu0 0
        %2502 = vmatprep.subr.bf16.mxu0 0
        %2503 = vmatpush1.bf16.xpose.msra.mxu0 0
        %2504 = vmatprep.subr.bf16.mxu0 0
        %2505 = vmatpush1.bf16.xpose.msra.mxu0 0
        %2506 = vmatprep.subr.bf16.mxu0 0
        %2507 = vmatpush1.bf16.xpose.msra.mxu0 0
        %2508 = vmatprep.subr.bf16.mxu0 0
        %2509 = vmatpush1.bf16.xpose.msra.mxu0 0
        %2510 = vmatprep.subr.bf16.mxu0 0
        %2511 = vmatpush1.bf16.xpose.msra.mxu0 0
        %2512 = vmatprep.mubr.bf16.mxu0 0
        %2513 = vmatmul.mubr.bf16.gmra.mrb[0].mxu0 %v2475
        %v2514 = vpop.f32.mrb[0].mxu0
        %v2515 = vadd.f32 0.0, %v2514
        %v2516 = vpop.f32.mrb[0].mxu0
        %v2517 = vpop.f32.mrb[0].mxu0
        %v2518 = vadd.f32 0.0, %v2517
        %v2519 = vpop.f32.mrb[0].mxu0
        %2520 = vdwg.mxu0
        %v2522 = vsel %vm1015, %v2331, 0
        %v2525 = vsel %vm1015, %v2355, 0
        %2527 = vmatprep.subr.bf16.mxu0 0
        %2528 = vmatpush1.bf16.xpose.msra.mxu0 %v2525
        %2529 = vmatprep.subr.bf16.mxu0 0
        %2530 = vmatpush1.bf16.xpose.msra.mxu0 0
        %2531 = vmatprep.subr.bf16.mxu0 0
        %2532 = vmatpush1.bf16.xpose.msra.mxu0 0
        %2533 = vmatprep.subr.bf16.mxu0 0
        %2534 = vmatpush1.bf16.xpose.msra.mxu0 0
        %2535 = vmatprep.subr.bf16.mxu0 0
        %2536 = vmatpush1.bf16.xpose.msra.mxu0 0
        %2537 = vmatprep.subr.bf16.mxu0 0
        %2538 = vmatpush1.bf16.xpose.msra.mxu0 0
        %2539 = vmatprep.subr.bf16.mxu0 0
        %2540 = vmatpush1.bf16.xpose.msra.mxu0 0
        %2541 = vmatprep.subr.bf16.mxu0 0
        %2542 = vmatpush1.bf16.xpose.msra.mxu0 0
        %2543 = vmatprep.subr.bf16.mxu0 0
        %2544 = vmatpush1.bf16.xpose.msra.mxu0 0
        %2545 = vmatprep.subr.bf16.mxu0 0
        %2546 = vmatpush1.bf16.xpose.msra.mxu0 0
        %2547 = vmatprep.subr.bf16.mxu0 0
        %2548 = vmatpush1.bf16.xpose.msra.mxu0 0
        %2549 = vmatprep.subr.bf16.mxu0 0
        %2550 = vmatpush1.bf16.xpose.msra.mxu0 0
        %2551 = vmatprep.subr.bf16.mxu0 0
        %2552 = vmatpush1.bf16.xpose.msra.mxu0 0
        %2553 = vmatprep.subr.bf16.mxu0 0
        %2554 = vmatpush1.bf16.xpose.msra.mxu0 0
        %2555 = vmatprep.subr.bf16.mxu0 0
        %2556 = vmatpush1.bf16.xpose.msra.mxu0 0
        %2557 = vmatprep.subr.bf16.mxu0 0
        %2558 = vmatpush1.bf16.xpose.msra.mxu0 0
        %2559 = vmatprep.mubr.bf16.mxu0 0
        %2560 = vmatmul.mubr.bf16.gmra.mrb[0].mxu0 %v2522
        %v2561 = vpop.f32.mrb[0].mxu0
        %v2562 = vadd.f32 0.0, %v2561
        %v2563 = vpop.f32.mrb[0].mxu0
        %v2564 = vpop.f32.mrb[0].mxu0
        %v2565 = vadd.f32 0.0, %v2564
        %v2566 = vpop.f32.mrb[0].mxu0
        %2567 = vdwg.mxu0
        %v2568 = vmul.f32 %v2421, 0.17677669
        %v2569 = vmul.f32 %v2424, 0.17677669
        %v2570 = vmul.f32 %v2468, 0.17677669
        %v2571 = vmul.f32 %v2471, 0.17677669
        %v2572 = vmul.f32 %v2515, 0.17677669
        %v2573 = vmul.f32 %v2518, 0.17677669
        %v2574 = vmul.f32 %v2562, 0.17677669
        %v2575 = vmul.f32 %v2565, 0.17677669
        %v2576 = vsel %vm1212, %v2568, -inf
        %2577 = vmax.xlane.f32.xlu0 %v2576
        %v2578 = vpop.xlane.xlu0 %2577
        %v2579 = vsel %vm1212, %v2569, -inf
        %2580 = vmax.xlane.f32.xlu0 %v2579
        %v2581 = vpop.xlane.xlu0 %2580
        %v2582 = vsel %vm1212, %v2570, -inf
        %2583 = vmax.xlane.f32.xlu0 %v2582
        %v2584 = vpop.xlane.xlu0 %2583
        %v2585 = vsel %vm1212, %v2571, -inf
        %2586 = vmax.xlane.f32.xlu0 %v2585
        %v2587 = vpop.xlane.xlu0 %2586
        %v2588 = vsel %vm1212, %v2572, -inf
        %2589 = vmax.xlane.f32.xlu0 %v2588
        %v2590 = vpop.xlane.xlu0 %2589
        %v2591 = vsel %vm1212, %v2573, -inf
        %2592 = vmax.xlane.f32.xlu0 %v2591
        %v2593 = vpop.xlane.xlu0 %2592
        %v2594 = vsel %vm1212, %v2574, -inf
        %2595 = vmax.xlane.f32.xlu0 %v2594
        %v2596 = vpop.xlane.xlu0 %2595
        %v2597 = vsel %vm1212, %v2575, -inf
        %2598 = vmax.xlane.f32.xlu0 %v2597
        %v2599 = vpop.xlane.xlu0 %2598
        %v2600 = vsub.f32 %v2568, %v2578
        %v2601 = vsub.f32 %v2569, %v2581
        %v2602 = vsub.f32 %v2570, %v2584
        %v2603 = vsub.f32 %v2571, %v2587
        %v2604 = vsub.f32 %v2572, %v2590
        %v2605 = vsub.f32 %v2573, %v2593
        %v2606 = vsub.f32 %v2574, %v2596
        %v2607 = vsub.f32 %v2575, %v2599
        %v2608 = vmul.f32 %v2600, 1.442695
        %v2609 = vpow.pop %v2608
        %v2610 = vmul.f32 %v2601, 1.442695
        %v2611 = vpow.pop %v2610
        %v2612 = vmul.f32 %v2602, 1.442695
        %v2613 = vpow.pop %v2612
        %v2614 = vmul.f32 %v2603, 1.442695
        %v2615 = vpow.pop %v2614
        %v2616 = vmul.f32 %v2604, 1.442695
        %v2617 = vpow.pop %v2616
        %v2618 = vmul.f32 %v2605, 1.442695
        %v2619 = vpow.pop %v2618
        %v2620 = vmul.f32 %v2606, 1.442695
        %v2621 = vpow.pop %v2620
        %v2622 = vmul.f32 %v2607, 1.442695
        %v2623 = vpow.pop %v2622
        %v2624 = vsel %vm1212, %v2609, 0.0
        %2625 = vadd.xlane.f32.xlu0 %v2624
        %v2626 = vpop.xlane.xlu0 %2625
        %v2627 = vsel %vm1212, %v2611, 0.0
        %2628 = vadd.xlane.f32.xlu0 %v2627
        %v2629 = vpop.xlane.xlu0 %2628
        %v2630 = vsel %vm1212, %v2613, 0.0
        %2631 = vadd.xlane.f32.xlu0 %v2630
        %v2632 = vpop.xlane.xlu0 %2631
        %v2633 = vsel %vm1212, %v2615, 0.0
        %2634 = vadd.xlane.f32.xlu0 %v2633
        %v2635 = vpop.xlane.xlu0 %2634
        %v2636 = vsel %vm1212, %v2617, 0.0
        %2637 = vadd.xlane.f32.xlu0 %v2636
        %v2638 = vpop.xlane.xlu0 %2637
        %v2639 = vsel %vm1212, %v2619, 0.0
        %2640 = vadd.xlane.f32.xlu0 %v2639
        %v2641 = vpop.xlane.xlu0 %2640
        %v2642 = vsel %vm1212, %v2621, 0.0
        %2643 = vadd.xlane.f32.xlu0 %v2642
        %v2644 = vpop.xlane.xlu0 %2643
        %v2645 = vsel %vm1212, %v2623, 0.0
        %2646 = vadd.xlane.f32.xlu0 %v2645
        %v2647 = vpop.xlane.xlu0 %2646
        %v2648 = vrcp.pop %v2626
        %v2649 = vrcp.pop %v2629
        %v2650 = vrcp.pop %v2632
        %v2651 = vrcp.pop %v2635
        %v2652 = vrcp.pop %v2638
        %v2653 = vrcp.pop %v2641
        %v2654 = vrcp.pop %v2644
        %v2655 = vrcp.pop %v2647
        %v2656 = vmul.f32 %v2609, %v2648
        %v2657 = vmul.f32 %v2611, %v2649
        %v2658 = vmul.f32 %v2613, %v2650
        %v2659 = vmul.f32 %v2615, %v2651
        %v2660 = vmul.f32 %v2617, %v2652
        %v2661 = vmul.f32 %v2619, %v2653
        %v2662 = vmul.f32 %v2621, %v2654
        %v2663 = vmul.f32 %v2623, %v2655
        %v2664 = vpack.c.bf16 %v2657, %v2656
        %v2665 = vpack.c.bf16 %v2659, %v2658
        %v2666 = vpack.c.bf16 %v2661, %v2660
        %v2667 = vpack.c.bf16 %v2663, %v2662
        %v2669 = vsel %vm1212, %v2664, 0
        %2671 = vmatprep.subr.bf16.mxu0 0
        %2672 = vmatpush1.bf16.msra.mxu0 %v2376
        %2673 = vmatprep.subr.bf16.mxu0 0
        %2674 = vmatpush1.bf16.msra.mxu0 0
        %2675 = vmatprep.subr.bf16.mxu0 0
        %2676 = vmatpush1.bf16.msra.mxu0 0
        %2677 = vmatprep.subr.bf16.mxu0 0
        %2678 = vmatpush1.bf16.msra.mxu0 0
        %2679 = vmatprep.subr.bf16.mxu0 0
        %2680 = vmatpush1.bf16.msra.mxu0 0
        %2681 = vmatprep.subr.bf16.mxu0 0
        %2682 = vmatpush1.bf16.msra.mxu0 0
        %2683 = vmatprep.subr.bf16.mxu0 0
        %2684 = vmatpush1.bf16.msra.mxu0 0
        %2685 = vmatprep.subr.bf16.mxu0 0
        %2686 = vmatpush1.bf16.msra.mxu0 0
        %2687 = vmatprep.subr.bf16.mxu0 0
        %2688 = vmatpush1.bf16.msra.mxu0 0
        %2689 = vmatprep.subr.bf16.mxu0 0
        %2690 = vmatpush1.bf16.msra.mxu0 0
        %2691 = vmatprep.subr.bf16.mxu0 0
        %2692 = vmatpush1.bf16.msra.mxu0 0
        %2693 = vmatprep.subr.bf16.mxu0 0
        %2694 = vmatpush1.bf16.msra.mxu0 0
        %2695 = vmatprep.subr.bf16.mxu0 0
        %2696 = vmatpush1.bf16.msra.mxu0 0
        %2697 = vmatprep.subr.bf16.mxu0 0
        %2698 = vmatpush1.bf16.msra.mxu0 0
        %2699 = vmatprep.subr.bf16.mxu0 0
        %2700 = vmatpush1.bf16.msra.mxu0 0
        %2701 = vmatprep.subr.bf16.mxu0 0
        %2702 = vmatpush1.bf16.msra.mxu0 0
        %2703 = vmatprep.mubr.bf16.mxu0 0
        %2704 = vmatmul.mubr.bf16.gmra.mrb[0].mxu0 %v2669
        %v2705 = vpop.f32.mrb[0].mxu0
        %v2706 = vadd.f32 0.0, %v2705
        %v2707 = vpop.f32.mrb[0].mxu0
        %v2708 = vpop.f32.mrb[0].mxu0
        %v2709 = vadd.f32 0.0, %v2708
        %v2710 = vpop.f32.mrb[0].mxu0
        %2711 = vdwg.mxu0
        %v2713 = vsel %vm1212, %v2665, 0
        %2715 = vmatprep.subr.bf16.mxu0 0
        %2716 = vmatpush1.bf16.msra.mxu0 %v2377
        %2717 = vmatprep.subr.bf16.mxu0 0
        %2718 = vmatpush1.bf16.msra.mxu0 0
        %2719 = vmatprep.subr.bf16.mxu0 0
        %2720 = vmatpush1.bf16.msra.mxu0 0
        %2721 = vmatprep.subr.bf16.mxu0 0
        %2722 = vmatpush1.bf16.msra.mxu0 0
        %2723 = vmatprep.subr.bf16.mxu0 0
        %2724 = vmatpush1.bf16.msra.mxu0 0
        %2725 = vmatprep.subr.bf16.mxu0 0
        %2726 = vmatpush1.bf16.msra.mxu0 0
        %2727 = vmatprep.subr.bf16.mxu0 0
        %2728 = vmatpush1.bf16.msra.mxu0 0
        %2729 = vmatprep.subr.bf16.mxu0 0
        %2730 = vmatpush1.bf16.msra.mxu0 0
        %2731 = vmatprep.subr.bf16.mxu0 0
        %2732 = vmatpush1.bf16.msra.mxu0 0
        %2733 = vmatprep.subr.bf16.mxu0 0
        %2734 = vmatpush1.bf16.msra.mxu0 0
        %2735 = vmatprep.subr.bf16.mxu0 0
        %2736 = vmatpush1.bf16.msra.mxu0 0
        %2737 = vmatprep.subr.bf16.mxu0 0
        %2738 = vmatpush1.bf16.msra.mxu0 0
        %2739 = vmatprep.subr.bf16.mxu0 0
        %2740 = vmatpush1.bf16.msra.mxu0 0
        %2741 = vmatprep.subr.bf16.mxu0 0
        %2742 = vmatpush1.bf16.msra.mxu0 0
        %2743 = vmatprep.subr.bf16.mxu0 0
        %2744 = vmatpush1.bf16.msra.mxu0 0
        %2745 = vmatprep.subr.bf16.mxu0 0
        %2746 = vmatpush1.bf16.msra.mxu0 0
        %2747 = vmatprep.mubr.bf16.mxu0 0
        %2748 = vmatmul.mubr.bf16.gmra.mrb[0].mxu0 %v2713
        %v2749 = vpop.f32.mrb[0].mxu0
        %v2750 = vadd.f32 0.0, %v2749
        %v2751 = vpop.f32.mrb[0].mxu0
        %v2752 = vpop.f32.mrb[0].mxu0
        %v2753 = vadd.f32 0.0, %v2752
        %v2754 = vpop.f32.mrb[0].mxu0
        %2755 = vdwg.mxu0
        %v2757 = vsel %vm1212, %v2666, 0
        %2759 = vmatprep.subr.bf16.mxu0 0
        %2760 = vmatpush1.bf16.msra.mxu0 %v2378
        %2761 = vmatprep.subr.bf16.mxu0 0
        %2762 = vmatpush1.bf16.msra.mxu0 0
        %2763 = vmatprep.subr.bf16.mxu0 0
        %2764 = vmatpush1.bf16.msra.mxu0 0
        %2765 = vmatprep.subr.bf16.mxu0 0
        %2766 = vmatpush1.bf16.msra.mxu0 0
        %2767 = vmatprep.subr.bf16.mxu0 0
        %2768 = vmatpush1.bf16.msra.mxu0 0
        %2769 = vmatprep.subr.bf16.mxu0 0
        %2770 = vmatpush1.bf16.msra.mxu0 0
        %2771 = vmatprep.subr.bf16.mxu0 0
        %2772 = vmatpush1.bf16.msra.mxu0 0
        %2773 = vmatprep.subr.bf16.mxu0 0
        %2774 = vmatpush1.bf16.msra.mxu0 0
        %2775 = vmatprep.subr.bf16.mxu0 0
        %2776 = vmatpush1.bf16.msra.mxu0 0
        %2777 = vmatprep.subr.bf16.mxu0 0
        %2778 = vmatpush1.bf16.msra.mxu0 0
        %2779 = vmatprep.subr.bf16.mxu0 0
        %2780 = vmatpush1.bf16.msra.mxu0 0
        %2781 = vmatprep.subr.bf16.mxu0 0
        %2782 = vmatpush1.bf16.msra.mxu0 0
        %2783 = vmatprep.subr.bf16.mxu0 0
        %2784 = vmatpush1.bf16.msra.mxu0 0
        %2785 = vmatprep.subr.bf16.mxu0 0
        %2786 = vmatpush1.bf16.msra.mxu0 0
        %2787 = vmatprep.subr.bf16.mxu0 0
        %2788 = vmatpush1.bf16.msra.mxu0 0
        %2789 = vmatprep.subr.bf16.mxu0 0
        %2790 = vmatpush1.bf16.msra.mxu0 0
        %2791 = vmatprep.mubr.bf16.mxu0 0
        %2792 = vmatmul.mubr.bf16.gmra.mrb[0].mxu0 %v2757
        %v2793 = vpop.f32.mrb[0].mxu0
        %v2794 = vadd.f32 0.0, %v2793
        %v2795 = vpop.f32.mrb[0].mxu0
        %v2796 = vpop.f32.mrb[0].mxu0
        %v2797 = vadd.f32 0.0, %v2796
        %v2798 = vpop.f32.mrb[0].mxu0
        %2799 = vdwg.mxu0
        %v2801 = vsel %vm1212, %v2667, 0
        %2803 = vmatprep.subr.bf16.mxu0 0
        %2804 = vmatpush1.bf16.msra.mxu0 %v2379
        %2805 = vmatprep.subr.bf16.mxu0 0
        %2806 = vmatpush1.bf16.msra.mxu0 0
        %2807 = vmatprep.subr.bf16.mxu0 0
        %2808 = vmatpush1.bf16.msra.mxu0 0
        %2809 = vmatprep.subr.bf16.mxu0 0
        %2810 = vmatpush1.bf16.msra.mxu0 0
        %2811 = vmatprep.subr.bf16.mxu0 0
        %2812 = vmatpush1.bf16.msra.mxu0 0
        %2813 = vmatprep.subr.bf16.mxu0 0
        %2814 = vmatpush1.bf16.msra.mxu0 0
        %2815 = vmatprep.subr.bf16.mxu0 0
        %2816 = vmatpush1.bf16.msra.mxu0 0
        %2817 = vmatprep.subr.bf16.mxu0 0
        %2818 = vmatpush1.bf16.msra.mxu0 0
        %2819 = vmatprep.subr.bf16.mxu0 0
        %2820 = vmatpush1.bf16.msra.mxu0 0
        %2821 = vmatprep.subr.bf16.mxu0 0
        %2822 = vmatpush1.bf16.msra.mxu0 0
        %2823 = vmatprep.subr.bf16.mxu0 0
        %2824 = vmatpush1.bf16.msra.mxu0 0
        %2825 = vmatprep.subr.bf16.mxu0 0
        %2826 = vmatpush1.bf16.msra.mxu0 0
        %2827 = vmatprep.subr.bf16.mxu0 0
        %2828 = vmatpush1.bf16.msra.mxu0 0
        %2829 = vmatprep.subr.bf16.mxu0 0
        %2830 = vmatpush1.bf16.msra.mxu0 0
        %2831 = vmatprep.subr.bf16.mxu0 0
        %2832 = vmatpush1.bf16.msra.mxu0 0
        %2833 = vmatprep.subr.bf16.mxu0 0
        %2834 = vmatpush1.bf16.msra.mxu0 0
        %2835 = vmatprep.mubr.bf16.mxu0 0
        %2836 = vmatmul.mubr.bf16.gmra.mrb[0].mxu0 %v2801
        %v2837 = vpop.f32.mrb[0].mxu0
        %v2838 = vadd.f32 0.0, %v2837
        %v2839 = vpop.f32.mrb[0].mxu0
        %v2840 = vpop.f32.mrb[0].mxu0
        %v2841 = vadd.f32 0.0, %v2840
        %v2842 = vpop.f32.mrb[0].mxu0
        %2843 = vdwg.mxu0
        %2846 = vrot.lane.b32.xlu0 %v2750, 32
        %v2847 = vpop.permute.xlu0 %2846
        %2848 = vrot.lane.b32.xlu0 %v2753, 32
        %v2849 = vpop.permute.xlu0 %2848
        %2854 = vrot.lane.b32.xlu0 %v2794, 64
        %v2855 = vpop.permute.xlu0 %2854
        %2856 = vrot.lane.b32.xlu0 %v2797, 64
        %v2857 = vpop.permute.xlu0 %2856
        %2862 = vrot.lane.b32.xlu0 %v2838, 96
        %v2863 = vpop.permute.xlu0 %2862
        %2864 = vrot.lane.b32.xlu0 %v2841, 96
        %v2865 = vpop.permute.xlu0 %2864
        %v2868 = vsel %vm1015, %v2706, %v2847
        %v2869 = vsel %vm1015, %v2709, %v2849
        %v2870 = vsel %vm1507, %v2868, %v2855
        %v2871 = vsel %vm1507, %v2869, %v2857
        %v2872 = vsel %vm1510, %v2870, %v2863
        %v2873 = vsel %vm1510, %v2871, %v2865
        %v2874 = vpack.c.bf16 %v2873, %v2872
        %s2875 = scalar_lea.vmem [#allocation2], 64
        %v2876 = vld [vmem:[%s2875] sm:$0xf]
        %v2877 = vld [vmem:[%s2875 + $0x4] sm:$0xf]
        %v2878 = vld [vmem:[%s2875 + $0x8] sm:$0xf]
        %v2879 = vld [vmem:[%s2875 + $0xc] sm:$0xf]
        %v2880 = vld [vmem:[%s2875 + $0x10] sm:$0xf]
        %v2881 = vld [vmem:[%s2875 + $0x14] sm:$0xf]
        %v2882 = vld [vmem:[%s2875 + $0x18] sm:$0xf]
        %v2883 = vld [vmem:[%s2875 + $0x1c] sm:$0xf]
        %v2884 = vld [vmem:[%s2875 + $0x20] sm:$0xf]
        %v2885 = vld [vmem:[%s2875 + $0x24] sm:$0xf]
        %v2886 = vld [vmem:[%s2875 + $0x28] sm:$0xf]
        %v2887 = vld [vmem:[%s2875 + $0x2c] sm:$0xf]
        %v2888 = vld [vmem:[%s2875 + $0x30] sm:$0xf]
        %v2889 = vld [vmem:[%s2875 + $0x34] sm:$0xf]
        %v2890 = vld [vmem:[%s2875 + $0x38] sm:$0xf]
        %v2891 = vld [vmem:[%s2875 + $0x3c] sm:$0xf]
        %s2892 = scalar_lea.vmem %s7, 1
        %v2893 = vld [vmem:[%s2892] sm:$0x1]
        %v2895 = vlaneseq
        %v2896 = vshrl.u32 %v2895, 7
        %v2897 = vsub.s32 0, %v2896
        %v2898 = vrot.slane %v2893, %v2897
        %v2916 = vunpack.c.l.b16 %v2876
        %v2917 = vunpack.c.l.b16 %v2877
        %v2918 = vunpack.c.l.b16 %v2878
        %v2919 = vunpack.c.l.b16 %v2879
        %v2920 = vunpack.c.l.b16 %v2880
        %v2921 = vunpack.c.l.b16 %v2881
        %v2922 = vunpack.c.l.b16 %v2882
        %v2923 = vunpack.c.l.b16 %v2883
        %v2924 = vunpack.c.l.b16 %v2884
        %v2925 = vunpack.c.l.b16 %v2885
        %v2926 = vunpack.c.l.b16 %v2886
        %v2927 = vunpack.c.l.b16 %v2887
        %v2928 = vunpack.c.l.b16 %v2888
        %v2929 = vunpack.c.l.b16 %v2889
        %v2930 = vunpack.c.l.b16 %v2890
        %v2931 = vunpack.c.l.b16 %v2891
        %v2932 = vpack.c.b16 %v2917, %v2916
        %v2933 = vpack.c.b16 %v2919, %v2918
        %v2934 = vpack.c.b16 %v2921, %v2920
        %v2935 = vpack.c.b16 %v2923, %v2922
        %v2936 = vpack.c.b16 %v2925, %v2924
        %v2937 = vpack.c.b16 %v2927, %v2926
        %v2938 = vpack.c.b16 %v2929, %v2928
        %v2939 = vpack.c.b16 %v2931, %v2930
        %2948 = vmatprep.subr.bf16.mxu0 0
        %2949 = vmatpush1.bf16.msra.mxu0 %v2932
        %2950 = vmatprep.subr.bf16.mxu0 0
        %2951 = vmatpush1.bf16.msra.mxu0 %v2933
        %2952 = vmatprep.subr.bf16.mxu0 0
        %2953 = vmatpush1.bf16.msra.mxu0 %v2934
        %2954 = vmatprep.subr.bf16.mxu0 0
        %2955 = vmatpush1.bf16.msra.mxu0 %v2935
        %2956 = vmatprep.subr.bf16.mxu0 0
        %2957 = vmatpush1.bf16.msra.mxu0 %v2936
        %2958 = vmatprep.subr.bf16.mxu0 0
        %2959 = vmatpush1.bf16.msra.mxu0 %v2937
        %2960 = vmatprep.subr.bf16.mxu0 0
        %2961 = vmatpush1.bf16.msra.mxu0 %v2938
        %2962 = vmatprep.subr.bf16.mxu0 0
        %2963 = vmatpush1.bf16.msra.mxu0 %v2939
        %2964 = vmatprep.subr.bf16.mxu0 0
        %2965 = vmatpush1.bf16.msra.mxu0 0
        %2966 = vmatprep.subr.bf16.mxu0 0
        %2967 = vmatpush1.bf16.msra.mxu0 0
        %2968 = vmatprep.subr.bf16.mxu0 0
        %2969 = vmatpush1.bf16.msra.mxu0 0
        %2970 = vmatprep.subr.bf16.mxu0 0
        %2971 = vmatpush1.bf16.msra.mxu0 0
        %2972 = vmatprep.subr.bf16.mxu0 0
        %2973 = vmatpush1.bf16.msra.mxu0 0
        %2974 = vmatprep.subr.bf16.mxu0 0
        %2975 = vmatpush1.bf16.msra.mxu0 0
        %2976 = vmatprep.subr.bf16.mxu0 0
        %2977 = vmatpush1.bf16.msra.mxu0 0
        %2978 = vmatprep.subr.bf16.mxu0 0
        %2979 = vmatpush1.bf16.msra.mxu0 0
        %2980 = vmatprep.mubr.bf16.mxu0 0
        %2981 = vmatmul.mubr.bf16.gmra.mrb[0].mxu0 %v2874
        %v2982 = vpop.f32.mrb[0].mxu0
        %v2983 = vadd.f32 %v2898, %v2982
        %v2984 = vpop.f32.mrb[0].mxu0
        %v2985 = vpop.f32.mrb[0].mxu0
        %v2986 = vadd.f32 %v2898, %v2985
        %v2987 = vpop.f32.mrb[0].mxu0
        %2988 = vdwg.mxu0
        %v2989 = vadd.f32 %v2042, %v2983
        %v2990 = vadd.f32 %v2043, %v2986
        %s2991 = scalar_lea.vmem %s8, 1
        %v2992 = vld [vmem:[%s2991] sm:$0x1]
        %s2993 = scalar_lea.vmem %s9, 1
        %v2994 = vld [vmem:[%s2993] sm:$0x1]
        %2995 = vadd.xlane.f32.xlu0 %v2989
        %v2996 = vpop.xlane.xlu0 %2995
        %2997 = vadd.xlane.f32.xlu0 %v2990
        %v2998 = vpop.xlane.xlu0 %2997
        %v2999 = vmul.f32 %v2996, %v646
        %v3000 = vmul.f32 %v2998, %v646
        %v3001 = vsub.f32 %v2989, %v2999
        %v3002 = vsub.f32 %v2990, %v3000
        %v3003 = vmul.f32 %v3001, %v3001
        %v3004 = vmul.f32 %v3002, %v3002
        %3005 = vadd.xlane.f32.xlu0 %v3003
        %v3006 = vpop.xlane.xlu0 %3005
        %3007 = vadd.xlane.f32.xlu0 %v3004
        %v3008 = vpop.xlane.xlu0 %3007
        %v3009 = vmul.f32 %v3006, %v646
        %v3010 = vmul.f32 %v3008, %v646
        %v3011 = vadd.f32 %v3009, 1e-05
        %v3012 = vadd.f32 %v3010, 1e-05
        %v3013 = vrsqrt.pop %v3011
        %v3014 = vrsqrt.pop %v3012
        %v3015 = vmul.f32 %v3001, %v3013
        %v3016 = vmul.f32 %v3002, %v3014
        %v3018 = vlaneseq
        %v3019 = vshrl.u32 %v3018, 7
        %v3020 = vsub.s32 0, %v3019
        %v3021 = vrot.slane %v2992, %v3020
        %v3023 = vmul.f32 %v3015, %v3021
        %v3024 = vmul.f32 %v3016, %v3021
        %v3026 = vlaneseq
        %v3027 = vshrl.u32 %v3026, 7
        %v3028 = vsub.s32 0, %v3027
        %v3029 = vrot.slane %v2994, %v3028
        %v3031 = vadd.f32 %v3023, %v3029
        %v3032 = vadd.f32 %v3024, %v3029
        %v3033 = vpack.c.bf16 %v3032, %v3031
        %s3034 = scalar_lea.vmem [#allocation5], 128
        %v3035 = vld [vmem:[%s3034] sm:$0xff]
        %v3036 = vld [vmem:[%s3034 + $0x8] sm:$0xff]
        %v3037 = vld [vmem:[%s3034 + $0x10] sm:$0xff]
        %v3038 = vld [vmem:[%s3034 + $0x18] sm:$0xff]
        %v3039 = vld [vmem:[%s3034 + $0x20] sm:$0xff]
        %v3040 = vld [vmem:[%s3034 + $0x28] sm:$0xff]
        %v3041 = vld [vmem:[%s3034 + $0x30] sm:$0xff]
        %v3042 = vld [vmem:[%s3034 + $0x38] sm:$0xff]
        %v3043 = vld [vmem:[%s3034 + $0x40] sm:$0xff]
        %v3044 = vld [vmem:[%s3034 + $0x48] sm:$0xff]
        %v3045 = vld [vmem:[%s3034 + $0x50] sm:$0xff]
        %v3046 = vld [vmem:[%s3034 + $0x58] sm:$0xff]
        %v3047 = vld [vmem:[%s3034 + $0x60] sm:$0xff]
        %v3048 = vld [vmem:[%s3034 + $0x68] sm:$0xff]
        %v3049 = vld [vmem:[%s3034 + $0x70] sm:$0xff]
        %v3050 = vld [vmem:[%s3034 + $0x78] sm:$0xff]
        %s3051 = scalar_lea.vmem %s11, 2
        %v3052 = vld [vmem:[%s3051] sm:$0x3]
        %v3054 = vlaneseq
        %v3055 = vshrl.u32 %v3054, 7
        %v3056 = vsub.s32 0, %v3055
        %v3057 = vrot.slane %v3052, %v3056
        %v3058 = vlaneseq
        %v3059 = vshrl.u32 %v3058, 7
        %v3060 = vsub.s32 1, %v3059
        %v3061 = vrot.slane %v3052, %v3060
        %v3080 = vunpack.c.l.b16 %v3035
        %v3081 = vunpack.c.h.b16 %v3035
        %v3082 = vunpack.c.l.b16 %v3036
        %v3083 = vunpack.c.h.b16 %v3036
        %v3084 = vunpack.c.l.b16 %v3037
        %v3085 = vunpack.c.h.b16 %v3037
        %v3086 = vunpack.c.l.b16 %v3038
        %v3087 = vunpack.c.h.b16 %v3038
        %v3088 = vunpack.c.l.b16 %v3039
        %v3089 = vunpack.c.h.b16 %v3039
        %v3090 = vunpack.c.l.b16 %v3040
        %v3091 = vunpack.c.h.b16 %v3040
        %v3092 = vunpack.c.l.b16 %v3041
        %v3093 = vunpack.c.h.b16 %v3041
        %v3094 = vunpack.c.l.b16 %v3042
        %v3095 = vunpack.c.h.b16 %v3042
        %v3096 = vunpack.c.l.b16 %v3043
        %v3097 = vunpack.c.h.b16 %v3043
        %v3098 = vunpack.c.l.b16 %v3044
        %v3099 = vunpack.c.h.b16 %v3044
        %v3100 = vunpack.c.l.b16 %v3045
        %v3101 = vunpack.c.h.b16 %v3045
        %v3102 = vunpack.c.l.b16 %v3046
        %v3103 = vunpack.c.h.b16 %v3046
        %v3104 = vunpack.c.l.b16 %v3047
        %v3105 = vunpack.c.h.b16 %v3047
        %v3106 = vunpack.c.l.b16 %v3048
        %v3107 = vunpack.c.h.b16 %v3048
        %v3108 = vunpack.c.l.b16 %v3049
        %v3109 = vunpack.c.h.b16 %v3049
        %v3110 = vunpack.c.l.b16 %v3050
        %v3111 = vunpack.c.h.b16 %v3050
        %v3112 = vpack.c.b16 %v3082, %v3080
        %v3113 = vpack.c.b16 %v3083, %v3081
        %v3114 = vpack.c.b16 %v3086, %v3084
        %v3115 = vpack.c.b16 %v3087, %v3085
        %v3116 = vpack.c.b16 %v3090, %v3088
        %v3117 = vpack.c.b16 %v3091, %v3089
        %v3118 = vpack.c.b16 %v3094, %v3092
        %v3119 = vpack.c.b16 %v3095, %v3093
        %v3120 = vpack.c.b16 %v3098, %v3096
        %v3121 = vpack.c.b16 %v3099, %v3097
        %v3122 = vpack.c.b16 %v3102, %v3100
        %v3123 = vpack.c.b16 %v3103, %v3101
        %v3124 = vpack.c.b16 %v3106, %v3104
        %v3125 = vpack.c.b16 %v3107, %v3105
        %v3126 = vpack.c.b16 %v3110, %v3108
        %v3127 = vpack.c.b16 %v3111, %v3109
        %3144 = vmatprep.subr.bf16.mxu0 %v3113
        %3145 = vmatpush1.bf16.msra.mxu0 %v3112
        %3146 = vmatprep.subr.bf16.mxu0 %v3115
        %3147 = vmatpush1.bf16.msra.mxu0 %v3114
        %3148 = vmatprep.subr.bf16.mxu0 %v3117
        %3149 = vmatpush1.bf16.msra.mxu0 %v3116
        %3150 = vmatprep.subr.bf16.mxu0 %v3119
        %3151 = vmatpush1.bf16.msra.mxu0 %v3118
        %3152 = vmatprep.subr.bf16.mxu0 %v3121
        %3153 = vmatpush1.bf16.msra.mxu0 %v3120
        %3154 = vmatprep.subr.bf16.mxu0 %v3123
        %3155 = vmatpush1.bf16.msra.mxu0 %v3122
        %3156 = vmatprep.subr.bf16.mxu0 %v3125
        %3157 = vmatpush1.bf16.msra.mxu0 %v3124
        %3158 = vmatprep.subr.bf16.mxu0 %v3127
        %3159 = vmatpush1.bf16.msra.mxu0 %v3126
        %3160 = vmatprep.subr.bf16.mxu0 0
        %3161 = vmatpush1.bf16.msra.mxu0 0
        %3162 = vmatprep.subr.bf16.mxu0 0
        %3163 = vmatpush1.bf16.msra.mxu0 0
        %3164 = vmatprep.subr.bf16.mxu0 0
        %3165 = vmatpush1.bf16.msra.mxu0 0
        %3166 = vmatprep.subr.bf16.mxu0 0
        %3167 = vmatpush1.bf16.msra.mxu0 0
        %3168 = vmatprep.subr.bf16.mxu0 0
        %3169 = vmatpush1.bf16.msra.mxu0 0
        %3170 = vmatprep.subr.bf16.mxu0 0
        %3171 = vmatpush1.bf16.msra.mxu0 0
        %3172 = vmatprep.subr.bf16.mxu0 0
        %3173 = vmatpush1.bf16.msra.mxu0 0
        %3174 = vmatprep.subr.bf16.mxu0 0
        %3175 = vmatpush1.bf16.msra.mxu0 0
        %3176 = vmatprep.mubr.bf16.mxu0 0
        %3177 = vmatmul.mubr.bf16.gmra.mrb[0].mxu0 %v3033
        %v3178 = vpop.f32.mrb[0].mxu0
        %v3179 = vadd.f32 %v3057, %v3178
        %v3180 = vpop.f32.mrb[0].mxu0
        %v3181 = vadd.f32 %v3061, %v3180
        %v3182 = vpop.f32.mrb[0].mxu0
        %v3183 = vadd.f32 %v3057, %v3182
        %v3184 = vpop.f32.mrb[0].mxu0
        %v3185 = vadd.f32 %v3061, %v3184
        %3186 = vdwg.mxu0
        %v3187 = vmax.f32 %v3179, 0.0
        %v3188 = vmax.f32 %v3181, 0.0
        %v3189 = vmax.f32 %v3183, 0.0
        %v3190 = vmax.f32 %v3185, 0.0
        %v3191 = vpack.c.bf16 %v3189, %v3187
        %v3192 = vpack.c.bf16 %v3190, %v3188
        %s3193 = scalar_lea.vmem [#allocation7], 128
        %v3194 = vld [vmem:[%s3193] sm:$0xf]
        %v3195 = vld [vmem:[%s3193 + $0x4] sm:$0xf]
        %v3196 = vld [vmem:[%s3193 + $0x8] sm:$0xf]
        %v3197 = vld [vmem:[%s3193 + $0xc] sm:$0xf]
        %v3198 = vld [vmem:[%s3193 + $0x10] sm:$0xf]
        %v3199 = vld [vmem:[%s3193 + $0x14] sm:$0xf]
        %v3200 = vld [vmem:[%s3193 + $0x18] sm:$0xf]
        %v3201 = vld [vmem:[%s3193 + $0x1c] sm:$0xf]
        %v3202 = vld [vmem:[%s3193 + $0x20] sm:$0xf]
        %v3203 = vld [vmem:[%s3193 + $0x24] sm:$0xf]
        %v3204 = vld [vmem:[%s3193 + $0x28] sm:$0xf]
        %v3205 = vld [vmem:[%s3193 + $0x2c] sm:$0xf]
        %v3206 = vld [vmem:[%s3193 + $0x30] sm:$0xf]
        %v3207 = vld [vmem:[%s3193 + $0x34] sm:$0xf]
        %v3208 = vld [vmem:[%s3193 + $0x38] sm:$0xf]
        %v3209 = vld [vmem:[%s3193 + $0x3c] sm:$0xf]
        %v3210 = vld [vmem:[%s3193 + $0x40] sm:$0xf]
        %v3211 = vld [vmem:[%s3193 + $0x44] sm:$0xf]
        %v3212 = vld [vmem:[%s3193 + $0x48] sm:$0xf]
        %v3213 = vld [vmem:[%s3193 + $0x4c] sm:$0xf]
        %v3214 = vld [vmem:[%s3193 + $0x50] sm:$0xf]
        %v3215 = vld [vmem:[%s3193 + $0x54] sm:$0xf]
        %v3216 = vld [vmem:[%s3193 + $0x58] sm:$0xf]
        %v3217 = vld [vmem:[%s3193 + $0x5c] sm:$0xf]
        %v3218 = vld [vmem:[%s3193 + $0x60] sm:$0xf]
        %v3219 = vld [vmem:[%s3193 + $0x64] sm:$0xf]
        %v3220 = vld [vmem:[%s3193 + $0x68] sm:$0xf]
        %v3221 = vld [vmem:[%s3193 + $0x6c] sm:$0xf]
        %v3222 = vld [vmem:[%s3193 + $0x70] sm:$0xf]
        %v3223 = vld [vmem:[%s3193 + $0x74] sm:$0xf]
        %v3224 = vld [vmem:[%s3193 + $0x78] sm:$0xf]
        %v3225 = vld [vmem:[%s3193 + $0x7c] sm:$0xf]
        %s3226 = scalar_lea.vmem %s13, 1
        %v3227 = vld [vmem:[%s3226] sm:$0x1]
        %v3229 = vlaneseq
        %v3230 = vshrl.u32 %v3229, 7
        %v3231 = vsub.s32 0, %v3230
        %v3232 = vrot.slane %v3227, %v3231
        %v3266 = vunpack.c.l.b16 %v3194
        %v3267 = vunpack.c.l.b16 %v3195
        %v3268 = vunpack.c.l.b16 %v3196
        %v3269 = vunpack.c.l.b16 %v3197
        %v3270 = vunpack.c.l.b16 %v3198
        %v3271 = vunpack.c.l.b16 %v3199
        %v3272 = vunpack.c.l.b16 %v3200
        %v3273 = vunpack.c.l.b16 %v3201
        %v3274 = vunpack.c.l.b16 %v3202
        %v3275 = vunpack.c.l.b16 %v3203
        %v3276 = vunpack.c.l.b16 %v3204
        %v3277 = vunpack.c.l.b16 %v3205
        %v3278 = vunpack.c.l.b16 %v3206
        %v3279 = vunpack.c.l.b16 %v3207
        %v3280 = vunpack.c.l.b16 %v3208
        %v3281 = vunpack.c.l.b16 %v3209
        %v3282 = vunpack.c.l.b16 %v3210
        %v3283 = vunpack.c.l.b16 %v3211
        %v3284 = vunpack.c.l.b16 %v3212
        %v3285 = vunpack.c.l.b16 %v3213
        %v3286 = vunpack.c.l.b16 %v3214
        %v3287 = vunpack.c.l.b16 %v3215
        %v3288 = vunpack.c.l.b16 %v3216
        %v3289 = vunpack.c.l.b16 %v3217
        %v3290 = vunpack.c.l.b16 %v3218
        %v3291 = vunpack.c.l.b16 %v3219
        %v3292 = vunpack.c.l.b16 %v3220
        %v3293 = vunpack.c.l.b16 %v3221
        %v3294 = vunpack.c.l.b16 %v3222
        %v3295 = vunpack.c.l.b16 %v3223
        %v3296 = vunpack.c.l.b16 %v3224
        %v3297 = vunpack.c.l.b16 %v3225
        %v3298 = vpack.c.b16 %v3267, %v3266
        %v3299 = vpack.c.b16 %v3269, %v3268
        %v3300 = vpack.c.b16 %v3271, %v3270
        %v3301 = vpack.c.b16 %v3273, %v3272
        %v3302 = vpack.c.b16 %v3275, %v3274
        %v3303 = vpack.c.b16 %v3277, %v3276
        %v3304 = vpack.c.b16 %v3279, %v3278
        %v3305 = vpack.c.b16 %v3281, %v3280
        %v3306 = vpack.c.b16 %v3283, %v3282
        %v3307 = vpack.c.b16 %v3285, %v3284
        %v3308 = vpack.c.b16 %v3287, %v3286
        %v3309 = vpack.c.b16 %v3289, %v3288
        %v3310 = vpack.c.b16 %v3291, %v3290
        %v3311 = vpack.c.b16 %v3293, %v3292
        %v3312 = vpack.c.b16 %v3295, %v3294
        %v3313 = vpack.c.b16 %v3297, %v3296
        %3330 = vmatprep.subr.bf16.mxu0 0
        %3331 = vmatpush1.bf16.msra.mxu0 %v3298
        %3332 = vmatprep.subr.bf16.mxu0 0
        %3333 = vmatpush1.bf16.msra.mxu0 %v3299
        %3334 = vmatprep.subr.bf16.mxu0 0
        %3335 = vmatpush1.bf16.msra.mxu0 %v3300
        %3336 = vmatprep.subr.bf16.mxu0 0
        %3337 = vmatpush1.bf16.msra.mxu0 %v3301
        %3338 = vmatprep.subr.bf16.mxu0 0
        %3339 = vmatpush1.bf16.msra.mxu0 %v3302
        %3340 = vmatprep.subr.bf16.mxu0 0
        %3341 = vmatpush1.bf16.msra.mxu0 %v3303
        %3342 = vmatprep.subr.bf16.mxu0 0
        %3343 = vmatpush1.bf16.msra.mxu0 %v3304
        %3344 = vmatprep.subr.bf16.mxu0 0
        %3345 = vmatpush1.bf16.msra.mxu0 %v3305
        %3346 = vmatprep.subr.bf16.mxu0 0
        %3347 = vmatpush1.bf16.msra.mxu0 %v3306
        %3348 = vmatprep.subr.bf16.mxu0 0
        %3349 = vmatpush1.bf16.msra.mxu0 %v3307
        %3350 = vmatprep.subr.bf16.mxu0 0
        %3351 = vmatpush1.bf16.msra.mxu0 %v3308
        %3352 = vmatprep.subr.bf16.mxu0 0
        %3353 = vmatpush1.bf16.msra.mxu0 %v3309
        %3354 = vmatprep.subr.bf16.mxu0 0
        %3355 = vmatpush1.bf16.msra.mxu0 %v3310
        %3356 = vmatprep.subr.bf16.mxu0 0
        %3357 = vmatpush1.bf16.msra.mxu0 %v3311
        %3358 = vmatprep.subr.bf16.mxu0 0
        %3359 = vmatpush1.bf16.msra.mxu0 %v3312
        %3360 = vmatprep.subr.bf16.mxu0 0
        %3361 = vmatpush1.bf16.msra.mxu0 %v3313
        %3362 = vmatprep.mubr.bf16.mxu0 %v3192
        %3363 = vmatmul.mubr.bf16.gmra.mrb[0].mxu0 %v3191
        %v3364 = vpop.f32.mrb[0].mxu0
        %v3365 = vadd.f32 %v3232, %v3364
        %v3366 = vpop.f32.mrb[0].mxu0
        %v3367 = vpop.f32.mrb[0].mxu0
        %v3368 = vadd.f32 %v3232, %v3367
        %v3369 = vpop.f32.mrb[0].mxu0
        %3370 = vdwg.mxu0
        %v3371 = vadd.f32 %v3031, %v3365
        %v3372 = vadd.f32 %v3032, %v3368
        %s3373 = scalar_lea.vmem %s14, 1
        %v3374 = vld [vmem:[%s3373] sm:$0x1]
        %s3375 = scalar_lea.vmem %s15, 1
        %v3376 = vld [vmem:[%s3375] sm:$0x1]
        %3377 = vadd.xlane.f32.xlu0 %v3371
        %v3378 = vpop.xlane.xlu0 %3377
        %3379 = vadd.xlane.f32.xlu0 %v3372
        %v3380 = vpop.xlane.xlu0 %3379
        %v3381 = vmul.f32 %v3378, %v646
        %v3382 = vmul.f32 %v3380, %v646
        %v3383 = vsub.f32 %v3371, %v3381
        %v3384 = vsub.f32 %v3372, %v3382
        %v3385 = vmul.f32 %v3383, %v3383
        %v3386 = vmul.f32 %v3384, %v3384
        %3387 = vadd.xlane.f32.xlu0 %v3385
        %v3388 = vpop.xlane.xlu0 %3387
        %3389 = vadd.xlane.f32.xlu0 %v3386
        %v3390 = vpop.xlane.xlu0 %3389
        %v3391 = vmul.f32 %v3388, %v646
        %v3392 = vmul.f32 %v3390, %v646
        %v3393 = vadd.f32 %v3391, 1e-05
        %v3394 = vadd.f32 %v3392, 1e-05
        %v3395 = vrsqrt.pop %v3393
        %v3396 = vrsqrt.pop %v3394
        %v3397 = vmul.f32 %v3383, %v3395
        %v3398 = vmul.f32 %v3384, %v3396
        %v3400 = vlaneseq
        %v3401 = vshrl.u32 %v3400, 7
        %v3402 = vsub.s32 0, %v3401
        %v3403 = vrot.slane %v3374, %v3402
        %v3405 = vmul.f32 %v3397, %v3403
        %v3406 = vmul.f32 %v3398, %v3403
        %v3408 = vlaneseq
        %v3409 = vshrl.u32 %v3408, 7
        %v3410 = vsub.s32 0, %v3409
        %v3411 = vrot.slane %v3376, %v3410
        %v3413 = vadd.f32 %v3405, %v3411
        %v3414 = vadd.f32 %v3406, %v3411
        %v3415 = vpack.c.bf16 %v3414, %v3413
        %v3416 = vld [vmem:[#allocation8] sm:$0xff]
        %v3417 = vld [vmem:[#allocation8 + $0x8] sm:$0xff]
        %v3418 = vld [vmem:[#allocation8 + $0x10] sm:$0xff]
        %v3419 = vld [vmem:[#allocation8 + $0x18] sm:$0xff]
        %v3420 = vld [vmem:[#allocation8 + $0x20] sm:$0xff]
        %v3421 = vld [vmem:[#allocation8 + $0x28] sm:$0xff]
        %v3422 = vld [vmem:[#allocation8 + $0x30] sm:$0xff]
        %v3423 = vld [vmem:[#allocation8 + $0x38] sm:$0xff]
        %v3424 = vld [vmem:[#allocation8 + $0x40] sm:$0xff]
        %v3425 = vld [vmem:[#allocation8 + $0x48] sm:$0xff]
        %v3426 = vld [vmem:[#allocation8 + $0x50] sm:$0xff]
        %v3427 = vld [vmem:[#allocation8 + $0x58] sm:$0xff]
        %v3428 = vld [vmem:[#allocation8 + $0x60] sm:$0xff]
        %v3429 = vld [vmem:[#allocation8 + $0x68] sm:$0xff]
        %v3430 = vld [vmem:[#allocation8 + $0x70] sm:$0xff]
        %v3431 = vld [vmem:[#allocation8 + $0x78] sm:$0xff]
        %v3432 = vld [vmem:[%s17] sm:$0x3]
        %v3434 = vlaneseq
        %v3435 = vshrl.u32 %v3434, 7
        %v3436 = vsub.s32 0, %v3435
        %v3437 = vrot.slane %v3432, %v3436
        %v3438 = vlaneseq
        %v3439 = vshrl.u32 %v3438, 7
        %v3440 = vsub.s32 1, %v3439
        %v3441 = vrot.slane %v3432, %v3440
        %v3460 = vunpack.c.l.b16 %v3416
        %v3461 = vunpack.c.h.b16 %v3416
        %v3462 = vunpack.c.l.b16 %v3417
        %v3463 = vunpack.c.h.b16 %v3417
        %v3464 = vunpack.c.l.b16 %v3418
        %v3465 = vunpack.c.h.b16 %v3418
        %v3466 = vunpack.c.l.b16 %v3419
        %v3467 = vunpack.c.h.b16 %v3419
        %v3468 = vunpack.c.l.b16 %v3420
        %v3469 = vunpack.c.h.b16 %v3420
        %v3470 = vunpack.c.l.b16 %v3421
        %v3471 = vunpack.c.h.b16 %v3421
        %v3472 = vunpack.c.l.b16 %v3422
        %v3473 = vunpack.c.h.b16 %v3422
        %v3474 = vunpack.c.l.b16 %v3423
        %v3475 = vunpack.c.h.b16 %v3423
        %v3476 = vunpack.c.l.b16 %v3424
        %v3477 = vunpack.c.h.b16 %v3424
        %v3478 = vunpack.c.l.b16 %v3425
        %v3479 = vunpack.c.h.b16 %v3425
        %v3480 = vunpack.c.l.b16 %v3426
        %v3481 = vunpack.c.h.b16 %v3426
        %v3482 = vunpack.c.l.b16 %v3427
        %v3483 = vunpack.c.h.b16 %v3427
        %v3484 = vunpack.c.l.b16 %v3428
        %v3485 = vunpack.c.h.b16 %v3428
        %v3486 = vunpack.c.l.b16 %v3429
        %v3487 = vunpack.c.h.b16 %v3429
        %v3488 = vunpack.c.l.b16 %v3430
        %v3489 = vunpack.c.h.b16 %v3430
        %v3490 = vunpack.c.l.b16 %v3431
        %v3491 = vunpack.c.h.b16 %v3431
        %v3492 = vpack.c.b16 %v3462, %v3460
        %v3493 = vpack.c.b16 %v3463, %v3461
        %v3494 = vpack.c.b16 %v3466, %v3464
        %v3495 = vpack.c.b16 %v3467, %v3465
        %v3496 = vpack.c.b16 %v3470, %v3468
        %v3497 = vpack.c.b16 %v3471, %v3469
        %v3498 = vpack.c.b16 %v3474, %v3472
        %v3499 = vpack.c.b16 %v3475, %v3473
        %v3500 = vpack.c.b16 %v3478, %v3476
        %v3501 = vpack.c.b16 %v3479, %v3477
        %v3502 = vpack.c.b16 %v3482, %v3480
        %v3503 = vpack.c.b16 %v3483, %v3481
        %v3504 = vpack.c.b16 %v3486, %v3484
        %v3505 = vpack.c.b16 %v3487, %v3485
        %v3506 = vpack.c.b16 %v3490, %v3488
        %v3507 = vpack.c.b16 %v3491, %v3489
        %3524 = vmatprep.subr.bf16.mxu0 %v3493
        %3525 = vmatpush1.bf16.msra.mxu0 %v3492
        %3526 = vmatprep.subr.bf16.mxu0 %v3495
        %3527 = vmatpush1.bf16.msra.mxu0 %v3494
        %3528 = vmatprep.subr.bf16.mxu0 %v3497
        %3529 = vmatpush1.bf16.msra.mxu0 %v3496
        %3530 = vmatprep.subr.bf16.mxu0 %v3499
        %3531 = vmatpush1.bf16.msra.mxu0 %v3498
        %3532 = vmatprep.subr.bf16.mxu0 %v3501
        %3533 = vmatpush1.bf16.msra.mxu0 %v3500
        %3534 = vmatprep.subr.bf16.mxu0 %v3503
        %3535 = vmatpush1.bf16.msra.mxu0 %v3502
        %3536 = vmatprep.subr.bf16.mxu0 %v3505
        %3537 = vmatpush1.bf16.msra.mxu0 %v3504
        %3538 = vmatprep.subr.bf16.mxu0 %v3507
        %3539 = vmatpush1.bf16.msra.mxu0 %v3506
        %3540 = vmatprep.subr.bf16.mxu0 0
        %3541 = vmatpush1.bf16.msra.mxu0 0
        %3542 = vmatprep.subr.bf16.mxu0 0
        %3543 = vmatpush1.bf16.msra.mxu0 0
        %3544 = vmatprep.subr.bf16.mxu0 0
        %3545 = vmatpush1.bf16.msra.mxu0 0
        %3546 = vmatprep.subr.bf16.mxu0 0
        %3547 = vmatpush1.bf16.msra.mxu0 0
        %3548 = vmatprep.subr.bf16.mxu0 0
        %3549 = vmatpush1.bf16.msra.mxu0 0
        %3550 = vmatprep.subr.bf16.mxu0 0
        %3551 = vmatpush1.bf16.msra.mxu0 0
        %3552 = vmatprep.subr.bf16.mxu0 0
        %3553 = vmatpush1.bf16.msra.mxu0 0
        %3554 = vmatprep.subr.bf16.mxu0 0
        %3555 = vmatpush1.bf16.msra.mxu0 0
        %3556 = vmatprep.mubr.bf16.mxu0 0
        %3557 = vmatmul.mubr.bf16.gmra.mrb[0].mxu0 %v3415
        %v3558 = vpop.f32.mrb[0].mxu0
        %v3559 = vadd.f32 %v3437, %v3558
        %v3560 = vpop.f32.mrb[0].mxu0
        %v3561 = vadd.f32 %v3441, %v3560
        %v3562 = vpop.f32.mrb[0].mxu0
        %v3563 = vadd.f32 %v3437, %v3562
        %v3564 = vpop.f32.mrb[0].mxu0
        %v3565 = vadd.f32 %v3441, %v3564
        %3566 = vdwg.mxu0
        %3567 = vst [vmem:[%s627] sm:$0xff] %v3559
        %3568 = vst [vmem:[%s627 + $0x8] sm:$0xff] %v3561
        %3569 = vst [vmem:[%s627 + $0x10] sm:$0xff] %v3563
        %3570 = vst [vmem:[%s627 + $0x18] sm:$0xff] %v3565
        %s3571 = sand.u32 %s426, 1
        %s3572 = scalar_lea.sflag [#allocation4], %s3571
        %s3573 = sand.u32 %s426, 1
        %s3574 = smul.addr %s3573, 32
        %s3575 = scalar_lea.vmem [#allocation10], %s3574
        // Predicated region
        $region109: #{minigpt_forward.1} parent=91 // pred_check
          %p3576 = pneg %p436
        $region110: #{minigpt_forward.1} parent=91 // pred_check_branch
          %3578 = sbr.rel (%p3576) target = $region112
        $region111: #{minigpt_forward.1} parent=91 // pred_region
          %s3580 = ssub.s32 512, 512
          %3581 = vsyncadd %s3572, %s3580
          %s3582 = smul.addr %s35, 4
          %s3583 = smul.addr %s3582, 128
          %s3584 = scalar_lea.hbm %s18, %s3583
          %s3585 = sshll.u32 %s3575, 4
          %s3586 = int_to_ptr.vmem [resolvable:$true] %s3585
          %3591 = dma.vmem_to_hbm [thread:$0]  %s3586, 512, %s3584, %s3572, 256, 256, 16
        $region112: #{minigpt_forward.1} parent=91 // pred_fallthru
          _
      $region92: #{minigpt_forward.1} parent=5 // pred_fallthru
        _
      %p3592 = scmp.le.s32.totalorder 2, %s30
      // Predicated region
      $region113: #{minigpt_forward.1} parent=5 // pred_check
        %p3593 = pneg %p3592
      $region114: #{minigpt_forward.1} parent=5 // pred_check_branch
        %3595 = sbr.rel (%p3593) target = $region116
      $region115: #{minigpt_forward.1} parent=5 // pred_region
        %s3596 = ssub.s32 %s30, 2
        // Predicated region
        $region117: #{minigpt_forward.1} parent=115 // pred_check
          %p3597 = pneg %p442
        $region118: #{minigpt_forward.1} parent=115 // pred_check_branch
          %3599 = sbr.rel (%p3597) target = $region120
        $region119: #{minigpt_forward.1} parent=115 // pred_region
          %s3600 = sand.u32 %s427, 1
          %s3601 = scalar_lea.sflag [#allocation4], %s3600
          %s3602 = sand.u32 %s427, 1
          %s3603 = smul.addr %s3602, 32
          %s3604 = scalar_lea.vmem [#allocation10], %s3603
          %3605 = dma.done %s3601, 512
        $region120: #{minigpt_forward.1} parent=115 // pred_fallthru
          _
      $region116: #{minigpt_forward.1} parent=5 // pred_fallthru
        _
    $region6: #{minigpt_forward.1} parent=1 // loop_footer
      %s34 = sadd.s32 1, %s30
    $region7: #{minigpt_forward.1} parent=1 // loop_footer_branch
      %29 = sbr.rel target = $region3
    $region8: #{minigpt_forward.1} parent=1 // loop_exit
      _
    %3606 = vsyncpa [#allocation3], 1
    %s3607 = scalar_lea.sflag [#allocation3], 1
    %3608 = vsyncpa %s3607, 1
    %3609 = vsyncpa [#allocation6], 1
    %3610 = vsyncpa [#allocation9], 1
    %3611 = vsyncpa [#allocation4], 1
    %s3612 = scalar_lea.sflag [#allocation4], 1
    %3613 = vsyncpa %s3612, 1

</llo_original>
